<compile_context>
chip_gen: v5e
topology: v5e:2x2
jax: 0.10.0
libtpu: 0.0.40
codegen_flags: <defaults>
</compile_context>

<pallas_src>
import functools

import jax
import jax.numpy as jnp
from jax.experimental import pallas as pl
from jax.experimental.pallas import tpu as pltpu


def _gelu_tanh(x):
    # tanh-approx GELU: the tanh runs on the EUP slot (idle except for the
    # softmax exp) instead of an exact-erf VALU polynomial.
    c = 0.7978845608028654  # sqrt(2/pi)
    return 0.5 * x * (1.0 + jnp.tanh(c * (x + 0.044715 * x * x * x)))


def _relpos_attn_kernel(nhead, bb, N, D, lane_dense,
                        x_ref, c_ref, ct_ref,
                        wqkv_ref, a_ref, b1w_ref, s_ref, b2w_ref,
                        wout_ref, bout_ref,
                        o_ref):
    H = nhead
    hd = D // H

    # Fused QKV projection for all bb batch elements: (bb*N, D) @ (D, 3D).
    # The Q third of wqkv_ref is pre-scaled by the softmax scale in the wrapper.
    if lane_dense:
        x2 = x_ref[0].reshape(bb * N, D)            # (bb, N*D) -> (bb*N, D)
    else:
        x2 = x_ref[...].reshape(bb * N, D)          # (bb, N, D) -> (bb*N, D)
    qkv = jnp.dot(x2, wqkv_ref[...], preferred_element_type=jnp.float32)  # (bb*N, 3D)

    wout = wout_ref[...]                            # (D, D) = Wout^T
    bout = bout_ref[...]                            # (1, D)

    out_rows = []
    for b in range(bb):
        coords_b = c_ref[b]                         # (N, 2)
        coords_tb = ct_ref[b]                       # (2, N)
        # dpos_c[i, j] = coords[i, c] - coords[j, c]
        dpos0 = coords_b[:, 0:1] - coords_tb[0:1, :]            # (N, N)
        dpos1 = coords_b[:, 1:2] - coords_tb[1:2, :]            # (N, N)
        dpos_wide = jnp.concatenate([dpos0, dpos1], axis=1)     # (N, 2N)

        # Bias MLP, Kronecker-lifted so both Linear layers are MXU matmuls and
        # the GELU is a single call on a lane-dense (N, K*N) tile.
        hpre = jnp.dot(dpos_wide, a_ref[...],
                       preferred_element_type=jnp.float32) + b1w_ref[...]   # (N, K*N)
        g = _gelu_tanh(hpre)
        bias_wide = jnp.dot(g, s_ref[...],
                            preferred_element_type=jnp.float32) + b2w_ref[...]  # (N, H*N)

        qkv_b = qkv[b * N:(b + 1) * N, :]                        # (N, 3D)
        out_b = jnp.broadcast_to(bout, (N, D))                   # init with out-proj bias
        for h in range(H):
            bias_h = bias_wide[:, h * N:(h + 1) * N]             # (N, N)

            # TODO(synk): at production D these h*hd lane slices are not
            # 128-aligned; regroup QKV columns head-major / 128-padded there.
            q_h = qkv_b[:, h * hd:(h + 1) * hd]                  # (N, hd)
            k_h = qkv_b[:, D + h * hd:D + (h + 1) * hd]          # (N, hd)
            v_h = qkv_b[:, 2 * D + h * hd:2 * D + (h + 1) * hd]  # (N, hd)

            logits = jax.lax.dot_general(
                q_h, k_h, (((1,), (1,)), ((), ())),
                preferred_element_type=jnp.float32) + bias_h     # (N, N)
            m = jnp.max(logits, axis=-1, keepdims=True)
            e = jnp.exp(logits - m)
            s = jnp.sum(e, axis=-1, keepdims=True)
            # Deferred normalization: PV matmul on unnormalized e, then scale the
            # small (N, hd) result by 1/s on the EUP.
            o_h = jnp.dot(e, v_h, preferred_element_type=jnp.float32)
            o_h = o_h * pl.reciprocal(s, approx=True)
            # Fold each head straight into the output projection (no lane concat).
            out_b = out_b + jnp.dot(o_h, wout[h * hd:(h + 1) * hd, :],
                                    preferred_element_type=jnp.float32)

        if lane_dense:
            out_rows.append(out_b.reshape(1, N * D))
        else:
            o_ref[b] = out_b

    if lane_dense:
        o_ref[0] = jnp.concatenate(out_rows, axis=0)             # (bb, N*D)


def _pick_block_b(B, block_b):
    if block_b is not None:
        assert B % block_b == 0, "block_b must divide B"
        return block_b
    kind = ""
    try:
        kind = jax.devices()[0].device_kind.lower()
    except Exception:
        pass
    # v7x has 2 TensorCores/chip: keep >=2 grid steps so "parallel" shards the
    # batch across them.  Single-TC v5e/v6e prefer one grid step (better MXU
    # M-fill, no extra per-step pipeline overhead).
    if "v7" in kind and B % 2 == 0 and B >= 2:
        return B // 2
    return B


def relpos_self_attention(x, coords, params, nhead, block_b=None):
    """x: (B, N, d_model) f32, coords: (B, N, 2) f32 -> (B, N, d_model) f32."""
    B, N, D = x.shape
    assert D % nhead == 0, "d_model must be divisible by nhead"
    H, hd = nhead, D // nhead
    K = params["w1"].shape[0]                                   # 4 * nhead
    bb = _pick_block_b(B, block_b)
    scale = hd ** (-0.5)

    # ---- one-time wrapper-side weight preprocessing (plain XLA) -------------
    wqkv_t = params["wqkv"].T                                    # (D, 3D)
    wqkv_t = jnp.concatenate([wqkv_t[:, :D] * scale, wqkv_t[:, D:]], axis=1)

    # Kronecker-lifted bias-MLP weights so both Linear layers run on the MXU
    # while the relative-position maps stay in (query-sublane, key-lane) layout.
    eye_n = jnp.eye(N, dtype=jnp.float32)
    ones_n = jnp.ones((1, N), jnp.float32)
    a_mat = jnp.concatenate(
        [jnp.kron(params["w1"][:, 0].reshape(1, K), eye_n),
         jnp.kron(params["w1"][:, 1].reshape(1, K), eye_n)], axis=0)       # (2N, K*N)
    b1_wide = jnp.kron(params["b1"].reshape(1, K), ones_n)                 # (1, K*N)
    s_mat = jnp.kron(params["w2"].T, eye_n)                                # (K*N, H*N)
    b2_wide = jnp.kron(params["b2"].reshape(1, H), ones_n)                 # (1, H*N)

    wout_t = params["wout"].T                                              # (D, D)
    bout = params["bout"].reshape(1, D)                                    # (1, D)
    coords_t = jnp.transpose(coords, (0, 2, 1))                            # (B, 2, N)
    # TODO(synk): at production D store wqkv_t/wout_t (and activations) in bf16
    #             for native MXU rate and half the weight VMEM.

    weights = (wqkv_t, a_mat, b1_wide, s_mat, b2_wide, wout_t, bout)

    def build(lane_dense, single_buffer):
        def const_spec(shape):
            nd = len(shape)
            if single_buffer:
                # Constant (grid-invariant) weight blocks: no double-buffering.
                return pl.BlockSpec(shape, lambda i: (0,) * nd,
                                    pipeline_mode=pl.Buffered(1))
            return pl.BlockSpec(shape, lambda i: (0,) * nd)

        if lane_dense:
            x_spec = pl.BlockSpec((1, bb, N * D), lambda i: (i, 0, 0))
            out_spec = pl.BlockSpec((1, bb, N * D), lambda i: (i, 0, 0))
            out_shape = jax.ShapeDtypeStruct((B // bb, bb, N * D), jnp.float32)
        else:
            x_spec = pl.BlockSpec((bb, N, D), lambda i: (i, 0, 0))
            out_spec = pl.BlockSpec((bb, N, D), lambda i: (i, 0, 0))
            out_shape = jax.ShapeDtypeStruct((B, N, D), jnp.float32)

        kernel = functools.partial(_relpos_attn_kernel, nhead, bb, N, D, lane_dense)
        return pl.pallas_call(
            kernel,
            out_shape=out_shape,
            grid=(B // bb,),
            in_specs=[
                x_spec,
                pl.BlockSpec((bb, N, 2), lambda i: (i, 0, 0)),   # coords
                pl.BlockSpec((bb, 2, N), lambda i: (i, 0, 0)),   # coords^T
                const_spec((D, 3 * D)),                          # Wqkv^T (Q pre-scaled)
                const_spec((2 * N, K * N)),                      # A  (kron'd w1)
                const_spec((1, K * N)),                          # b1 (kron'd)
                const_spec((K * N, H * N)),                      # S  (kron'd w2)
                const_spec((1, H * N)),                          # b2 (kron'd)
                const_spec((D, D)),                              # Wout^T
                const_spec((1, D)),                              # bout
            ],
            out_specs=out_spec,
            compiler_params=pltpu.CompilerParams(
                dimension_semantics=("parallel",)),
        )

    # Optimized path: lane-dense (bb, N*D) I/O + single-buffered weights.
    # If the local toolchain rejects either (e.g. the (N,D)->(1,N*D) relayout or
    # pl.Buffered(1)), fall back to the v2-proven natural layout.
    try:
        x_ld = x.reshape(B // bb, bb, N * D)
        out = build(lane_dense=True, single_buffer=True)(x_ld, coords, coords_t, *weights)
        out = jax.block_until_ready(out)
        return out.reshape(B, N, D)
    except Exception:
        return build(lane_dense=False, single_buffer=False)(x, coords, coords_t, *weights)


def reference(x, coords, params, nhead):
    """Plain-JAX mirror of the PyTorch forward (exact-erf GELU), for checking."""
    B, N, D = x.shape
    scale = (D // nhead) ** (-0.5)
    qkv = x @ params["wqkv"].T
    q, k, v = jnp.split(qkv, 3, axis=-1)
    to_heads = lambda t: jnp.transpose(t.reshape(B, N, nhead, -1), (0, 2, 1, 3))
    q, k, v = to_heads(q), to_heads(k), to_heads(v)
    dpos = coords[:, :, None, :] - coords[:, None, :, :]           # (B,N,N,2)
    h1 = jax.nn.gelu(dpos @ params["w1"].T + params["b1"], approximate=False)
    bias = h1 @ params["w2"].T + params["b2"]                      # (B,N,N,H)
    bias = jnp.transpose(bias, (0, 3, 1, 2))                       # (B,H,N,N)
    dots = jnp.einsum('bhid,bhjd->bhij', q, k) * scale
    attn = jax.nn.softmax(dots + bias, axis=-1)
    out = jnp.einsum('bhij,bhjd->bhid', attn, v)
    out = jnp.transpose(out, (0, 2, 1, 3)).reshape(B, N, D)
    return out @ params["wout"].T + params["bout"]


if __name__ == "__main__":
    B, N, d_model, nhead = 4, 16, 32, 4

    key = jax.random.PRNGKey(0)
    keys = jax.random.split(key, 10)

    def lin_w(k, out_f, in_f):
        bound = 1.0 / (in_f ** 0.5)
        return jax.random.uniform(k, (out_f, in_f), jnp.float32, -bound, bound)

    def lin_b(k, out_f, in_f):
        bound = 1.0 / (in_f ** 0.5)
        return jax.random.uniform(k, (out_f,), jnp.float32, -bound, bound)

    params = {
        "wqkv": lin_w(keys[0], 3 * d_model, d_model),      # qkv (no bias)
        "wout": lin_w(keys[1], d_model, d_model),          # out
        "bout": lin_b(keys[2], d_model, d_model),
        "w1": lin_w(keys[3], nhead * 4, 2),                # bias_mlp[0]
        "b1": lin_b(keys[4], nhead * 4, 2),
        "w2": lin_w(keys[5], nhead, nhead * 4),            # bias_mlp[2]
        "b2": lin_b(keys[6], nhead, nhead * 4),
    }

    x = jax.random.normal(keys[7], (B, N, d_model), jnp.float32)
    coords = jax.random.normal(keys[8], (B, N, 2), jnp.float32)

    out = relpos_self_attention(x, coords, params, nhead)
    out = jax.block_until_ready(out)

    ref = reference(x, coords, params, nhead)
    assert out.shape == (B, N, d_model)
    assert jnp.allclose(out, ref, rtol=1e-2, atol=1e-2), "mismatch vs reference"

    print("KERNEL_OK")
</pallas_src>

<mosaic_0001>
module attributes {stable_mosaic.version = 11 : i64} {
  func.func @_relpos_attn_kernel(%arg0: i32, %arg1: memref<1x4x512xf32, #tpu.memory_space<vmem>>, %arg2: memref<4x16x2xf32, #tpu.memory_space<vmem>>, %arg3: memref<4x2x16xf32, #tpu.memory_space<vmem>>, %arg4: memref<32x96xf32, #tpu.memory_space<vmem>>, %arg5: memref<32x256xf32, #tpu.memory_space<vmem>>, %arg6: memref<1x256xf32, #tpu.memory_space<vmem>>, %arg7: memref<256x64xf32, #tpu.memory_space<vmem>>, %arg8: memref<1x64xf32, #tpu.memory_space<vmem>>, %arg9: memref<32x32xf32, #tpu.memory_space<vmem>>, %arg10: memref<1x32xf32, #tpu.memory_space<vmem>>, %arg11: memref<1x4x512xf32, #tpu.memory_space<vmem>>) attributes {dimension_semantics = [#tpu.dimension_semantics<parallel>], iteration_bounds = array<i64: 1>, scalar_prefetch = 0 : i64, scratch_operands = 0 : i64, tpu.core_type = #tpu.core_type<tc>, window_params = [{transform_indices = @transform_0, window_bounds = array<i64: 1, 4, 512>}, {transform_indices = @transform_1, window_bounds = array<i64: 4, 16, 2>}, {transform_indices = @transform_2, window_bounds = array<i64: 4, 2, 16>}, {pipeline_mode = #tpu.pipeline_mode<synchronous>, transform_indices = @transform_3, window_bounds = array<i64: 32, 96>}, {pipeline_mode = #tpu.pipeline_mode<synchronous>, transform_indices = @transform_4, window_bounds = array<i64: 32, 256>}, {pipeline_mode = #tpu.pipeline_mode<synchronous>, transform_indices = @transform_5, window_bounds = array<i64: 1, 256>}, {pipeline_mode = #tpu.pipeline_mode<synchronous>, transform_indices = @transform_6, window_bounds = array<i64: 256, 64>}, {pipeline_mode = #tpu.pipeline_mode<synchronous>, transform_indices = @transform_7, window_bounds = array<i64: 1, 64>}, {pipeline_mode = #tpu.pipeline_mode<synchronous>, transform_indices = @transform_8, window_bounds = array<i64: 32, 32>}, {pipeline_mode = #tpu.pipeline_mode<synchronous>, transform_indices = @transform_9, window_bounds = array<i64: 1, 32>}, {transform_indices = @transform_10, window_bounds = array<i64: 1, 4, 512>}]} {
    %c0 = arith.constant 0 : index
    %c0_0 = arith.constant 0 : index
    %c0_1 = arith.constant 0 : index
    %0 = vector.load %arg1[%c0, %c0_0, %c0_1] : memref<1x4x512xf32, #tpu.memory_space<vmem>>, vector<1x4x512xf32>
    %1 = vector.shape_cast %0 : vector<1x4x512xf32> to vector<4x512xf32>
    %2 = vector.shape_cast %1 : vector<4x512xf32> to vector<64x32xf32>
    %c0_2 = arith.constant 0 : index
    %c0_3 = arith.constant 0 : index
    %3 = vector.load %arg4[%c0_2, %c0_3] : memref<32x96xf32, #tpu.memory_space<vmem>>, vector<32x96xf32>
    %cst = arith.constant dense<0.000000e+00> : vector<64x96xf32>
    %4 = tpu.matmul %2, %3, %cst {dimension_numbers = #tpu.dot_dimension_numbers<[1], [0], [0], [1], [0, 0, 1, 1], [], []>} : vector<64x32xf32>, vector<32x96xf32>, vector<64x96xf32> -> vector<64x96xf32>
    %c0_4 = arith.constant 0 : index
    %c0_5 = arith.constant 0 : index
    %5 = vector.load %arg9[%c0_4, %c0_5] : memref<32x32xf32, #tpu.memory_space<vmem>>, vector<32x32xf32>
    %c0_6 = arith.constant 0 : index
    %c0_7 = arith.constant 0 : index
    %6 = vector.load %arg10[%c0_6, %c0_7] : memref<1x32xf32, #tpu.memory_space<vmem>>, vector<1x32xf32>
    %c0_8 = arith.constant 0 : index
    %c0_9 = arith.constant 0 : index
    %c0_10 = arith.constant 0 : index
    %7 = vector.load %arg2[%c0_8, %c0_9, %c0_10] : memref<4x16x2xf32, #tpu.memory_space<vmem>>, vector<1x16x2xf32>
    %8 = vector.shape_cast %7 : vector<1x16x2xf32> to vector<16x2xf32>
    %c0_11 = arith.constant 0 : index
    %c0_12 = arith.constant 0 : index
    %c0_13 = arith.constant 0 : index
    %9 = vector.load %arg3[%c0_11, %c0_12, %c0_13] : memref<4x2x16xf32, #tpu.memory_space<vmem>>, vector<1x2x16xf32>
    %10 = vector.shape_cast %9 : vector<1x2x16xf32> to vector<2x16xf32>
    %11 = vector.extract_strided_slice %8 {offsets = [0, 0], sizes = [16, 1], strides = [1, 1]} : vector<16x2xf32> to vector<16x1xf32>
    %12 = vector.extract_strided_slice %10 {offsets = [0, 0], sizes = [1, 16], strides = [1, 1]} : vector<2x16xf32> to vector<1x16xf32>
    %13 = vector.broadcast %11 : vector<16x1xf32> to vector<16x16xf32>
    %14 = vector.broadcast %12 : vector<1x16xf32> to vector<16x16xf32>
    %15 = arith.subf %13, %14 : vector<16x16xf32>
    %16 = vector.extract_strided_slice %8 {offsets = [0, 1], sizes = [16, 1], strides = [1, 1]} : vector<16x2xf32> to vector<16x1xf32>
    %17 = vector.extract_strided_slice %10 {offsets = [1, 0], sizes = [1, 16], strides = [1, 1]} : vector<2x16xf32> to vector<1x16xf32>
    %18 = vector.broadcast %16 : vector<16x1xf32> to vector<16x16xf32>
    %19 = vector.broadcast %17 : vector<1x16xf32> to vector<16x16xf32>
    %20 = arith.subf %18, %19 : vector<16x16xf32>
    %21 = tpu.concatenate %15, %20 in 1 : vector<16x16xf32>, vector<16x16xf32> -> vector<16x32xf32>
    %c0_14 = arith.constant 0 : index
    %c0_15 = arith.constant 0 : index
    %22 = vector.load %arg5[%c0_14, %c0_15] : memref<32x256xf32, #tpu.memory_space<vmem>>, vector<32x256xf32>
    %cst_16 = arith.constant dense<0.000000e+00> : vector<16x256xf32>
    %23 = tpu.matmul %21, %22, %cst_16 {dimension_numbers = #tpu.dot_dimension_numbers<[1], [0], [0], [1], [0, 0, 1, 1], [], []>} : vector<16x32xf32>, vector<32x256xf32>, vector<16x256xf32> -> vector<16x256xf32>
    %c0_17 = arith.constant 0 : index
    %c0_18 = arith.constant 0 : index
    %24 = vector.load %arg6[%c0_17, %c0_18] : memref<1x256xf32, #tpu.memory_space<vmem>>, vector<1x256xf32>
    %25 = vector.broadcast %24 : vector<1x256xf32> to vector<16x256xf32>
    %26 = arith.addf %23, %25 : vector<16x256xf32>
    %cst_19 = arith.constant 5.000000e-01 : f32
    %27 = vector.broadcast %cst_19 : f32 to vector<16x256xf32>
    %28 = arith.mulf %27, %26 : vector<16x256xf32>
    %cst_20 = arith.constant 4.471500e-02 : f32
    %29 = vector.broadcast %cst_20 : f32 to vector<16x256xf32>
    %30 = arith.mulf %29, %26 : vector<16x256xf32>
    %31 = arith.mulf %30, %26 : vector<16x256xf32>
    %32 = arith.mulf %31, %26 : vector<16x256xf32>
    %33 = arith.addf %26, %32 : vector<16x256xf32>
    %cst_21 = arith.constant 0.797884583 : f32
    %34 = vector.broadcast %cst_21 : f32 to vector<16x256xf32>
    %35 = arith.mulf %34, %33 : vector<16x256xf32>
    %36 = math.tanh %35 : vector<16x256xf32>
    %cst_22 = arith.constant 1.000000e+00 : f32
    %37 = vector.broadcast %cst_22 : f32 to vector<16x256xf32>
    %38 = arith.addf %37, %36 : vector<16x256xf32>
    %39 = arith.mulf %28, %38 : vector<16x256xf32>
    %c0_23 = arith.constant 0 : index
    %c0_24 = arith.constant 0 : index
    %40 = vector.load %arg7[%c0_23, %c0_24] : memref<256x64xf32, #tpu.memory_space<vmem>>, vector<256x64xf32>
    %cst_25 = arith.constant dense<0.000000e+00> : vector<16x64xf32>
    %41 = tpu.matmul %39, %40, %cst_25 {dimension_numbers = #tpu.dot_dimension_numbers<[1], [0], [0], [1], [0, 0, 1, 1], [], []>} : vector<16x256xf32>, vector<256x64xf32>, vector<16x64xf32> -> vector<16x64xf32>
    %c0_26 = arith.constant 0 : index
    %c0_27 = arith.constant 0 : index
    %42 = vector.load %arg8[%c0_26, %c0_27] : memref<1x64xf32, #tpu.memory_space<vmem>>, vector<1x64xf32>
    %43 = vector.broadcast %42 : vector<1x64xf32> to vector<16x64xf32>
    %44 = arith.addf %41, %43 : vector<16x64xf32>
    %45 = vector.extract_strided_slice %4 {offsets = [0, 0], sizes = [16, 96], strides = [1, 1]} : vector<64x96xf32> to vector<16x96xf32>
    %46 = vector.shape_cast %6 : vector<1x32xf32> to vector<1x32xf32>
    %47 = vector.broadcast %46 : vector<1x32xf32> to vector<16x32xf32>
    %48 = vector.extract_strided_slice %44 {offsets = [0, 0], sizes = [16, 16], strides = [1, 1]} : vector<16x64xf32> to vector<16x16xf32>
    %49 = vector.extract_strided_slice %45 {offsets = [0, 0], sizes = [16, 8], strides = [1, 1]} : vector<16x96xf32> to vector<16x8xf32>
    %50 = vector.extract_strided_slice %45 {offsets = [0, 32], sizes = [16, 8], strides = [1, 1]} : vector<16x96xf32> to vector<16x8xf32>
    %51 = vector.extract_strided_slice %45 {offsets = [0, 64], sizes = [16, 8], strides = [1, 1]} : vector<16x96xf32> to vector<16x8xf32>
    %cst_28 = arith.constant dense<0.000000e+00> : vector<16x16xf32>
    %52 = tpu.matmul %49, %50, %cst_28 {dimension_numbers = #tpu.dot_dimension_numbers<[1], [1], [0], [0], [0, 0, 1, 0], [], []>} : vector<16x8xf32>, vector<16x8xf32>, vector<16x16xf32> -> vector<16x16xf32>
    %53 = arith.addf %52, %48 : vector<16x16xf32>
    %cst_29 = arith.constant dense<0xFF800000> : vector<16xf32>
    %54 = vector.multi_reduction <maximumf>, %53, %cst_29 [1] : vector<16x16xf32> to vector<16xf32>
    %55 = vector.shape_cast %54 : vector<16xf32> to vector<16x1xf32>
    %56 = vector.broadcast %55 : vector<16x1xf32> to vector<16x16xf32>
    %57 = arith.subf %53, %56 : vector<16x16xf32>
    %58 = math.exp %57 : vector<16x16xf32>
    %cst_30 = arith.constant dense<0.000000e+00> : vector<16xf32>
    %59 = vector.multi_reduction <add>, %58, %cst_30 [1] : vector<16x16xf32> to vector<16xf32>
    %60 = vector.shape_cast %59 : vector<16xf32> to vector<16x1xf32>
    %cst_31 = arith.constant dense<0.000000e+00> : vector<16x8xf32>
    %61 = tpu.matmul %58, %51, %cst_31 {dimension_numbers = #tpu.dot_dimension_numbers<[1], [0], [0], [1], [0, 0, 1, 1], [], []>} : vector<16x16xf32>, vector<16x8xf32>, vector<16x8xf32> -> vector<16x8xf32>
    %62 = tpu.reciprocal %60 {approx = true} : vector<16x1xf32> -> vector<16x1xf32>
    %63 = vector.broadcast %62 : vector<16x1xf32> to vector<16x8xf32>
    %64 = arith.mulf %61, %63 : vector<16x8xf32>
    %65 = vector.extract_strided_slice %5 {offsets = [0, 0], sizes = [8, 32], strides = [1, 1]} : vector<32x32xf32> to vector<8x32xf32>
    %cst_32 = arith.constant dense<0.000000e+00> : vector<16x32xf32>
    %66 = tpu.matmul %64, %65, %cst_32 {dimension_numbers = #tpu.dot_dimension_numbers<[1], [0], [0], [1], [0, 0, 1, 1], [], []>} : vector<16x8xf32>, vector<8x32xf32>, vector<16x32xf32> -> vector<16x32xf32>
    %67 = arith.addf %47, %66 : vector<16x32xf32>
    %68 = vector.extract_strided_slice %44 {offsets = [0, 16], sizes = [16, 16], strides = [1, 1]} : vector<16x64xf32> to vector<16x16xf32>
    %69 = vector.extract_strided_slice %45 {offsets = [0, 8], sizes = [16, 8], strides = [1, 1]} : vector<16x96xf32> to vector<16x8xf32>
    %70 = vector.extract_strided_slice %45 {offsets = [0, 40], sizes = [16, 8], strides = [1, 1]} : vector<16x96xf32> to vector<16x8xf32>
    %71 = vector.extract_strided_slice %45 {offsets = [0, 72], sizes = [16, 8], strides = [1, 1]} : vector<16x96xf32> to vector<16x8xf32>
    %cst_33 = arith.constant dense<0.000000e+00> : vector<16x16xf32>
    %72 = tpu.matmul %69, %70, %cst_33 {dimension_numbers = #tpu.dot_dimension_numbers<[1], [1], [0], [0], [0, 0, 1, 0], [], []>} : vector<16x8xf32>, vector<16x8xf32>, vector<16x16xf32> -> vector<16x16xf32>
    %73 = arith.addf %72, %68 : vector<16x16xf32>
    %cst_34 = arith.constant dense<0xFF800000> : vector<16xf32>
    %74 = vector.multi_reduction <maximumf>, %73, %cst_34 [1] : vector<16x16xf32> to vector<16xf32>
    %75 = vector.shape_cast %74 : vector<16xf32> to vector<16x1xf32>
    %76 = vector.broadcast %75 : vector<16x1xf32> to vector<16x16xf32>
    %77 = arith.subf %73, %76 : vector<16x16xf32>
    %78 = math.exp %77 : vector<16x16xf32>
    %cst_35 = arith.constant dense<0.000000e+00> : vector<16xf32>
    %79 = vector.multi_reduction <add>, %78, %cst_35 [1] : vector<16x16xf32> to vector<16xf32>
    %80 = vector.shape_cast %79 : vector<16xf32> to vector<16x1xf32>
    %cst_36 = arith.constant dense<0.000000e+00> : vector<16x8xf32>
    %81 = tpu.matmul %78, %71, %cst_36 {dimension_numbers = #tpu.dot_dimension_numbers<[1], [0], [0], [1], [0, 0, 1, 1], [], []>} : vector<16x16xf32>, vector<16x8xf32>, vector<16x8xf32> -> vector<16x8xf32>
    %82 = tpu.reciprocal %80 {approx = true} : vector<16x1xf32> -> vector<16x1xf32>
    %83 = vector.broadcast %82 : vector<16x1xf32> to vector<16x8xf32>
    %84 = arith.mulf %81, %83 : vector<16x8xf32>
    %85 = vector.extract_strided_slice %5 {offsets = [8, 0], sizes = [8, 32], strides = [1, 1]} : vector<32x32xf32> to vector<8x32xf32>
    %cst_37 = arith.constant dense<0.000000e+00> : vector<16x32xf32>
    %86 = tpu.matmul %84, %85, %cst_37 {dimension_numbers = #tpu.dot_dimension_numbers<[1], [0], [0], [1], [0, 0, 1, 1], [], []>} : vector<16x8xf32>, vector<8x32xf32>, vector<16x32xf32> -> vector<16x32xf32>
    %87 = arith.addf %67, %86 : vector<16x32xf32>
    %88 = vector.extract_strided_slice %44 {offsets = [0, 32], sizes = [16, 16], strides = [1, 1]} : vector<16x64xf32> to vector<16x16xf32>
    %89 = vector.extract_strided_slice %45 {offsets = [0, 16], sizes = [16, 8], strides = [1, 1]} : vector<16x96xf32> to vector<16x8xf32>
    %90 = vector.extract_strided_slice %45 {offsets = [0, 48], sizes = [16, 8], strides = [1, 1]} : vector<16x96xf32> to vector<16x8xf32>
    %91 = vector.extract_strided_slice %45 {offsets = [0, 80], sizes = [16, 8], strides = [1, 1]} : vector<16x96xf32> to vector<16x8xf32>
    %cst_38 = arith.constant dense<0.000000e+00> : vector<16x16xf32>
    %92 = tpu.matmul %89, %90, %cst_38 {dimension_numbers = #tpu.dot_dimension_numbers<[1], [1], [0], [0], [0, 0, 1, 0], [], []>} : vector<16x8xf32>, vector<16x8xf32>, vector<16x16xf32> -> vector<16x16xf32>
    %93 = arith.addf %92, %88 : vector<16x16xf32>
    %cst_39 = arith.constant dense<0xFF800000> : vector<16xf32>
    %94 = vector.multi_reduction <maximumf>, %93, %cst_39 [1] : vector<16x16xf32> to vector<16xf32>
    %95 = vector.shape_cast %94 : vector<16xf32> to vector<16x1xf32>
    %96 = vector.broadcast %95 : vector<16x1xf32> to vector<16x16xf32>
    %97 = arith.subf %93, %96 : vector<16x16xf32>
    %98 = math.exp %97 : vector<16x16xf32>
    %cst_40 = arith.constant dense<0.000000e+00> : vector<16xf32>
    %99 = vector.multi_reduction <add>, %98, %cst_40 [1] : vector<16x16xf32> to vector<16xf32>
    %100 = vector.shape_cast %99 : vector<16xf32> to vector<16x1xf32>
    %cst_41 = arith.constant dense<0.000000e+00> : vector<16x8xf32>
    %101 = tpu.matmul %98, %91, %cst_41 {dimension_numbers = #tpu.dot_dimension_numbers<[1], [0], [0], [1], [0, 0, 1, 1], [], []>} : vector<16x16xf32>, vector<16x8xf32>, vector<16x8xf32> -> vector<16x8xf32>
    %102 = tpu.reciprocal %100 {approx = true} : vector<16x1xf32> -> vector<16x1xf32>
    %103 = vector.broadcast %102 : vector<16x1xf32> to vector<16x8xf32>
    %104 = arith.mulf %101, %103 : vector<16x8xf32>
    %105 = vector.extract_strided_slice %5 {offsets = [16, 0], sizes = [8, 32], strides = [1, 1]} : vector<32x32xf32> to vector<8x32xf32>
    %cst_42 = arith.constant dense<0.000000e+00> : vector<16x32xf32>
    %106 = tpu.matmul %104, %105, %cst_42 {dimension_numbers = #tpu.dot_dimension_numbers<[1], [0], [0], [1], [0, 0, 1, 1], [], []>} : vector<16x8xf32>, vector<8x32xf32>, vector<16x32xf32> -> vector<16x32xf32>
    %107 = arith.addf %87, %106 : vector<16x32xf32>
    %108 = vector.extract_strided_slice %44 {offsets = [0, 48], sizes = [16, 16], strides = [1, 1]} : vector<16x64xf32> to vector<16x16xf32>
    %109 = vector.extract_strided_slice %45 {offsets = [0, 24], sizes = [16, 8], strides = [1, 1]} : vector<16x96xf32> to vector<16x8xf32>
    %110 = vector.extract_strided_slice %45 {offsets = [0, 56], sizes = [16, 8], strides = [1, 1]} : vector<16x96xf32> to vector<16x8xf32>
    %111 = vector.extract_strided_slice %45 {offsets = [0, 88], sizes = [16, 8], strides = [1, 1]} : vector<16x96xf32> to vector<16x8xf32>
    %cst_43 = arith.constant dense<0.000000e+00> : vector<16x16xf32>
    %112 = tpu.matmul %109, %110, %cst_43 {dimension_numbers = #tpu.dot_dimension_numbers<[1], [1], [0], [0], [0, 0, 1, 0], [], []>} : vector<16x8xf32>, vector<16x8xf32>, vector<16x16xf32> -> vector<16x16xf32>
    %113 = arith.addf %112, %108 : vector<16x16xf32>
    %cst_44 = arith.constant dense<0xFF800000> : vector<16xf32>
    %114 = vector.multi_reduction <maximumf>, %113, %cst_44 [1] : vector<16x16xf32> to vector<16xf32>
    %115 = vector.shape_cast %114 : vector<16xf32> to vector<16x1xf32>
    %116 = vector.broadcast %115 : vector<16x1xf32> to vector<16x16xf32>
    %117 = arith.subf %113, %116 : vector<16x16xf32>
    %118 = math.exp %117 : vector<16x16xf32>
    %cst_45 = arith.constant dense<0.000000e+00> : vector<16xf32>
    %119 = vector.multi_reduction <add>, %118, %cst_45 [1] : vector<16x16xf32> to vector<16xf32>
    %120 = vector.shape_cast %119 : vector<16xf32> to vector<16x1xf32>
    %cst_46 = arith.constant dense<0.000000e+00> : vector<16x8xf32>
    %121 = tpu.matmul %118, %111, %cst_46 {dimension_numbers = #tpu.dot_dimension_numbers<[1], [0], [0], [1], [0, 0, 1, 1], [], []>} : vector<16x16xf32>, vector<16x8xf32>, vector<16x8xf32> -> vector<16x8xf32>
    %122 = tpu.reciprocal %120 {approx = true} : vector<16x1xf32> -> vector<16x1xf32>
    %123 = vector.broadcast %122 : vector<16x1xf32> to vector<16x8xf32>
    %124 = arith.mulf %121, %123 : vector<16x8xf32>
    %125 = vector.extract_strided_slice %5 {offsets = [24, 0], sizes = [8, 32], strides = [1, 1]} : vector<32x32xf32> to vector<8x32xf32>
    %cst_47 = arith.constant dense<0.000000e+00> : vector<16x32xf32>
    %126 = tpu.matmul %124, %125, %cst_47 {dimension_numbers = #tpu.dot_dimension_numbers<[1], [0], [0], [1], [0, 0, 1, 1], [], []>} : vector<16x8xf32>, vector<8x32xf32>, vector<16x32xf32> -> vector<16x32xf32>
    %127 = arith.addf %107, %126 : vector<16x32xf32>
    %128 = vector.shape_cast %127 : vector<16x32xf32> to vector<1x512xf32>
    %c1 = arith.constant 1 : index
    %c0_48 = arith.constant 0 : index
    %c0_49 = arith.constant 0 : index
    %129 = vector.load %arg2[%c1, %c0_48, %c0_49] : memref<4x16x2xf32, #tpu.memory_space<vmem>>, vector<1x16x2xf32>
    %130 = vector.shape_cast %129 : vector<1x16x2xf32> to vector<16x2xf32>
    %c1_50 = arith.constant 1 : index
    %c0_51 = arith.constant 0 : index
    %c0_52 = arith.constant 0 : index
    %131 = vector.load %arg3[%c1_50, %c0_51, %c0_52] : memref<4x2x16xf32, #tpu.memory_space<vmem>>, vector<1x2x16xf32>
    %132 = vector.shape_cast %131 : vector<1x2x16xf32> to vector<2x16xf32>
    %133 = vector.extract_strided_slice %130 {offsets = [0, 0], sizes = [16, 1], strides = [1, 1]} : vector<16x2xf32> to vector<16x1xf32>
    %134 = vector.extract_strided_slice %132 {offsets = [0, 0], sizes = [1, 16], strides = [1, 1]} : vector<2x16xf32> to vector<1x16xf32>
    %135 = vector.broadcast %133 : vector<16x1xf32> to vector<16x16xf32>
    %136 = vector.broadcast %134 : vector<1x16xf32> to vector<16x16xf32>
    %137 = arith.subf %135, %136 : vector<16x16xf32>
    %138 = vector.extract_strided_slice %130 {offsets = [0, 1], sizes = [16, 1], strides = [1, 1]} : vector<16x2xf32> to vector<16x1xf32>
    %139 = vector.extract_strided_slice %132 {offsets = [1, 0], sizes = [1, 16], strides = [1, 1]} : vector<2x16xf32> to vector<1x16xf32>
    %140 = vector.broadcast %138 : vector<16x1xf32> to vector<16x16xf32>
    %141 = vector.broadcast %139 : vector<1x16xf32> to vector<16x16xf32>
    %142 = arith.subf %140, %141 : vector<16x16xf32>
    %143 = tpu.concatenate %137, %142 in 1 : vector<16x16xf32>, vector<16x16xf32> -> vector<16x32xf32>
    %c0_53 = arith.constant 0 : index
    %c0_54 = arith.constant 0 : index
    %144 = vector.load %arg5[%c0_53, %c0_54] : memref<32x256xf32, #tpu.memory_space<vmem>>, vector<32x256xf32>
    %cst_55 = arith.constant dense<0.000000e+00> : vector<16x256xf32>
    %145 = tpu.matmul %143, %144, %cst_55 {dimension_numbers = #tpu.dot_dimension_numbers<[1], [0], [0], [1], [0, 0, 1, 1], [], []>} : vector<16x32xf32>, vector<32x256xf32>, vector<16x256xf32> -> vector<16x256xf32>
    %c0_56 = arith.constant 0 : index
    %c0_57 = arith.constant 0 : index
    %146 = vector.load %arg6[%c0_56, %c0_57] : memref<1x256xf32, #tpu.memory_space<vmem>>, vector<1x256xf32>
    %147 = vector.broadcast %146 : vector<1x256xf32> to vector<16x256xf32>
    %148 = arith.addf %145, %147 : vector<16x256xf32>
    %cst_58 = arith.constant 5.000000e-01 : f32
    %149 = vector.broadcast %cst_58 : f32 to vector<16x256xf32>
    %150 = arith.mulf %149, %148 : vector<16x256xf32>
    %cst_59 = arith.constant 4.471500e-02 : f32
    %151 = vector.broadcast %cst_59 : f32 to vector<16x256xf32>
    %152 = arith.mulf %151, %148 : vector<16x256xf32>
    %153 = arith.mulf %152, %148 : vector<16x256xf32>
    %154 = arith.mulf %153, %148 : vector<16x256xf32>
    %155 = arith.addf %148, %154 : vector<16x256xf32>
    %cst_60 = arith.constant 0.797884583 : f32
    %156 = vector.broadcast %cst_60 : f32 to vector<16x256xf32>
    %157 = arith.mulf %156, %155 : vector<16x256xf32>
    %158 = math.tanh %157 : vector<16x256xf32>
    %cst_61 = arith.constant 1.000000e+00 : f32
    %159 = vector.broadcast %cst_61 : f32 to vector<16x256xf32>
    %160 = arith.addf %159, %158 : vector<16x256xf32>
    %161 = arith.mulf %150, %160 : vector<16x256xf32>
    %c0_62 = arith.constant 0 : index
    %c0_63 = arith.constant 0 : index
    %162 = vector.load %arg7[%c0_62, %c0_63] : memref<256x64xf32, #tpu.memory_space<vmem>>, vector<256x64xf32>
    %cst_64 = arith.constant dense<0.000000e+00> : vector<16x64xf32>
    %163 = tpu.matmul %161, %162, %cst_64 {dimension_numbers = #tpu.dot_dimension_numbers<[1], [0], [0], [1], [0, 0, 1, 1], [], []>} : vector<16x256xf32>, vector<256x64xf32>, vector<16x64xf32> -> vector<16x64xf32>
    %c0_65 = arith.constant 0 : index
    %c0_66 = arith.constant 0 : index
    %164 = vector.load %arg8[%c0_65, %c0_66] : memref<1x64xf32, #tpu.memory_space<vmem>>, vector<1x64xf32>
    %165 = vector.broadcast %164 : vector<1x64xf32> to vector<16x64xf32>
    %166 = arith.addf %163, %165 : vector<16x64xf32>
    %167 = vector.extract_strided_slice %4 {offsets = [16, 0], sizes = [16, 96], strides = [1, 1]} : vector<64x96xf32> to vector<16x96xf32>
    %168 = vector.shape_cast %6 : vector<1x32xf32> to vector<1x32xf32>
    %169 = vector.broadcast %168 : vector<1x32xf32> to vector<16x32xf32>
    %170 = vector.extract_strided_slice %166 {offsets = [0, 0], sizes = [16, 16], strides = [1, 1]} : vector<16x64xf32> to vector<16x16xf32>
    %171 = vector.extract_strided_slice %167 {offsets = [0, 0], sizes = [16, 8], strides = [1, 1]} : vector<16x96xf32> to vector<16x8xf32>
    %172 = vector.extract_strided_slice %167 {offsets = [0, 32], sizes = [16, 8], strides = [1, 1]} : vector<16x96xf32> to vector<16x8xf32>
    %173 = vector.extract_strided_slice %167 {offsets = [0, 64], sizes = [16, 8], strides = [1, 1]} : vector<16x96xf32> to vector<16x8xf32>
    %cst_67 = arith.constant dense<0.000000e+00> : vector<16x16xf32>
    %174 = tpu.matmul %171, %172, %cst_67 {dimension_numbers = #tpu.dot_dimension_numbers<[1], [1], [0], [0], [0, 0, 1, 0], [], []>} : vector<16x8xf32>, vector<16x8xf32>, vector<16x16xf32> -> vector<16x16xf32>
    %175 = arith.addf %174, %170 : vector<16x16xf32>
    %cst_68 = arith.constant dense<0xFF800000> : vector<16xf32>
    %176 = vector.multi_reduction <maximumf>, %175, %cst_68 [1] : vector<16x16xf32> to vector<16xf32>
    %177 = vector.shape_cast %176 : vector<16xf32> to vector<16x1xf32>
    %178 = vector.broadcast %177 : vector<16x1xf32> to vector<16x16xf32>
    %179 = arith.subf %175, %178 : vector<16x16xf32>
    %180 = math.exp %179 : vector<16x16xf32>
    %cst_69 = arith.constant dense<0.000000e+00> : vector<16xf32>
    %181 = vector.multi_reduction <add>, %180, %cst_69 [1] : vector<16x16xf32> to vector<16xf32>
    %182 = vector.shape_cast %181 : vector<16xf32> to vector<16x1xf32>
    %cst_70 = arith.constant dense<0.000000e+00> : vector<16x8xf32>
    %183 = tpu.matmul %180, %173, %cst_70 {dimension_numbers = #tpu.dot_dimension_numbers<[1], [0], [0], [1], [0, 0, 1, 1], [], []>} : vector<16x16xf32>, vector<16x8xf32>, vector<16x8xf32> -> vector<16x8xf32>
    %184 = tpu.reciprocal %182 {approx = true} : vector<16x1xf32> -> vector<16x1xf32>
    %185 = vector.broadcast %184 : vector<16x1xf32> to vector<16x8xf32>
    %186 = arith.mulf %183, %185 : vector<16x8xf32>
    %187 = vector.extract_strided_slice %5 {offsets = [0, 0], sizes = [8, 32], strides = [1, 1]} : vector<32x32xf32> to vector<8x32xf32>
    %cst_71 = arith.constant dense<0.000000e+00> : vector<16x32xf32>
    %188 = tpu.matmul %186, %187, %cst_71 {dimension_numbers = #tpu.dot_dimension_numbers<[1], [0], [0], [1], [0, 0, 1, 1], [], []>} : vector<16x8xf32>, vector<8x32xf32>, vector<16x32xf32> -> vector<16x32xf32>
    %189 = arith.addf %169, %188 : vector<16x32xf32>
    %190 = vector.extract_strided_slice %166 {offsets = [0, 16], sizes = [16, 16], strides = [1, 1]} : vector<16x64xf32> to vector<16x16xf32>
    %191 = vector.extract_strided_slice %167 {offsets = [0, 8], sizes = [16, 8], strides = [1, 1]} : vector<16x96xf32> to vector<16x8xf32>
    %192 = vector.extract_strided_slice %167 {offsets = [0, 40], sizes = [16, 8], strides = [1, 1]} : vector<16x96xf32> to vector<16x8xf32>
    %193 = vector.extract_strided_slice %167 {offsets = [0, 72], sizes = [16, 8], strides = [1, 1]} : vector<16x96xf32> to vector<16x8xf32>
    %cst_72 = arith.constant dense<0.000000e+00> : vector<16x16xf32>
    %194 = tpu.matmul %191, %192, %cst_72 {dimension_numbers = #tpu.dot_dimension_numbers<[1], [1], [0], [0], [0, 0, 1, 0], [], []>} : vector<16x8xf32>, vector<16x8xf32>, vector<16x16xf32> -> vector<16x16xf32>
    %195 = arith.addf %194, %190 : vector<16x16xf32>
    %cst_73 = arith.constant dense<0xFF800000> : vector<16xf32>
    %196 = vector.multi_reduction <maximumf>, %195, %cst_73 [1] : vector<16x16xf32> to vector<16xf32>
    %197 = vector.shape_cast %196 : vector<16xf32> to vector<16x1xf32>
    %198 = vector.broadcast %197 : vector<16x1xf32> to vector<16x16xf32>
    %199 = arith.subf %195, %198 : vector<16x16xf32>
    %200 = math.exp %199 : vector<16x16xf32>
    %cst_74 = arith.constant dense<0.000000e+00> : vector<16xf32>
    %201 = vector.multi_reduction <add>, %200, %cst_74 [1] : vector<16x16xf32> to vector<16xf32>
    %202 = vector.shape_cast %201 : vector<16xf32> to vector<16x1xf32>
    %cst_75 = arith.constant dense<0.000000e+00> : vector<16x8xf32>
    %203 = tpu.matmul %200, %193, %cst_75 {dimension_numbers = #tpu.dot_dimension_numbers<[1], [0], [0], [1], [0, 0, 1, 1], [], []>} : vector<16x16xf32>, vector<16x8xf32>, vector<16x8xf32> -> vector<16x8xf32>
    %204 = tpu.reciprocal %202 {approx = true} : vector<16x1xf32> -> vector<16x1xf32>
    %205 = vector.broadcast %204 : vector<16x1xf32> to vector<16x8xf32>
    %206 = arith.mulf %203, %205 : vector<16x8xf32>
    %207 = vector.extract_strided_slice %5 {offsets = [8, 0], sizes = [8, 32], strides = [1, 1]} : vector<32x32xf32> to vector<8x32xf32>
    %cst_76 = arith.constant dense<0.000000e+00> : vector<16x32xf32>
    %208 = tpu.matmul %206, %207, %cst_76 {dimension_numbers = #tpu.dot_dimension_numbers<[1], [0], [0], [1], [0, 0, 1, 1], [], []>} : vector<16x8xf32>, vector<8x32xf32>, vector<16x32xf32> -> vector<16x32xf32>
    %209 = arith.addf %189, %208 : vector<16x32xf32>
    %210 = vector.extract_strided_slice %166 {offsets = [0, 32], sizes = [16, 16], strides = [1, 1]} : vector<16x64xf32> to vector<16x16xf32>
    %211 = vector.extract_strided_slice %167 {offsets = [0, 16], sizes = [16, 8], strides = [1, 1]} : vector<16x96xf32> to vector<16x8xf32>
    %212 = vector.extract_strided_slice %167 {offsets = [0, 48], sizes = [16, 8], strides = [1, 1]} : vector<16x96xf32> to vector<16x8xf32>
    %213 = vector.extract_strided_slice %167 {offsets = [0, 80], sizes = [16, 8], strides = [1, 1]} : vector<16x96xf32> to vector<16x8xf32>
    %cst_77 = arith.constant dense<0.000000e+00> : vector<16x16xf32>
    %214 = tpu.matmul %211, %212, %cst_77 {dimension_numbers = #tpu.dot_dimension_numbers<[1], [1], [0], [0], [0, 0, 1, 0], [], []>} : vector<16x8xf32>, vector<16x8xf32>, vector<16x16xf32> -> vector<16x16xf32>
    %215 = arith.addf %214, %210 : vector<16x16xf32>
    %cst_78 = arith.constant dense<0xFF800000> : vector<16xf32>
    %216 = vector.multi_reduction <maximumf>, %215, %cst_78 [1] : vector<16x16xf32> to vector<16xf32>
    %217 = vector.shape_cast %216 : vector<16xf32> to vector<16x1xf32>
    %218 = vector.broadcast %217 : vector<16x1xf32> to vector<16x16xf32>
    %219 = arith.subf %215, %218 : vector<16x16xf32>
    %220 = math.exp %219 : vector<16x16xf32>
    %cst_79 = arith.constant dense<0.000000e+00> : vector<16xf32>
    %221 = vector.multi_reduction <add>, %220, %cst_79 [1] : vector<16x16xf32> to vector<16xf32>
    %222 = vector.shape_cast %221 : vector<16xf32> to vector<16x1xf32>
    %cst_80 = arith.constant dense<0.000000e+00> : vector<16x8xf32>
    %223 = tpu.matmul %220, %213, %cst_80 {dimension_numbers = #tpu.dot_dimension_numbers<[1], [0], [0], [1], [0, 0, 1, 1], [], []>} : vector<16x16xf32>, vector<16x8xf32>, vector<16x8xf32> -> vector<16x8xf32>
    %224 = tpu.reciprocal %222 {approx = true} : vector<16x1xf32> -> vector<16x1xf32>
    %225 = vector.broadcast %224 : vector<16x1xf32> to vector<16x8xf32>
    %226 = arith.mulf %223, %225 : vector<16x8xf32>
    %227 = vector.extract_strided_slice %5 {offsets = [16, 0], sizes = [8, 32], strides = [1, 1]} : vector<32x32xf32> to vector<8x32xf32>
    %cst_81 = arith.constant dense<0.000000e+00> : vector<16x32xf32>
    %228 = tpu.matmul %226, %227, %cst_81 {dimension_numbers = #tpu.dot_dimension_numbers<[1], [0], [0], [1], [0, 0, 1, 1], [], []>} : vector<16x8xf32>, vector<8x32xf32>, vector<16x32xf32> -> vector<16x32xf32>
    %229 = arith.addf %209, %228 : vector<16x32xf32>
    %230 = vector.extract_strided_slice %166 {offsets = [0, 48], sizes = [16, 16], strides = [1, 1]} : vector<16x64xf32> to vector<16x16xf32>
    %231 = vector.extract_strided_slice %167 {offsets = [0, 24], sizes = [16, 8], strides = [1, 1]} : vector<16x96xf32> to vector<16x8xf32>
    %232 = vector.extract_strided_slice %167 {offsets = [0, 56], sizes = [16, 8], strides = [1, 1]} : vector<16x96xf32> to vector<16x8xf32>
    %233 = vector.extract_strided_slice %167 {offsets = [0, 88], sizes = [16, 8], strides = [1, 1]} : vector<16x96xf32> to vector<16x8xf32>
    %cst_82 = arith.constant dense<0.000000e+00> : vector<16x16xf32>
    %234 = tpu.matmul %231, %232, %cst_82 {dimension_numbers = #tpu.dot_dimension_numbers<[1], [1], [0], [0], [0, 0, 1, 0], [], []>} : vector<16x8xf32>, vector<16x8xf32>, vector<16x16xf32> -> vector<16x16xf32>
    %235 = arith.addf %234, %230 : vector<16x16xf32>
    %cst_83 = arith.constant dense<0xFF800000> : vector<16xf32>
    %236 = vector.multi_reduction <maximumf>, %235, %cst_83 [1] : vector<16x16xf32> to vector<16xf32>
    %237 = vector.shape_cast %236 : vector<16xf32> to vector<16x1xf32>
    %238 = vector.broadcast %237 : vector<16x1xf32> to vector<16x16xf32>
    %239 = arith.subf %235, %238 : vector<16x16xf32>
    %240 = math.exp %239 : vector<16x16xf32>
    %cst_84 = arith.constant dense<0.000000e+00> : vector<16xf32>
    %241 = vector.multi_reduction <add>, %240, %cst_84 [1] : vector<16x16xf32> to vector<16xf32>
    %242 = vector.shape_cast %241 : vector<16xf32> to vector<16x1xf32>
    %cst_85 = arith.constant dense<0.000000e+00> : vector<16x8xf32>
    %243 = tpu.matmul %240, %233, %cst_85 {dimension_numbers = #tpu.dot_dimension_numbers<[1], [0], [0], [1], [0, 0, 1, 1], [], []>} : vector<16x16xf32>, vector<16x8xf32>, vector<16x8xf32> -> vector<16x8xf32>
    %244 = tpu.reciprocal %242 {approx = true} : vector<16x1xf32> -> vector<16x1xf32>
    %245 = vector.broadcast %244 : vector<16x1xf32> to vector<16x8xf32>
    %246 = arith.mulf %243, %245 : vector<16x8xf32>
    %247 = vector.extract_strided_slice %5 {offsets = [24, 0], sizes = [8, 32], strides = [1, 1]} : vector<32x32xf32> to vector<8x32xf32>
    %cst_86 = arith.constant dense<0.000000e+00> : vector<16x32xf32>
    %248 = tpu.matmul %246, %247, %cst_86 {dimension_numbers = #tpu.dot_dimension_numbers<[1], [0], [0], [1], [0, 0, 1, 1], [], []>} : vector<16x8xf32>, vector<8x32xf32>, vector<16x32xf32> -> vector<16x32xf32>
    %249 = arith.addf %229, %248 : vector<16x32xf32>
    %250 = vector.shape_cast %249 : vector<16x32xf32> to vector<1x512xf32>
    %c2 = arith.constant 2 : index
    %c0_87 = arith.constant 0 : index
    %c0_88 = arith.constant 0 : index
    %251 = vector.load %arg2[%c2, %c0_87, %c0_88] : memref<4x16x2xf32, #tpu.memory_space<vmem>>, vector<1x16x2xf32>
    %252 = vector.shape_cast %251 : vector<1x16x2xf32> to vector<16x2xf32>
    %c2_89 = arith.constant 2 : index
    %c0_90 = arith.constant 0 : index
    %c0_91 = arith.constant 0 : index
    %253 = vector.load %arg3[%c2_89, %c0_90, %c0_91] : memref<4x2x16xf32, #tpu.memory_space<vmem>>, vector<1x2x16xf32>
    %254 = vector.shape_cast %253 : vector<1x2x16xf32> to vector<2x16xf32>
    %255 = vector.extract_strided_slice %252 {offsets = [0, 0], sizes = [16, 1], strides = [1, 1]} : vector<16x2xf32> to vector<16x1xf32>
    %256 = vector.extract_strided_slice %254 {offsets = [0, 0], sizes = [1, 16], strides = [1, 1]} : vector<2x16xf32> to vector<1x16xf32>
    %257 = vector.broadcast %255 : vector<16x1xf32> to vector<16x16xf32>
    %258 = vector.broadcast %256 : vector<1x16xf32> to vector<16x16xf32>
    %259 = arith.subf %257, %258 : vector<16x16xf32>
    %260 = vector.extract_strided_slice %252 {offsets = [0, 1], sizes = [16, 1], strides = [1, 1]} : vector<16x2xf32> to vector<16x1xf32>
    %261 = vector.extract_strided_slice %254 {offsets = [1, 0], sizes = [1, 16], strides = [1, 1]} : vector<2x16xf32> to vector<1x16xf32>
    %262 = vector.broadcast %260 : vector<16x1xf32> to vector<16x16xf32>
    %263 = vector.broadcast %261 : vector<1x16xf32> to vector<16x16xf32>
    %264 = arith.subf %262, %263 : vector<16x16xf32>
    %265 = tpu.concatenate %259, %264 in 1 : vector<16x16xf32>, vector<16x16xf32> -> vector<16x32xf32>
    %c0_92 = arith.constant 0 : index
    %c0_93 = arith.constant 0 : index
    %266 = vector.load %arg5[%c0_92, %c0_93] : memref<32x256xf32, #tpu.memory_space<vmem>>, vector<32x256xf32>
    %cst_94 = arith.constant dense<0.000000e+00> : vector<16x256xf32>
    %267 = tpu.matmul %265, %266, %cst_94 {dimension_numbers = #tpu.dot_dimension_numbers<[1], [0], [0], [1], [0, 0, 1, 1], [], []>} : vector<16x32xf32>, vector<32x256xf32>, vector<16x256xf32> -> vector<16x256xf32>
    %c0_95 = arith.constant 0 : index
    %c0_96 = arith.constant 0 : index
    %268 = vector.load %arg6[%c0_95, %c0_96] : memref<1x256xf32, #tpu.memory_space<vmem>>, vector<1x256xf32>
    %269 = vector.broadcast %268 : vector<1x256xf32> to vector<16x256xf32>
    %270 = arith.addf %267, %269 : vector<16x256xf32>
    %cst_97 = arith.constant 5.000000e-01 : f32
    %271 = vector.broadcast %cst_97 : f32 to vector<16x256xf32>
    %272 = arith.mulf %271, %270 : vector<16x256xf32>
    %cst_98 = arith.constant 4.471500e-02 : f32
    %273 = vector.broadcast %cst_98 : f32 to vector<16x256xf32>
    %274 = arith.mulf %273, %270 : vector<16x256xf32>
    %275 = arith.mulf %274, %270 : vector<16x256xf32>
    %276 = arith.mulf %275, %270 : vector<16x256xf32>
    %277 = arith.addf %270, %276 : vector<16x256xf32>
    %cst_99 = arith.constant 0.797884583 : f32
    %278 = vector.broadcast %cst_99 : f32 to vector<16x256xf32>
    %279 = arith.mulf %278, %277 : vector<16x256xf32>
    %280 = math.tanh %279 : vector<16x256xf32>
    %cst_100 = arith.constant 1.000000e+00 : f32
    %281 = vector.broadcast %cst_100 : f32 to vector<16x256xf32>
    %282 = arith.addf %281, %280 : vector<16x256xf32>
    %283 = arith.mulf %272, %282 : vector<16x256xf32>
    %c0_101 = arith.constant 0 : index
    %c0_102 = arith.constant 0 : index
    %284 = vector.load %arg7[%c0_101, %c0_102] : memref<256x64xf32, #tpu.memory_space<vmem>>, vector<256x64xf32>
    %cst_103 = arith.constant dense<0.000000e+00> : vector<16x64xf32>
    %285 = tpu.matmul %283, %284, %cst_103 {dimension_numbers = #tpu.dot_dimension_numbers<[1], [0], [0], [1], [0, 0, 1, 1], [], []>} : vector<16x256xf32>, vector<256x64xf32>, vector<16x64xf32> -> vector<16x64xf32>
    %c0_104 = arith.constant 0 : index
    %c0_105 = arith.constant 0 : index
    %286 = vector.load %arg8[%c0_104, %c0_105] : memref<1x64xf32, #tpu.memory_space<vmem>>, vector<1x64xf32>
    %287 = vector.broadcast %286 : vector<1x64xf32> to vector<16x64xf32>
    %288 = arith.addf %285, %287 : vector<16x64xf32>
    %289 = vector.extract_strided_slice %4 {offsets = [32, 0], sizes = [16, 96], strides = [1, 1]} : vector<64x96xf32> to vector<16x96xf32>
    %290 = vector.shape_cast %6 : vector<1x32xf32> to vector<1x32xf32>
    %291 = vector.broadcast %290 : vector<1x32xf32> to vector<16x32xf32>
    %292 = vector.extract_strided_slice %288 {offsets = [0, 0], sizes = [16, 16], strides = [1, 1]} : vector<16x64xf32> to vector<16x16xf32>
    %293 = vector.extract_strided_slice %289 {offsets = [0, 0], sizes = [16, 8], strides = [1, 1]} : vector<16x96xf32> to vector<16x8xf32>
    %294 = vector.extract_strided_slice %289 {offsets = [0, 32], sizes = [16, 8], strides = [1, 1]} : vector<16x96xf32> to vector<16x8xf32>
    %295 = vector.extract_strided_slice %289 {offsets = [0, 64], sizes = [16, 8], strides = [1, 1]} : vector<16x96xf32> to vector<16x8xf32>
    %cst_106 = arith.constant dense<0.000000e+00> : vector<16x16xf32>
    %296 = tpu.matmul %293, %294, %cst_106 {dimension_numbers = #tpu.dot_dimension_numbers<[1], [1], [0], [0], [0, 0, 1, 0], [], []>} : vector<16x8xf32>, vector<16x8xf32>, vector<16x16xf32> -> vector<16x16xf32>
    %297 = arith.addf %296, %292 : vector<16x16xf32>
    %cst_107 = arith.constant dense<0xFF800000> : vector<16xf32>
    %298 = vector.multi_reduction <maximumf>, %297, %cst_107 [1] : vector<16x16xf32> to vector<16xf32>
    %299 = vector.shape_cast %298 : vector<16xf32> to vector<16x1xf32>
    %300 = vector.broadcast %299 : vector<16x1xf32> to vector<16x16xf32>
    %301 = arith.subf %297, %300 : vector<16x16xf32>
    %302 = math.exp %301 : vector<16x16xf32>
    %cst_108 = arith.constant dense<0.000000e+00> : vector<16xf32>
    %303 = vector.multi_reduction <add>, %302, %cst_108 [1] : vector<16x16xf32> to vector<16xf32>
    %304 = vector.shape_cast %303 : vector<16xf32> to vector<16x1xf32>
    %cst_109 = arith.constant dense<0.000000e+00> : vector<16x8xf32>
    %305 = tpu.matmul %302, %295, %cst_109 {dimension_numbers = #tpu.dot_dimension_numbers<[1], [0], [0], [1], [0, 0, 1, 1], [], []>} : vector<16x16xf32>, vector<16x8xf32>, vector<16x8xf32> -> vector<16x8xf32>
    %306 = tpu.reciprocal %304 {approx = true} : vector<16x1xf32> -> vector<16x1xf32>
    %307 = vector.broadcast %306 : vector<16x1xf32> to vector<16x8xf32>
    %308 = arith.mulf %305, %307 : vector<16x8xf32>
    %309 = vector.extract_strided_slice %5 {offsets = [0, 0], sizes = [8, 32], strides = [1, 1]} : vector<32x32xf32> to vector<8x32xf32>
    %cst_110 = arith.constant dense<0.000000e+00> : vector<16x32xf32>
    %310 = tpu.matmul %308, %309, %cst_110 {dimension_numbers = #tpu.dot_dimension_numbers<[1], [0], [0], [1], [0, 0, 1, 1], [], []>} : vector<16x8xf32>, vector<8x32xf32>, vector<16x32xf32> -> vector<16x32xf32>
    %311 = arith.addf %291, %310 : vector<16x32xf32>
    %312 = vector.extract_strided_slice %288 {offsets = [0, 16], sizes = [16, 16], strides = [1, 1]} : vector<16x64xf32> to vector<16x16xf32>
    %313 = vector.extract_strided_slice %289 {offsets = [0, 8], sizes = [16, 8], strides = [1, 1]} : vector<16x96xf32> to vector<16x8xf32>
    %314 = vector.extract_strided_slice %289 {offsets = [0, 40], sizes = [16, 8], strides = [1, 1]} : vector<16x96xf32> to vector<16x8xf32>
    %315 = vector.extract_strided_slice %289 {offsets = [0, 72], sizes = [16, 8], strides = [1, 1]} : vector<16x96xf32> to vector<16x8xf32>
    %cst_111 = arith.constant dense<0.000000e+00> : vector<16x16xf32>
    %316 = tpu.matmul %313, %314, %cst_111 {dimension_numbers = #tpu.dot_dimension_numbers<[1], [1], [0], [0], [0, 0, 1, 0], [], []>} : vector<16x8xf32>, vector<16x8xf32>, vector<16x16xf32> -> vector<16x16xf32>
    %317 = arith.addf %316, %312 : vector<16x16xf32>
    %cst_112 = arith.constant dense<0xFF800000> : vector<16xf32>
    %318 = vector.multi_reduction <maximumf>, %317, %cst_112 [1] : vector<16x16xf32> to vector<16xf32>
    %319 = vector.shape_cast %318 : vector<16xf32> to vector<16x1xf32>
    %320 = vector.broadcast %319 : vector<16x1xf32> to vector<16x16xf32>
    %321 = arith.subf %317, %320 : vector<16x16xf32>
    %322 = math.exp %321 : vector<16x16xf32>
    %cst_113 = arith.constant dense<0.000000e+00> : vector<16xf32>
    %323 = vector.multi_reduction <add>, %322, %cst_113 [1] : vector<16x16xf32> to vector<16xf32>
    %324 = vector.shape_cast %323 : vector<16xf32> to vector<16x1xf32>
    %cst_114 = arith.constant dense<0.000000e+00> : vector<16x8xf32>
    %325 = tpu.matmul %322, %315, %cst_114 {dimension_numbers = #tpu.dot_dimension_numbers<[1], [0], [0], [1], [0, 0, 1, 1], [], []>} : vector<16x16xf32>, vector<16x8xf32>, vector<16x8xf32> -> vector<16x8xf32>
    %326 = tpu.reciprocal %324 {approx = true} : vector<16x1xf32> -> vector<16x1xf32>
    %327 = vector.broadcast %326 : vector<16x1xf32> to vector<16x8xf32>
    %328 = arith.mulf %325, %327 : vector<16x8xf32>
    %329 = vector.extract_strided_slice %5 {offsets = [8, 0], sizes = [8, 32], strides = [1, 1]} : vector<32x32xf32> to vector<8x32xf32>
    %cst_115 = arith.constant dense<0.000000e+00> : vector<16x32xf32>
    %330 = tpu.matmul %328, %329, %cst_115 {dimension_numbers = #tpu.dot_dimension_numbers<[1], [0], [0], [1], [0, 0, 1, 1], [], []>} : vector<16x8xf32>, vector<8x32xf32>, vector<16x32xf32> -> vector<16x32xf32>
    %331 = arith.addf %311, %330 : vector<16x32xf32>
    %332 = vector.extract_strided_slice %288 {offsets = [0, 32], sizes = [16, 16], strides = [1, 1]} : vector<16x64xf32> to vector<16x16xf32>
    %333 = vector.extract_strided_slice %289 {offsets = [0, 16], sizes = [16, 8], strides = [1, 1]} : vector<16x96xf32> to vector<16x8xf32>
    %334 = vector.extract_strided_slice %289 {offsets = [0, 48], sizes = [16, 8], strides = [1, 1]} : vector<16x96xf32> to vector<16x8xf32>
    %335 = vector.extract_strided_slice %289 {offsets = [0, 80], sizes = [16, 8], strides = [1, 1]} : vector<16x96xf32> to vector<16x8xf32>
    %cst_116 = arith.constant dense<0.000000e+00> : vector<16x16xf32>
    %336 = tpu.matmul %333, %334, %cst_116 {dimension_numbers = #tpu.dot_dimension_numbers<[1], [1], [0], [0], [0, 0, 1, 0], [], []>} : vector<16x8xf32>, vector<16x8xf32>, vector<16x16xf32> -> vector<16x16xf32>
    %337 = arith.addf %336, %332 : vector<16x16xf32>
    %cst_117 = arith.constant dense<0xFF800000> : vector<16xf32>
    %338 = vector.multi_reduction <maximumf>, %337, %cst_117 [1] : vector<16x16xf32> to vector<16xf32>
    %339 = vector.shape_cast %338 : vector<16xf32> to vector<16x1xf32>
    %340 = vector.broadcast %339 : vector<16x1xf32> to vector<16x16xf32>
    %341 = arith.subf %337, %340 : vector<16x16xf32>
    %342 = math.exp %341 : vector<16x16xf32>
    %cst_118 = arith.constant dense<0.000000e+00> : vector<16xf32>
    %343 = vector.multi_reduction <add>, %342, %cst_118 [1] : vector<16x16xf32> to vector<16xf32>
    %344 = vector.shape_cast %343 : vector<16xf32> to vector<16x1xf32>
    %cst_119 = arith.constant dense<0.000000e+00> : vector<16x8xf32>
    %345 = tpu.matmul %342, %335, %cst_119 {dimension_numbers = #tpu.dot_dimension_numbers<[1], [0], [0], [1], [0, 0, 1, 1], [], []>} : vector<16x16xf32>, vector<16x8xf32>, vector<16x8xf32> -> vector<16x8xf32>
    %346 = tpu.reciprocal %344 {approx = true} : vector<16x1xf32> -> vector<16x1xf32>
    %347 = vector.broadcast %346 : vector<16x1xf32> to vector<16x8xf32>
    %348 = arith.mulf %345, %347 : vector<16x8xf32>
    %349 = vector.extract_strided_slice %5 {offsets = [16, 0], sizes = [8, 32], strides = [1, 1]} : vector<32x32xf32> to vector<8x32xf32>
    %cst_120 = arith.constant dense<0.000000e+00> : vector<16x32xf32>
    %350 = tpu.matmul %348, %349, %cst_120 {dimension_numbers = #tpu.dot_dimension_numbers<[1], [0], [0], [1], [0, 0, 1, 1], [], []>} : vector<16x8xf32>, vector<8x32xf32>, vector<16x32xf32> -> vector<16x32xf32>
    %351 = arith.addf %331, %350 : vector<16x32xf32>
    %352 = vector.extract_strided_slice %288 {offsets = [0, 48], sizes = [16, 16], strides = [1, 1]} : vector<16x64xf32> to vector<16x16xf32>
    %353 = vector.extract_strided_slice %289 {offsets = [0, 24], sizes = [16, 8], strides = [1, 1]} : vector<16x96xf32> to vector<16x8xf32>
    %354 = vector.extract_strided_slice %289 {offsets = [0, 56], sizes = [16, 8], strides = [1, 1]} : vector<16x96xf32> to vector<16x8xf32>
    %355 = vector.extract_strided_slice %289 {offsets = [0, 88], sizes = [16, 8], strides = [1, 1]} : vector<16x96xf32> to vector<16x8xf32>
    %cst_121 = arith.constant dense<0.000000e+00> : vector<16x16xf32>
    %356 = tpu.matmul %353, %354, %cst_121 {dimension_numbers = #tpu.dot_dimension_numbers<[1], [1], [0], [0], [0, 0, 1, 0], [], []>} : vector<16x8xf32>, vector<16x8xf32>, vector<16x16xf32> -> vector<16x16xf32>
    %357 = arith.addf %356, %352 : vector<16x16xf32>
    %cst_122 = arith.constant dense<0xFF800000> : vector<16xf32>
    %358 = vector.multi_reduction <maximumf>, %357, %cst_122 [1] : vector<16x16xf32> to vector<16xf32>
    %359 = vector.shape_cast %358 : vector<16xf32> to vector<16x1xf32>
    %360 = vector.broadcast %359 : vector<16x1xf32> to vector<16x16xf32>
    %361 = arith.subf %357, %360 : vector<16x16xf32>
    %362 = math.exp %361 : vector<16x16xf32>
    %cst_123 = arith.constant dense<0.000000e+00> : vector<16xf32>
    %363 = vector.multi_reduction <add>, %362, %cst_123 [1] : vector<16x16xf32> to vector<16xf32>
    %364 = vector.shape_cast %363 : vector<16xf32> to vector<16x1xf32>
    %cst_124 = arith.constant dense<0.000000e+00> : vector<16x8xf32>
    %365 = tpu.matmul %362, %355, %cst_124 {dimension_numbers = #tpu.dot_dimension_numbers<[1], [0], [0], [1], [0, 0, 1, 1], [], []>} : vector<16x16xf32>, vector<16x8xf32>, vector<16x8xf32> -> vector<16x8xf32>
    %366 = tpu.reciprocal %364 {approx = true} : vector<16x1xf32> -> vector<16x1xf32>
    %367 = vector.broadcast %366 : vector<16x1xf32> to vector<16x8xf32>
    %368 = arith.mulf %365, %367 : vector<16x8xf32>
    %369 = vector.extract_strided_slice %5 {offsets = [24, 0], sizes = [8, 32], strides = [1, 1]} : vector<32x32xf32> to vector<8x32xf32>
    %cst_125 = arith.constant dense<0.000000e+00> : vector<16x32xf32>
    %370 = tpu.matmul %368, %369, %cst_125 {dimension_numbers = #tpu.dot_dimension_numbers<[1], [0], [0], [1], [0, 0, 1, 1], [], []>} : vector<16x8xf32>, vector<8x32xf32>, vector<16x32xf32> -> vector<16x32xf32>
    %371 = arith.addf %351, %370 : vector<16x32xf32>
    %372 = vector.shape_cast %371 : vector<16x32xf32> to vector<1x512xf32>
    %c3 = arith.constant 3 : index
    %c0_126 = arith.constant 0 : index
    %c0_127 = arith.constant 0 : index
    %373 = vector.load %arg2[%c3, %c0_126, %c0_127] : memref<4x16x2xf32, #tpu.memory_space<vmem>>, vector<1x16x2xf32>
    %374 = vector.shape_cast %373 : vector<1x16x2xf32> to vector<16x2xf32>
    %c3_128 = arith.constant 3 : index
    %c0_129 = arith.constant 0 : index
    %c0_130 = arith.constant 0 : index
    %375 = vector.load %arg3[%c3_128, %c0_129, %c0_130] : memref<4x2x16xf32, #tpu.memory_space<vmem>>, vector<1x2x16xf32>
    %376 = vector.shape_cast %375 : vector<1x2x16xf32> to vector<2x16xf32>
    %377 = vector.extract_strided_slice %374 {offsets = [0, 0], sizes = [16, 1], strides = [1, 1]} : vector<16x2xf32> to vector<16x1xf32>
    %378 = vector.extract_strided_slice %376 {offsets = [0, 0], sizes = [1, 16], strides = [1, 1]} : vector<2x16xf32> to vector<1x16xf32>
    %379 = vector.broadcast %377 : vector<16x1xf32> to vector<16x16xf32>
    %380 = vector.broadcast %378 : vector<1x16xf32> to vector<16x16xf32>
    %381 = arith.subf %379, %380 : vector<16x16xf32>
    %382 = vector.extract_strided_slice %374 {offsets = [0, 1], sizes = [16, 1], strides = [1, 1]} : vector<16x2xf32> to vector<16x1xf32>
    %383 = vector.extract_strided_slice %376 {offsets = [1, 0], sizes = [1, 16], strides = [1, 1]} : vector<2x16xf32> to vector<1x16xf32>
    %384 = vector.broadcast %382 : vector<16x1xf32> to vector<16x16xf32>
    %385 = vector.broadcast %383 : vector<1x16xf32> to vector<16x16xf32>
    %386 = arith.subf %384, %385 : vector<16x16xf32>
    %387 = tpu.concatenate %381, %386 in 1 : vector<16x16xf32>, vector<16x16xf32> -> vector<16x32xf32>
    %c0_131 = arith.constant 0 : index
    %c0_132 = arith.constant 0 : index
    %388 = vector.load %arg5[%c0_131, %c0_132] : memref<32x256xf32, #tpu.memory_space<vmem>>, vector<32x256xf32>
    %cst_133 = arith.constant dense<0.000000e+00> : vector<16x256xf32>
    %389 = tpu.matmul %387, %388, %cst_133 {dimension_numbers = #tpu.dot_dimension_numbers<[1], [0], [0], [1], [0, 0, 1, 1], [], []>} : vector<16x32xf32>, vector<32x256xf32>, vector<16x256xf32> -> vector<16x256xf32>
    %c0_134 = arith.constant 0 : index
    %c0_135 = arith.constant 0 : index
    %390 = vector.load %arg6[%c0_134, %c0_135] : memref<1x256xf32, #tpu.memory_space<vmem>>, vector<1x256xf32>
    %391 = vector.broadcast %390 : vector<1x256xf32> to vector<16x256xf32>
    %392 = arith.addf %389, %391 : vector<16x256xf32>
    %cst_136 = arith.constant 5.000000e-01 : f32
    %393 = vector.broadcast %cst_136 : f32 to vector<16x256xf32>
    %394 = arith.mulf %393, %392 : vector<16x256xf32>
    %cst_137 = arith.constant 4.471500e-02 : f32
    %395 = vector.broadcast %cst_137 : f32 to vector<16x256xf32>
    %396 = arith.mulf %395, %392 : vector<16x256xf32>
    %397 = arith.mulf %396, %392 : vector<16x256xf32>
    %398 = arith.mulf %397, %392 : vector<16x256xf32>
    %399 = arith.addf %392, %398 : vector<16x256xf32>
    %cst_138 = arith.constant 0.797884583 : f32
    %400 = vector.broadcast %cst_138 : f32 to vector<16x256xf32>
    %401 = arith.mulf %400, %399 : vector<16x256xf32>
    %402 = math.tanh %401 : vector<16x256xf32>
    %cst_139 = arith.constant 1.000000e+00 : f32
    %403 = vector.broadcast %cst_139 : f32 to vector<16x256xf32>
    %404 = arith.addf %403, %402 : vector<16x256xf32>
    %405 = arith.mulf %394, %404 : vector<16x256xf32>
    %c0_140 = arith.constant 0 : index
    %c0_141 = arith.constant 0 : index
    %406 = vector.load %arg7[%c0_140, %c0_141] : memref<256x64xf32, #tpu.memory_space<vmem>>, vector<256x64xf32>
    %cst_142 = arith.constant dense<0.000000e+00> : vector<16x64xf32>
    %407 = tpu.matmul %405, %406, %cst_142 {dimension_numbers = #tpu.dot_dimension_numbers<[1], [0], [0], [1], [0, 0, 1, 1], [], []>} : vector<16x256xf32>, vector<256x64xf32>, vector<16x64xf32> -> vector<16x64xf32>
    %c0_143 = arith.constant 0 : index
    %c0_144 = arith.constant 0 : index
    %408 = vector.load %arg8[%c0_143, %c0_144] : memref<1x64xf32, #tpu.memory_space<vmem>>, vector<1x64xf32>
    %409 = vector.broadcast %408 : vector<1x64xf32> to vector<16x64xf32>
    %410 = arith.addf %407, %409 : vector<16x64xf32>
    %411 = vector.extract_strided_slice %4 {offsets = [48, 0], sizes = [16, 96], strides = [1, 1]} : vector<64x96xf32> to vector<16x96xf32>
    %412 = vector.shape_cast %6 : vector<1x32xf32> to vector<1x32xf32>
    %413 = vector.broadcast %412 : vector<1x32xf32> to vector<16x32xf32>
    %414 = vector.extract_strided_slice %410 {offsets = [0, 0], sizes = [16, 16], strides = [1, 1]} : vector<16x64xf32> to vector<16x16xf32>
    %415 = vector.extract_strided_slice %411 {offsets = [0, 0], sizes = [16, 8], strides = [1, 1]} : vector<16x96xf32> to vector<16x8xf32>
    %416 = vector.extract_strided_slice %411 {offsets = [0, 32], sizes = [16, 8], strides = [1, 1]} : vector<16x96xf32> to vector<16x8xf32>
    %417 = vector.extract_strided_slice %411 {offsets = [0, 64], sizes = [16, 8], strides = [1, 1]} : vector<16x96xf32> to vector<16x8xf32>
    %cst_145 = arith.constant dense<0.000000e+00> : vector<16x16xf32>
    %418 = tpu.matmul %415, %416, %cst_145 {dimension_numbers = #tpu.dot_dimension_numbers<[1], [1], [0], [0], [0, 0, 1, 0], [], []>} : vector<16x8xf32>, vector<16x8xf32>, vector<16x16xf32> -> vector<16x16xf32>
    %419 = arith.addf %418, %414 : vector<16x16xf32>
    %cst_146 = arith.constant dense<0xFF800000> : vector<16xf32>
    %420 = vector.multi_reduction <maximumf>, %419, %cst_146 [1] : vector<16x16xf32> to vector<16xf32>
    %421 = vector.shape_cast %420 : vector<16xf32> to vector<16x1xf32>
    %422 = vector.broadcast %421 : vector<16x1xf32> to vector<16x16xf32>
    %423 = arith.subf %419, %422 : vector<16x16xf32>
    %424 = math.exp %423 : vector<16x16xf32>
    %cst_147 = arith.constant dense<0.000000e+00> : vector<16xf32>
    %425 = vector.multi_reduction <add>, %424, %cst_147 [1] : vector<16x16xf32> to vector<16xf32>
    %426 = vector.shape_cast %425 : vector<16xf32> to vector<16x1xf32>
    %cst_148 = arith.constant dense<0.000000e+00> : vector<16x8xf32>
    %427 = tpu.matmul %424, %417, %cst_148 {dimension_numbers = #tpu.dot_dimension_numbers<[1], [0], [0], [1], [0, 0, 1, 1], [], []>} : vector<16x16xf32>, vector<16x8xf32>, vector<16x8xf32> -> vector<16x8xf32>
    %428 = tpu.reciprocal %426 {approx = true} : vector<16x1xf32> -> vector<16x1xf32>
    %429 = vector.broadcast %428 : vector<16x1xf32> to vector<16x8xf32>
    %430 = arith.mulf %427, %429 : vector<16x8xf32>
    %431 = vector.extract_strided_slice %5 {offsets = [0, 0], sizes = [8, 32], strides = [1, 1]} : vector<32x32xf32> to vector<8x32xf32>
    %cst_149 = arith.constant dense<0.000000e+00> : vector<16x32xf32>
    %432 = tpu.matmul %430, %431, %cst_149 {dimension_numbers = #tpu.dot_dimension_numbers<[1], [0], [0], [1], [0, 0, 1, 1], [], []>} : vector<16x8xf32>, vector<8x32xf32>, vector<16x32xf32> -> vector<16x32xf32>
    %433 = arith.addf %413, %432 : vector<16x32xf32>
    %434 = vector.extract_strided_slice %410 {offsets = [0, 16], sizes = [16, 16], strides = [1, 1]} : vector<16x64xf32> to vector<16x16xf32>
    %435 = vector.extract_strided_slice %411 {offsets = [0, 8], sizes = [16, 8], strides = [1, 1]} : vector<16x96xf32> to vector<16x8xf32>
    %436 = vector.extract_strided_slice %411 {offsets = [0, 40], sizes = [16, 8], strides = [1, 1]} : vector<16x96xf32> to vector<16x8xf32>
    %437 = vector.extract_strided_slice %411 {offsets = [0, 72], sizes = [16, 8], strides = [1, 1]} : vector<16x96xf32> to vector<16x8xf32>
    %cst_150 = arith.constant dense<0.000000e+00> : vector<16x16xf32>
    %438 = tpu.matmul %435, %436, %cst_150 {dimension_numbers = #tpu.dot_dimension_numbers<[1], [1], [0], [0], [0, 0, 1, 0], [], []>} : vector<16x8xf32>, vector<16x8xf32>, vector<16x16xf32> -> vector<16x16xf32>
    %439 = arith.addf %438, %434 : vector<16x16xf32>
    %cst_151 = arith.constant dense<0xFF800000> : vector<16xf32>
    %440 = vector.multi_reduction <maximumf>, %439, %cst_151 [1] : vector<16x16xf32> to vector<16xf32>
    %441 = vector.shape_cast %440 : vector<16xf32> to vector<16x1xf32>
    %442 = vector.broadcast %441 : vector<16x1xf32> to vector<16x16xf32>
    %443 = arith.subf %439, %442 : vector<16x16xf32>
    %444 = math.exp %443 : vector<16x16xf32>
    %cst_152 = arith.constant dense<0.000000e+00> : vector<16xf32>
    %445 = vector.multi_reduction <add>, %444, %cst_152 [1] : vector<16x16xf32> to vector<16xf32>
    %446 = vector.shape_cast %445 : vector<16xf32> to vector<16x1xf32>
    %cst_153 = arith.constant dense<0.000000e+00> : vector<16x8xf32>
    %447 = tpu.matmul %444, %437, %cst_153 {dimension_numbers = #tpu.dot_dimension_numbers<[1], [0], [0], [1], [0, 0, 1, 1], [], []>} : vector<16x16xf32>, vector<16x8xf32>, vector<16x8xf32> -> vector<16x8xf32>
    %448 = tpu.reciprocal %446 {approx = true} : vector<16x1xf32> -> vector<16x1xf32>
    %449 = vector.broadcast %448 : vector<16x1xf32> to vector<16x8xf32>
    %450 = arith.mulf %447, %449 : vector<16x8xf32>
    %451 = vector.extract_strided_slice %5 {offsets = [8, 0], sizes = [8, 32], strides = [1, 1]} : vector<32x32xf32> to vector<8x32xf32>
    %cst_154 = arith.constant dense<0.000000e+00> : vector<16x32xf32>
    %452 = tpu.matmul %450, %451, %cst_154 {dimension_numbers = #tpu.dot_dimension_numbers<[1], [0], [0], [1], [0, 0, 1, 1], [], []>} : vector<16x8xf32>, vector<8x32xf32>, vector<16x32xf32> -> vector<16x32xf32>
    %453 = arith.addf %433, %452 : vector<16x32xf32>
    %454 = vector.extract_strided_slice %410 {offsets = [0, 32], sizes = [16, 16], strides = [1, 1]} : vector<16x64xf32> to vector<16x16xf32>
    %455 = vector.extract_strided_slice %411 {offsets = [0, 16], sizes = [16, 8], strides = [1, 1]} : vector<16x96xf32> to vector<16x8xf32>
    %456 = vector.extract_strided_slice %411 {offsets = [0, 48], sizes = [16, 8], strides = [1, 1]} : vector<16x96xf32> to vector<16x8xf32>
    %457 = vector.extract_strided_slice %411 {offsets = [0, 80], sizes = [16, 8], strides = [1, 1]} : vector<16x96xf32> to vector<16x8xf32>
    %cst_155 = arith.constant dense<0.000000e+00> : vector<16x16xf32>
    %458 = tpu.matmul %455, %456, %cst_155 {dimension_numbers = #tpu.dot_dimension_numbers<[1], [1], [0], [0], [0, 0, 1, 0], [], []>} : vector<16x8xf32>, vector<16x8xf32>, vector<16x16xf32> -> vector<16x16xf32>
    %459 = arith.addf %458, %454 : vector<16x16xf32>
    %cst_156 = arith.constant dense<0xFF800000> : vector<16xf32>
    %460 = vector.multi_reduction <maximumf>, %459, %cst_156 [1] : vector<16x16xf32> to vector<16xf32>
    %461 = vector.shape_cast %460 : vector<16xf32> to vector<16x1xf32>
    %462 = vector.broadcast %461 : vector<16x1xf32> to vector<16x16xf32>
    %463 = arith.subf %459, %462 : vector<16x16xf32>
    %464 = math.exp %463 : vector<16x16xf32>
    %cst_157 = arith.constant dense<0.000000e+00> : vector<16xf32>
    %465 = vector.multi_reduction <add>, %464, %cst_157 [1] : vector<16x16xf32> to vector<16xf32>
    %466 = vector.shape_cast %465 : vector<16xf32> to vector<16x1xf32>
    %cst_158 = arith.constant dense<0.000000e+00> : vector<16x8xf32>
    %467 = tpu.matmul %464, %457, %cst_158 {dimension_numbers = #tpu.dot_dimension_numbers<[1], [0], [0], [1], [0, 0, 1, 1], [], []>} : vector<16x16xf32>, vector<16x8xf32>, vector<16x8xf32> -> vector<16x8xf32>
    %468 = tpu.reciprocal %466 {approx = true} : vector<16x1xf32> -> vector<16x1xf32>
    %469 = vector.broadcast %468 : vector<16x1xf32> to vector<16x8xf32>
    %470 = arith.mulf %467, %469 : vector<16x8xf32>
    %471 = vector.extract_strided_slice %5 {offsets = [16, 0], sizes = [8, 32], strides = [1, 1]} : vector<32x32xf32> to vector<8x32xf32>
    %cst_159 = arith.constant dense<0.000000e+00> : vector<16x32xf32>
    %472 = tpu.matmul %470, %471, %cst_159 {dimension_numbers = #tpu.dot_dimension_numbers<[1], [0], [0], [1], [0, 0, 1, 1], [], []>} : vector<16x8xf32>, vector<8x32xf32>, vector<16x32xf32> -> vector<16x32xf32>
    %473 = arith.addf %453, %472 : vector<16x32xf32>
    %474 = vector.extract_strided_slice %410 {offsets = [0, 48], sizes = [16, 16], strides = [1, 1]} : vector<16x64xf32> to vector<16x16xf32>
    %475 = vector.extract_strided_slice %411 {offsets = [0, 24], sizes = [16, 8], strides = [1, 1]} : vector<16x96xf32> to vector<16x8xf32>
    %476 = vector.extract_strided_slice %411 {offsets = [0, 56], sizes = [16, 8], strides = [1, 1]} : vector<16x96xf32> to vector<16x8xf32>
    %477 = vector.extract_strided_slice %411 {offsets = [0, 88], sizes = [16, 8], strides = [1, 1]} : vector<16x96xf32> to vector<16x8xf32>
    %cst_160 = arith.constant dense<0.000000e+00> : vector<16x16xf32>
    %478 = tpu.matmul %475, %476, %cst_160 {dimension_numbers = #tpu.dot_dimension_numbers<[1], [1], [0], [0], [0, 0, 1, 0], [], []>} : vector<16x8xf32>, vector<16x8xf32>, vector<16x16xf32> -> vector<16x16xf32>
    %479 = arith.addf %478, %474 : vector<16x16xf32>
    %cst_161 = arith.constant dense<0xFF800000> : vector<16xf32>
    %480 = vector.multi_reduction <maximumf>, %479, %cst_161 [1] : vector<16x16xf32> to vector<16xf32>
    %481 = vector.shape_cast %480 : vector<16xf32> to vector<16x1xf32>
    %482 = vector.broadcast %481 : vector<16x1xf32> to vector<16x16xf32>
    %483 = arith.subf %479, %482 : vector<16x16xf32>
    %484 = math.exp %483 : vector<16x16xf32>
    %cst_162 = arith.constant dense<0.000000e+00> : vector<16xf32>
    %485 = vector.multi_reduction <add>, %484, %cst_162 [1] : vector<16x16xf32> to vector<16xf32>
    %486 = vector.shape_cast %485 : vector<16xf32> to vector<16x1xf32>
    %cst_163 = arith.constant dense<0.000000e+00> : vector<16x8xf32>
    %487 = tpu.matmul %484, %477, %cst_163 {dimension_numbers = #tpu.dot_dimension_numbers<[1], [0], [0], [1], [0, 0, 1, 1], [], []>} : vector<16x16xf32>, vector<16x8xf32>, vector<16x8xf32> -> vector<16x8xf32>
    %488 = tpu.reciprocal %486 {approx = true} : vector<16x1xf32> -> vector<16x1xf32>
    %489 = vector.broadcast %488 : vector<16x1xf32> to vector<16x8xf32>
    %490 = arith.mulf %487, %489 : vector<16x8xf32>
    %491 = vector.extract_strided_slice %5 {offsets = [24, 0], sizes = [8, 32], strides = [1, 1]} : vector<32x32xf32> to vector<8x32xf32>
    %cst_164 = arith.constant dense<0.000000e+00> : vector<16x32xf32>
    %492 = tpu.matmul %490, %491, %cst_164 {dimension_numbers = #tpu.dot_dimension_numbers<[1], [0], [0], [1], [0, 0, 1, 1], [], []>} : vector<16x8xf32>, vector<8x32xf32>, vector<16x32xf32> -> vector<16x32xf32>
    %493 = arith.addf %473, %492 : vector<16x32xf32>
    %494 = vector.shape_cast %493 : vector<16x32xf32> to vector<1x512xf32>
    %495 = tpu.concatenate %128, %250, %372, %494 in 0 : vector<1x512xf32>, vector<1x512xf32>, vector<1x512xf32>, vector<1x512xf32> -> vector<4x512xf32>
    %c0_165 = arith.constant 0 : index
    %c0_166 = arith.constant 0 : index
    %c0_167 = arith.constant 0 : index
    %496 = vector.load %arg11[%c0_165, %c0_166, %c0_167] : memref<1x4x512xf32, #tpu.memory_space<vmem>>, vector<1x4x512xf32>
    %497 = vector.shape_cast %496 : vector<1x4x512xf32> to vector<4x512xf32>
    %498 = vector.shape_cast %495 : vector<4x512xf32> to vector<1x4x512xf32>
    tpu.vector_store %arg11[%c0_165, %c0_166, %c0_167], %498 {strides = array<i32>} : memref<1x4x512xf32, #tpu.memory_space<vmem>>, vector<1x4x512xf32>,
    return
  }
  func.func @transform_0(%arg0: i32) -> (i32, i32, i32) {
    %c0_i32 = arith.constant 0 : i32
    %c0_i32_0 = arith.constant 0 : i32
    %c0_i32_1 = arith.constant 0 : i32
    return %arg0, %c0_i32, %c0_i32_0 : i32, i32, i32
  }
  func.func @transform_1(%arg0: i32) -> (i32, i32, i32) {
    %c0_i32 = arith.constant 0 : i32
    %c0_i32_0 = arith.constant 0 : i32
    %c0_i32_1 = arith.constant 0 : i32
    return %arg0, %c0_i32, %c0_i32_0 : i32, i32, i32
  }
  func.func @transform_2(%arg0: i32) -> (i32, i32, i32) {
    %c0_i32 = arith.constant 0 : i32
    %c0_i32_0 = arith.constant 0 : i32
    %c0_i32_1 = arith.constant 0 : i32
    return %arg0, %c0_i32, %c0_i32_0 : i32, i32, i32
  }
  func.func @transform_3(%arg0: i32) -> (i32, i32) {
    %c0_i32 = arith.constant 0 : i32
    %c0_i32_0 = arith.constant 0 : i32
    %c0_i32_1 = arith.constant 0 : i32
    return %c0_i32, %c0_i32_0 : i32, i32
  }
  func.func @transform_4(%arg0: i32) -> (i32, i32) {
    %c0_i32 = arith.constant 0 : i32
    %c0_i32_0 = arith.constant 0 : i32
    %c0_i32_1 = arith.constant 0 : i32
    return %c0_i32, %c0_i32_0 : i32, i32
  }
  func.func @transform_5(%arg0: i32) -> (i32, i32) {
    %c0_i32 = arith.constant 0 : i32
    %c0_i32_0 = arith.constant 0 : i32
    %c0_i32_1 = arith.constant 0 : i32
    return %c0_i32, %c0_i32_0 : i32, i32
  }
  func.func @transform_6(%arg0: i32) -> (i32, i32) {
    %c0_i32 = arith.constant 0 : i32
    %c0_i32_0 = arith.constant 0 : i32
    %c0_i32_1 = arith.constant 0 : i32
    return %c0_i32, %c0_i32_0 : i32, i32
  }
  func.func @transform_7(%arg0: i32) -> (i32, i32) {
    %c0_i32 = arith.constant 0 : i32
    %c0_i32_0 = arith.constant 0 : i32
    %c0_i32_1 = arith.constant 0 : i32
    return %c0_i32, %c0_i32_0 : i32, i32
  }
  func.func @transform_8(%arg0: i32) -> (i32, i32) {
    %c0_i32 = arith.constant 0 : i32
    %c0_i32_0 = arith.constant 0 : i32
    %c0_i32_1 = arith.constant 0 : i32
    return %c0_i32, %c0_i32_0 : i32, i32
  }
  func.func @transform_9(%arg0: i32) -> (i32, i32) {
    %c0_i32 = arith.constant 0 : i32
    %c0_i32_0 = arith.constant 0 : i32
    %c0_i32_1 = arith.constant 0 : i32
    return %c0_i32, %c0_i32_0 : i32, i32
  }
  func.func @transform_10(%arg0: i32) -> (i32, i32, i32) {
    %c0_i32 = arith.constant 0 : i32
    %c0_i32_0 = arith.constant 0 : i32
    %c0_i32_1 = arith.constant 0 : i32
    return %arg0, %c0_i32, %c0_i32_0 : i32, i32, i32
  }
}

module attributes {stable_mosaic.version = 11 : i64} {
  func.func @_relpos_attn_kernel(%arg0: i32, %arg1: memref<4x16x32xf32, #tpu.memory_space<vmem>>, %arg2: memref<4x16x2xf32, #tpu.memory_space<vmem>>, %arg3: memref<4x2x16xf32, #tpu.memory_space<vmem>>, %arg4: memref<32x96xf32, #tpu.memory_space<vmem>>, %arg5: memref<32x256xf32, #tpu.memory_space<vmem>>, %arg6: memref<1x256xf32, #tpu.memory_space<vmem>>, %arg7: memref<256x64xf32, #tpu.memory_space<vmem>>, %arg8: memref<1x64xf32, #tpu.memory_space<vmem>>, %arg9: memref<32x32xf32, #tpu.memory_space<vmem>>, %arg10: memref<1x32xf32, #tpu.memory_space<vmem>>, %arg11: memref<4x16x32xf32, #tpu.memory_space<vmem>>) attributes {dimension_semantics = [#tpu.dimension_semantics<parallel>], iteration_bounds = array<i64: 1>, scalar_prefetch = 0 : i64, scratch_operands = 0 : i64, tpu.core_type = #tpu.core_type<tc>, window_params = [{transform_indices = @transform_0, window_bounds = array<i64: 4, 16, 32>}, {transform_indices = @transform_1, window_bounds = array<i64: 4, 16, 2>}, {transform_indices = @transform_2, window_bounds = array<i64: 4, 2, 16>}, {pipeline_mode = #tpu.pipeline_mode<synchronous>, transform_indices = @transform_3, window_bounds = array<i64: 32, 96>}, {pipeline_mode = #tpu.pipeline_mode<synchronous>, transform_indices = @transform_4, window_bounds = array<i64: 32, 256>}, {pipeline_mode = #tpu.pipeline_mode<synchronous>, transform_indices = @transform_5, window_bounds = array<i64: 1, 256>}, {pipeline_mode = #tpu.pipeline_mode<synchronous>, transform_indices = @transform_6, window_bounds = array<i64: 256, 64>}, {pipeline_mode = #tpu.pipeline_mode<synchronous>, transform_indices = @transform_7, window_bounds = array<i64: 1, 64>}, {pipeline_mode = #tpu.pipeline_mode<synchronous>, transform_indices = @transform_8, window_bounds = array<i64: 32, 32>}, {pipeline_mode = #tpu.pipeline_mode<synchronous>, transform_indices = @transform_9, window_bounds = array<i64: 1, 32>}, {transform_indices = @transform_10, window_bounds = array<i64: 4, 16, 32>}]} {
    %c0 = arith.constant 0 : index
    %c0_0 = arith.constant 0 : index
    %c0_1 = arith.constant 0 : index
    %0 = vector.load %arg1[%c0, %c0_0, %c0_1] : memref<4x16x32xf32, #tpu.memory_space<vmem>>, vector<4x16x32xf32>
    %1 = vector.shape_cast %0 : vector<4x16x32xf32> to vector<64x32xf32>
    %c0_2 = arith.constant 0 : index
    %c0_3 = arith.constant 0 : index
    %2 = vector.load %arg4[%c0_2, %c0_3] : memref<32x96xf32, #tpu.memory_space<vmem>>, vector<32x96xf32>
    %cst = arith.constant dense<0.000000e+00> : vector<64x96xf32>
    %3 = tpu.matmul %1, %2, %cst {dimension_numbers = #tpu.dot_dimension_numbers<[1], [0], [0], [1], [0, 0, 1, 1], [], []>} : vector<64x32xf32>, vector<32x96xf32>, vector<64x96xf32> -> vector<64x96xf32>
    %c0_4 = arith.constant 0 : index
    %c0_5 = arith.constant 0 : index
    %4 = vector.load %arg9[%c0_4, %c0_5] : memref<32x32xf32, #tpu.memory_space<vmem>>, vector<32x32xf32>
    %c0_6 = arith.constant 0 : index
    %c0_7 = arith.constant 0 : index
    %5 = vector.load %arg10[%c0_6, %c0_7] : memref<1x32xf32, #tpu.memory_space<vmem>>, vector<1x32xf32>
    %c0_8 = arith.constant 0 : index
    %c0_9 = arith.constant 0 : index
    %c0_10 = arith.constant 0 : index
    %6 = vector.load %arg2[%c0_8, %c0_9, %c0_10] : memref<4x16x2xf32, #tpu.memory_space<vmem>>, vector<1x16x2xf32>
    %7 = vector.shape_cast %6 : vector<1x16x2xf32> to vector<16x2xf32>
    %c0_11 = arith.constant 0 : index
    %c0_12 = arith.constant 0 : index
    %c0_13 = arith.constant 0 : index
    %8 = vector.load %arg3[%c0_11, %c0_12, %c0_13] : memref<4x2x16xf32, #tpu.memory_space<vmem>>, vector<1x2x16xf32>
    %9 = vector.shape_cast %8 : vector<1x2x16xf32> to vector<2x16xf32>
    %10 = vector.extract_strided_slice %7 {offsets = [0, 0], sizes = [16, 1], strides = [1, 1]} : vector<16x2xf32> to vector<16x1xf32>
    %11 = vector.extract_strided_slice %9 {offsets = [0, 0], sizes = [1, 16], strides = [1, 1]} : vector<2x16xf32> to vector<1x16xf32>
    %12 = vector.broadcast %10 : vector<16x1xf32> to vector<16x16xf32>
    %13 = vector.broadcast %11 : vector<1x16xf32> to vector<16x16xf32>
    %14 = arith.subf %12, %13 : vector<16x16xf32>
    %15 = vector.extract_strided_slice %7 {offsets = [0, 1], sizes = [16, 1], strides = [1, 1]} : vector<16x2xf32> to vector<16x1xf32>
    %16 = vector.extract_strided_slice %9 {offsets = [1, 0], sizes = [1, 16], strides = [1, 1]} : vector<2x16xf32> to vector<1x16xf32>
    %17 = vector.broadcast %15 : vector<16x1xf32> to vector<16x16xf32>
    %18 = vector.broadcast %16 : vector<1x16xf32> to vector<16x16xf32>
    %19 = arith.subf %17, %18 : vector<16x16xf32>
    %20 = tpu.concatenate %14, %19 in 1 : vector<16x16xf32>, vector<16x16xf32> -> vector<16x32xf32>
    %c0_14 = arith.constant 0 : index
    %c0_15 = arith.constant 0 : index
    %21 = vector.load %arg5[%c0_14, %c0_15] : memref<32x256xf32, #tpu.memory_space<vmem>>, vector<32x256xf32>
    %cst_16 = arith.constant dense<0.000000e+00> : vector<16x256xf32>
    %22 = tpu.matmul %20, %21, %cst_16 {dimension_numbers = #tpu.dot_dimension_numbers<[1], [0], [0], [1], [0, 0, 1, 1], [], []>} : vector<16x32xf32>, vector<32x256xf32>, vector<16x256xf32> -> vector<16x256xf32>
    %c0_17 = arith.constant 0 : index
    %c0_18 = arith.constant 0 : index
    %23 = vector.load %arg6[%c0_17, %c0_18] : memref<1x256xf32, #tpu.memory_space<vmem>>, vector<1x256xf32>
    %24 = vector.broadcast %23 : vector<1x256xf32> to vector<16x256xf32>
    %25 = arith.addf %22, %24 : vector<16x256xf32>
    %cst_19 = arith.constant 5.000000e-01 : f32
    %26 = vector.broadcast %cst_19 : f32 to vector<16x256xf32>
    %27 = arith.mulf %26, %25 : vector<16x256xf32>
    %cst_20 = arith.constant 4.471500e-02 : f32
    %28 = vector.broadcast %cst_20 : f32 to vector<16x256xf32>
    %29 = arith.mulf %28, %25 : vector<16x256xf32>
    %30 = arith.mulf %29, %25 : vector<16x256xf32>
    %31 = arith.mulf %30, %25 : vector<16x256xf32>
    %32 = arith.addf %25, %31 : vector<16x256xf32>
    %cst_21 = arith.constant 0.797884583 : f32
    %33 = vector.broadcast %cst_21 : f32 to vector<16x256xf32>
    %34 = arith.mulf %33, %32 : vector<16x256xf32>
    %35 = math.tanh %34 : vector<16x256xf32>
    %cst_22 = arith.constant 1.000000e+00 : f32
    %36 = vector.broadcast %cst_22 : f32 to vector<16x256xf32>
    %37 = arith.addf %36, %35 : vector<16x256xf32>
    %38 = arith.mulf %27, %37 : vector<16x256xf32>
    %c0_23 = arith.constant 0 : index
    %c0_24 = arith.constant 0 : index
    %39 = vector.load %arg7[%c0_23, %c0_24] : memref<256x64xf32, #tpu.memory_space<vmem>>, vector<256x64xf32>
    %cst_25 = arith.constant dense<0.000000e+00> : vector<16x64xf32>
    %40 = tpu.matmul %38, %39, %cst_25 {dimension_numbers = #tpu.dot_dimension_numbers<[1], [0], [0], [1], [0, 0, 1, 1], [], []>} : vector<16x256xf32>, vector<256x64xf32>, vector<16x64xf32> -> vector<16x64xf32>
    %c0_26 = arith.constant 0 : index
    %c0_27 = arith.constant 0 : index
    %41 = vector.load %arg8[%c0_26, %c0_27] : memref<1x64xf32, #tpu.memory_space<vmem>>, vector<1x64xf32>
    %42 = vector.broadcast %41 : vector<1x64xf32> to vector<16x64xf32>
    %43 = arith.addf %40, %42 : vector<16x64xf32>
    %44 = vector.extract_strided_slice %3 {offsets = [0, 0], sizes = [16, 96], strides = [1, 1]} : vector<64x96xf32> to vector<16x96xf32>
    %45 = vector.shape_cast %5 : vector<1x32xf32> to vector<1x32xf32>
    %46 = vector.broadcast %45 : vector<1x32xf32> to vector<16x32xf32>
    %47 = vector.extract_strided_slice %43 {offsets = [0, 0], sizes = [16, 16], strides = [1, 1]} : vector<16x64xf32> to vector<16x16xf32>
    %48 = vector.extract_strided_slice %44 {offsets = [0, 0], sizes = [16, 8], strides = [1, 1]} : vector<16x96xf32> to vector<16x8xf32>
    %49 = vector.extract_strided_slice %44 {offsets = [0, 32], sizes = [16, 8], strides = [1, 1]} : vector<16x96xf32> to vector<16x8xf32>
    %50 = vector.extract_strided_slice %44 {offsets = [0, 64], sizes = [16, 8], strides = [1, 1]} : vector<16x96xf32> to vector<16x8xf32>
    %cst_28 = arith.constant dense<0.000000e+00> : vector<16x16xf32>
    %51 = tpu.matmul %48, %49, %cst_28 {dimension_numbers = #tpu.dot_dimension_numbers<[1], [1], [0], [0], [0, 0, 1, 0], [], []>} : vector<16x8xf32>, vector<16x8xf32>, vector<16x16xf32> -> vector<16x16xf32>
    %52 = arith.addf %51, %47 : vector<16x16xf32>
    %cst_29 = arith.constant dense<0xFF800000> : vector<16xf32>
    %53 = vector.multi_reduction <maximumf>, %52, %cst_29 [1] : vector<16x16xf32> to vector<16xf32>
    %54 = vector.shape_cast %53 : vector<16xf32> to vector<16x1xf32>
    %55 = vector.broadcast %54 : vector<16x1xf32> to vector<16x16xf32>
    %56 = arith.subf %52, %55 : vector<16x16xf32>
    %57 = math.exp %56 : vector<16x16xf32>
    %cst_30 = arith.constant dense<0.000000e+00> : vector<16xf32>
    %58 = vector.multi_reduction <add>, %57, %cst_30 [1] : vector<16x16xf32> to vector<16xf32>
    %59 = vector.shape_cast %58 : vector<16xf32> to vector<16x1xf32>
    %cst_31 = arith.constant dense<0.000000e+00> : vector<16x8xf32>
    %60 = tpu.matmul %57, %50, %cst_31 {dimension_numbers = #tpu.dot_dimension_numbers<[1], [0], [0], [1], [0, 0, 1, 1], [], []>} : vector<16x16xf32>, vector<16x8xf32>, vector<16x8xf32> -> vector<16x8xf32>
    %61 = tpu.reciprocal %59 {approx = true} : vector<16x1xf32> -> vector<16x1xf32>
    %62 = vector.broadcast %61 : vector<16x1xf32> to vector<16x8xf32>
    %63 = arith.mulf %60, %62 : vector<16x8xf32>
    %64 = vector.extract_strided_slice %4 {offsets = [0, 0], sizes = [8, 32], strides = [1, 1]} : vector<32x32xf32> to vector<8x32xf32>
    %cst_32 = arith.constant dense<0.000000e+00> : vector<16x32xf32>
    %65 = tpu.matmul %63, %64, %cst_32 {dimension_numbers = #tpu.dot_dimension_numbers<[1], [0], [0], [1], [0, 0, 1, 1], [], []>} : vector<16x8xf32>, vector<8x32xf32>, vector<16x32xf32> -> vector<16x32xf32>
    %66 = arith.addf %46, %65 : vector<16x32xf32>
    %67 = vector.extract_strided_slice %43 {offsets = [0, 16], sizes = [16, 16], strides = [1, 1]} : vector<16x64xf32> to vector<16x16xf32>
    %68 = vector.extract_strided_slice %44 {offsets = [0, 8], sizes = [16, 8], strides = [1, 1]} : vector<16x96xf32> to vector<16x8xf32>
    %69 = vector.extract_strided_slice %44 {offsets = [0, 40], sizes = [16, 8], strides = [1, 1]} : vector<16x96xf32> to vector<16x8xf32>
    %70 = vector.extract_strided_slice %44 {offsets = [0, 72], sizes = [16, 8], strides = [1, 1]} : vector<16x96xf32> to vector<16x8xf32>
    %cst_33 = arith.constant dense<0.000000e+00> : vector<16x16xf32>
    %71 = tpu.matmul %68, %69, %cst_33 {dimension_numbers = #tpu.dot_dimension_numbers<[1], [1], [0], [0], [0, 0, 1, 0], [], []>} : vector<16x8xf32>, vector<16x8xf32>, vector<16x16xf32> -> vector<16x16xf32>
    %72 = arith.addf %71, %67 : vector<16x16xf32>
    %cst_34 = arith.constant dense<0xFF800000> : vector<16xf32>
    %73 = vector.multi_reduction <maximumf>, %72, %cst_34 [1] : vector<16x16xf32> to vector<16xf32>
    %74 = vector.shape_cast %73 : vector<16xf32> to vector<16x1xf32>
    %75 = vector.broadcast %74 : vector<16x1xf32> to vector<16x16xf32>
    %76 = arith.subf %72, %75 : vector<16x16xf32>
    %77 = math.exp %76 : vector<16x16xf32>
    %cst_35 = arith.constant dense<0.000000e+00> : vector<16xf32>
    %78 = vector.multi_reduction <add>, %77, %cst_35 [1] : vector<16x16xf32> to vector<16xf32>
    %79 = vector.shape_cast %78 : vector<16xf32> to vector<16x1xf32>
    %cst_36 = arith.constant dense<0.000000e+00> : vector<16x8xf32>
    %80 = tpu.matmul %77, %70, %cst_36 {dimension_numbers = #tpu.dot_dimension_numbers<[1], [0], [0], [1], [0, 0, 1, 1], [], []>} : vector<16x16xf32>, vector<16x8xf32>, vector<16x8xf32> -> vector<16x8xf32>
    %81 = tpu.reciprocal %79 {approx = true} : vector<16x1xf32> -> vector<16x1xf32>
    %82 = vector.broadcast %81 : vector<16x1xf32> to vector<16x8xf32>
    %83 = arith.mulf %80, %82 : vector<16x8xf32>
    %84 = vector.extract_strided_slice %4 {offsets = [8, 0], sizes = [8, 32], strides = [1, 1]} : vector<32x32xf32> to vector<8x32xf32>
    %cst_37 = arith.constant dense<0.000000e+00> : vector<16x32xf32>
    %85 = tpu.matmul %83, %84, %cst_37 {dimension_numbers = #tpu.dot_dimension_numbers<[1], [0], [0], [1], [0, 0, 1, 1], [], []>} : vector<16x8xf32>, vector<8x32xf32>, vector<16x32xf32> -> vector<16x32xf32>
    %86 = arith.addf %66, %85 : vector<16x32xf32>
    %87 = vector.extract_strided_slice %43 {offsets = [0, 32], sizes = [16, 16], strides = [1, 1]} : vector<16x64xf32> to vector<16x16xf32>
    %88 = vector.extract_strided_slice %44 {offsets = [0, 16], sizes = [16, 8], strides = [1, 1]} : vector<16x96xf32> to vector<16x8xf32>
    %89 = vector.extract_strided_slice %44 {offsets = [0, 48], sizes = [16, 8], strides = [1, 1]} : vector<16x96xf32> to vector<16x8xf32>
    %90 = vector.extract_strided_slice %44 {offsets = [0, 80], sizes = [16, 8], strides = [1, 1]} : vector<16x96xf32> to vector<16x8xf32>
    %cst_38 = arith.constant dense<0.000000e+00> : vector<16x16xf32>
    %91 = tpu.matmul %88, %89, %cst_38 {dimension_numbers = #tpu.dot_dimension_numbers<[1], [1], [0], [0], [0, 0, 1, 0], [], []>} : vector<16x8xf32>, vector<16x8xf32>, vector<16x16xf32> -> vector<16x16xf32>
    %92 = arith.addf %91, %87 : vector<16x16xf32>
    %cst_39 = arith.constant dense<0xFF800000> : vector<16xf32>
    %93 = vector.multi_reduction <maximumf>, %92, %cst_39 [1] : vector<16x16xf32> to vector<16xf32>
    %94 = vector.shape_cast %93 : vector<16xf32> to vector<16x1xf32>
    %95 = vector.broadcast %94 : vector<16x1xf32> to vector<16x16xf32>
    %96 = arith.subf %92, %95 : vector<16x16xf32>
    %97 = math.exp %96 : vector<16x16xf32>
    %cst_40 = arith.constant dense<0.000000e+00> : vector<16xf32>
    %98 = vector.multi_reduction <add>, %97, %cst_40 [1] : vector<16x16xf32> to vector<16xf32>
    %99 = vector.shape_cast %98 : vector<16xf32> to vector<16x1xf32>
    %cst_41 = arith.constant dense<0.000000e+00> : vector<16x8xf32>
    %100 = tpu.matmul %97, %90, %cst_41 {dimension_numbers = #tpu.dot_dimension_numbers<[1], [0], [0], [1], [0, 0, 1, 1], [], []>} : vector<16x16xf32>, vector<16x8xf32>, vector<16x8xf32> -> vector<16x8xf32>
    %101 = tpu.reciprocal %99 {approx = true} : vector<16x1xf32> -> vector<16x1xf32>
    %102 = vector.broadcast %101 : vector<16x1xf32> to vector<16x8xf32>
    %103 = arith.mulf %100, %102 : vector<16x8xf32>
    %104 = vector.extract_strided_slice %4 {offsets = [16, 0], sizes = [8, 32], strides = [1, 1]} : vector<32x32xf32> to vector<8x32xf32>
    %cst_42 = arith.constant dense<0.000000e+00> : vector<16x32xf32>
    %105 = tpu.matmul %103, %104, %cst_42 {dimension_numbers = #tpu.dot_dimension_numbers<[1], [0], [0], [1], [0, 0, 1, 1], [], []>} : vector<16x8xf32>, vector<8x32xf32>, vector<16x32xf32> -> vector<16x32xf32>
    %106 = arith.addf %86, %105 : vector<16x32xf32>
    %107 = vector.extract_strided_slice %43 {offsets = [0, 48], sizes = [16, 16], strides = [1, 1]} : vector<16x64xf32> to vector<16x16xf32>
    %108 = vector.extract_strided_slice %44 {offsets = [0, 24], sizes = [16, 8], strides = [1, 1]} : vector<16x96xf32> to vector<16x8xf32>
    %109 = vector.extract_strided_slice %44 {offsets = [0, 56], sizes = [16, 8], strides = [1, 1]} : vector<16x96xf32> to vector<16x8xf32>
    %110 = vector.extract_strided_slice %44 {offsets = [0, 88], sizes = [16, 8], strides = [1, 1]} : vector<16x96xf32> to vector<16x8xf32>
    %cst_43 = arith.constant dense<0.000000e+00> : vector<16x16xf32>
    %111 = tpu.matmul %108, %109, %cst_43 {dimension_numbers = #tpu.dot_dimension_numbers<[1], [1], [0], [0], [0, 0, 1, 0], [], []>} : vector<16x8xf32>, vector<16x8xf32>, vector<16x16xf32> -> vector<16x16xf32>
    %112 = arith.addf %111, %107 : vector<16x16xf32>
    %cst_44 = arith.constant dense<0xFF800000> : vector<16xf32>
    %113 = vector.multi_reduction <maximumf>, %112, %cst_44 [1] : vector<16x16xf32> to vector<16xf32>
    %114 = vector.shape_cast %113 : vector<16xf32> to vector<16x1xf32>
    %115 = vector.broadcast %114 : vector<16x1xf32> to vector<16x16xf32>
    %116 = arith.subf %112, %115 : vector<16x16xf32>
    %117 = math.exp %116 : vector<16x16xf32>
    %cst_45 = arith.constant dense<0.000000e+00> : vector<16xf32>
    %118 = vector.multi_reduction <add>, %117, %cst_45 [1] : vector<16x16xf32> to vector<16xf32>
    %119 = vector.shape_cast %118 : vector<16xf32> to vector<16x1xf32>
    %cst_46 = arith.constant dense<0.000000e+00> : vector<16x8xf32>
    %120 = tpu.matmul %117, %110, %cst_46 {dimension_numbers = #tpu.dot_dimension_numbers<[1], [0], [0], [1], [0, 0, 1, 1], [], []>} : vector<16x16xf32>, vector<16x8xf32>, vector<16x8xf32> -> vector<16x8xf32>
    %121 = tpu.reciprocal %119 {approx = true} : vector<16x1xf32> -> vector<16x1xf32>
    %122 = vector.broadcast %121 : vector<16x1xf32> to vector<16x8xf32>
    %123 = arith.mulf %120, %122 : vector<16x8xf32>
    %124 = vector.extract_strided_slice %4 {offsets = [24, 0], sizes = [8, 32], strides = [1, 1]} : vector<32x32xf32> to vector<8x32xf32>
    %cst_47 = arith.constant dense<0.000000e+00> : vector<16x32xf32>
    %125 = tpu.matmul %123, %124, %cst_47 {dimension_numbers = #tpu.dot_dimension_numbers<[1], [0], [0], [1], [0, 0, 1, 1], [], []>} : vector<16x8xf32>, vector<8x32xf32>, vector<16x32xf32> -> vector<16x32xf32>
    %126 = arith.addf %106, %125 : vector<16x32xf32>
    %c0_48 = arith.constant 0 : index
    %c0_49 = arith.constant 0 : index
    %c0_50 = arith.constant 0 : index
    %127 = vector.load %arg11[%c0_48, %c0_49, %c0_50] : memref<4x16x32xf32, #tpu.memory_space<vmem>>, vector<1x16x32xf32>
    %128 = vector.shape_cast %127 : vector<1x16x32xf32> to vector<16x32xf32>
    %129 = vector.shape_cast %126 : vector<16x32xf32> to vector<1x16x32xf32>
    tpu.vector_store %arg11[%c0_48, %c0_49, %c0_50], %129 {strides = array<i32>} : memref<4x16x32xf32, #tpu.memory_space<vmem>>, vector<1x16x32xf32>,
    %c1 = arith.constant 1 : index
    %c0_51 = arith.constant 0 : index
    %c0_52 = arith.constant 0 : index
    %130 = vector.load %arg2[%c1, %c0_51, %c0_52] : memref<4x16x2xf32, #tpu.memory_space<vmem>>, vector<1x16x2xf32>
    %131 = vector.shape_cast %130 : vector<1x16x2xf32> to vector<16x2xf32>
    %c1_53 = arith.constant 1 : index
    %c0_54 = arith.constant 0 : index
    %c0_55 = arith.constant 0 : index
    %132 = vector.load %arg3[%c1_53, %c0_54, %c0_55] : memref<4x2x16xf32, #tpu.memory_space<vmem>>, vector<1x2x16xf32>
    %133 = vector.shape_cast %132 : vector<1x2x16xf32> to vector<2x16xf32>
    %134 = vector.extract_strided_slice %131 {offsets = [0, 0], sizes = [16, 1], strides = [1, 1]} : vector<16x2xf32> to vector<16x1xf32>
    %135 = vector.extract_strided_slice %133 {offsets = [0, 0], sizes = [1, 16], strides = [1, 1]} : vector<2x16xf32> to vector<1x16xf32>
    %136 = vector.broadcast %134 : vector<16x1xf32> to vector<16x16xf32>
    %137 = vector.broadcast %135 : vector<1x16xf32> to vector<16x16xf32>
    %138 = arith.subf %136, %137 : vector<16x16xf32>
    %139 = vector.extract_strided_slice %131 {offsets = [0, 1], sizes = [16, 1], strides = [1, 1]} : vector<16x2xf32> to vector<16x1xf32>
    %140 = vector.extract_strided_slice %133 {offsets = [1, 0], sizes = [1, 16], strides = [1, 1]} : vector<2x16xf32> to vector<1x16xf32>
    %141 = vector.broadcast %139 : vector<16x1xf32> to vector<16x16xf32>
    %142 = vector.broadcast %140 : vector<1x16xf32> to vector<16x16xf32>
    %143 = arith.subf %141, %142 : vector<16x16xf32>
    %144 = tpu.concatenate %138, %143 in 1 : vector<16x16xf32>, vector<16x16xf32> -> vector<16x32xf32>
    %c0_56 = arith.constant 0 : index
    %c0_57 = arith.constant 0 : index
    %145 = vector.load %arg5[%c0_56, %c0_57] : memref<32x256xf32, #tpu.memory_space<vmem>>, vector<32x256xf32>
    %cst_58 = arith.constant dense<0.000000e+00> : vector<16x256xf32>
    %146 = tpu.matmul %144, %145, %cst_58 {dimension_numbers = #tpu.dot_dimension_numbers<[1], [0], [0], [1], [0, 0, 1, 1], [], []>} : vector<16x32xf32>, vector<32x256xf32>, vector<16x256xf32> -> vector<16x256xf32>
    %c0_59 = arith.constant 0 : index
    %c0_60 = arith.constant 0 : index
    %147 = vector.load %arg6[%c0_59, %c0_60] : memref<1x256xf32, #tpu.memory_space<vmem>>, vector<1x256xf32>
    %148 = vector.broadcast %147 : vector<1x256xf32> to vector<16x256xf32>
    %149 = arith.addf %146, %148 : vector<16x256xf32>
    %cst_61 = arith.constant 5.000000e-01 : f32
    %150 = vector.broadcast %cst_61 : f32 to vector<16x256xf32>
    %151 = arith.mulf %150, %149 : vector<16x256xf32>
    %cst_62 = arith.constant 4.471500e-02 : f32
    %152 = vector.broadcast %cst_62 : f32 to vector<16x256xf32>
    %153 = arith.mulf %152, %149 : vector<16x256xf32>
    %154 = arith.mulf %153, %149 : vector<16x256xf32>
    %155 = arith.mulf %154, %149 : vector<16x256xf32>
    %156 = arith.addf %149, %155 : vector<16x256xf32>
    %cst_63 = arith.constant 0.797884583 : f32
    %157 = vector.broadcast %cst_63 : f32 to vector<16x256xf32>
    %158 = arith.mulf %157, %156 : vector<16x256xf32>
    %159 = math.tanh %158 : vector<16x256xf32>
    %cst_64 = arith.constant 1.000000e+00 : f32
    %160 = vector.broadcast %cst_64 : f32 to vector<16x256xf32>
    %161 = arith.addf %160, %159 : vector<16x256xf32>
    %162 = arith.mulf %151, %161 : vector<16x256xf32>
    %c0_65 = arith.constant 0 : index
    %c0_66 = arith.constant 0 : index
    %163 = vector.load %arg7[%c0_65, %c0_66] : memref<256x64xf32, #tpu.memory_space<vmem>>, vector<256x64xf32>
    %cst_67 = arith.constant dense<0.000000e+00> : vector<16x64xf32>
    %164 = tpu.matmul %162, %163, %cst_67 {dimension_numbers = #tpu.dot_dimension_numbers<[1], [0], [0], [1], [0, 0, 1, 1], [], []>} : vector<16x256xf32>, vector<256x64xf32>, vector<16x64xf32> -> vector<16x64xf32>
    %c0_68 = arith.constant 0 : index
    %c0_69 = arith.constant 0 : index
    %165 = vector.load %arg8[%c0_68, %c0_69] : memref<1x64xf32, #tpu.memory_space<vmem>>, vector<1x64xf32>
    %166 = vector.broadcast %165 : vector<1x64xf32> to vector<16x64xf32>
    %167 = arith.addf %164, %166 : vector<16x64xf32>
    %168 = vector.extract_strided_slice %3 {offsets = [16, 0], sizes = [16, 96], strides = [1, 1]} : vector<64x96xf32> to vector<16x96xf32>
    %169 = vector.shape_cast %5 : vector<1x32xf32> to vector<1x32xf32>
    %170 = vector.broadcast %169 : vector<1x32xf32> to vector<16x32xf32>
    %171 = vector.extract_strided_slice %167 {offsets = [0, 0], sizes = [16, 16], strides = [1, 1]} : vector<16x64xf32> to vector<16x16xf32>
    %172 = vector.extract_strided_slice %168 {offsets = [0, 0], sizes = [16, 8], strides = [1, 1]} : vector<16x96xf32> to vector<16x8xf32>
    %173 = vector.extract_strided_slice %168 {offsets = [0, 32], sizes = [16, 8], strides = [1, 1]} : vector<16x96xf32> to vector<16x8xf32>
    %174 = vector.extract_strided_slice %168 {offsets = [0, 64], sizes = [16, 8], strides = [1, 1]} : vector<16x96xf32> to vector<16x8xf32>
    %cst_70 = arith.constant dense<0.000000e+00> : vector<16x16xf32>
    %175 = tpu.matmul %172, %173, %cst_70 {dimension_numbers = #tpu.dot_dimension_numbers<[1], [1], [0], [0], [0, 0, 1, 0], [], []>} : vector<16x8xf32>, vector<16x8xf32>, vector<16x16xf32> -> vector<16x16xf32>
    %176 = arith.addf %175, %171 : vector<16x16xf32>
    %cst_71 = arith.constant dense<0xFF800000> : vector<16xf32>
    %177 = vector.multi_reduction <maximumf>, %176, %cst_71 [1] : vector<16x16xf32> to vector<16xf32>
    %178 = vector.shape_cast %177 : vector<16xf32> to vector<16x1xf32>
    %179 = vector.broadcast %178 : vector<16x1xf32> to vector<16x16xf32>
    %180 = arith.subf %176, %179 : vector<16x16xf32>
    %181 = math.exp %180 : vector<16x16xf32>
    %cst_72 = arith.constant dense<0.000000e+00> : vector<16xf32>
    %182 = vector.multi_reduction <add>, %181, %cst_72 [1] : vector<16x16xf32> to vector<16xf32>
    %183 = vector.shape_cast %182 : vector<16xf32> to vector<16x1xf32>
    %cst_73 = arith.constant dense<0.000000e+00> : vector<16x8xf32>
    %184 = tpu.matmul %181, %174, %cst_73 {dimension_numbers = #tpu.dot_dimension_numbers<[1], [0], [0], [1], [0, 0, 1, 1], [], []>} : vector<16x16xf32>, vector<16x8xf32>, vector<16x8xf32> -> vector<16x8xf32>
    %185 = tpu.reciprocal %183 {approx = true} : vector<16x1xf32> -> vector<16x1xf32>
    %186 = vector.broadcast %185 : vector<16x1xf32> to vector<16x8xf32>
    %187 = arith.mulf %184, %186 : vector<16x8xf32>
    %188 = vector.extract_strided_slice %4 {offsets = [0, 0], sizes = [8, 32], strides = [1, 1]} : vector<32x32xf32> to vector<8x32xf32>
    %cst_74 = arith.constant dense<0.000000e+00> : vector<16x32xf32>
    %189 = tpu.matmul %187, %188, %cst_74 {dimension_numbers = #tpu.dot_dimension_numbers<[1], [0], [0], [1], [0, 0, 1, 1], [], []>} : vector<16x8xf32>, vector<8x32xf32>, vector<16x32xf32> -> vector<16x32xf32>
    %190 = arith.addf %170, %189 : vector<16x32xf32>
    %191 = vector.extract_strided_slice %167 {offsets = [0, 16], sizes = [16, 16], strides = [1, 1]} : vector<16x64xf32> to vector<16x16xf32>
    %192 = vector.extract_strided_slice %168 {offsets = [0, 8], sizes = [16, 8], strides = [1, 1]} : vector<16x96xf32> to vector<16x8xf32>
    %193 = vector.extract_strided_slice %168 {offsets = [0, 40], sizes = [16, 8], strides = [1, 1]} : vector<16x96xf32> to vector<16x8xf32>
    %194 = vector.extract_strided_slice %168 {offsets = [0, 72], sizes = [16, 8], strides = [1, 1]} : vector<16x96xf32> to vector<16x8xf32>
    %cst_75 = arith.constant dense<0.000000e+00> : vector<16x16xf32>
    %195 = tpu.matmul %192, %193, %cst_75 {dimension_numbers = #tpu.dot_dimension_numbers<[1], [1], [0], [0], [0, 0, 1, 0], [], []>} : vector<16x8xf32>, vector<16x8xf32>, vector<16x16xf32> -> vector<16x16xf32>
    %196 = arith.addf %195, %191 : vector<16x16xf32>
    %cst_76 = arith.constant dense<0xFF800000> : vector<16xf32>
    %197 = vector.multi_reduction <maximumf>, %196, %cst_76 [1] : vector<16x16xf32> to vector<16xf32>
    %198 = vector.shape_cast %197 : vector<16xf32> to vector<16x1xf32>
    %199 = vector.broadcast %198 : vector<16x1xf32> to vector<16x16xf32>
    %200 = arith.subf %196, %199 : vector<16x16xf32>
    %201 = math.exp %200 : vector<16x16xf32>
    %cst_77 = arith.constant dense<0.000000e+00> : vector<16xf32>
    %202 = vector.multi_reduction <add>, %201, %cst_77 [1] : vector<16x16xf32> to vector<16xf32>
    %203 = vector.shape_cast %202 : vector<16xf32> to vector<16x1xf32>
    %cst_78 = arith.constant dense<0.000000e+00> : vector<16x8xf32>
    %204 = tpu.matmul %201, %194, %cst_78 {dimension_numbers = #tpu.dot_dimension_numbers<[1], [0], [0], [1], [0, 0, 1, 1], [], []>} : vector<16x16xf32>, vector<16x8xf32>, vector<16x8xf32> -> vector<16x8xf32>
    %205 = tpu.reciprocal %203 {approx = true} : vector<16x1xf32> -> vector<16x1xf32>
    %206 = vector.broadcast %205 : vector<16x1xf32> to vector<16x8xf32>
    %207 = arith.mulf %204, %206 : vector<16x8xf32>
    %208 = vector.extract_strided_slice %4 {offsets = [8, 0], sizes = [8, 32], strides = [1, 1]} : vector<32x32xf32> to vector<8x32xf32>
    %cst_79 = arith.constant dense<0.000000e+00> : vector<16x32xf32>
    %209 = tpu.matmul %207, %208, %cst_79 {dimension_numbers = #tpu.dot_dimension_numbers<[1], [0], [0], [1], [0, 0, 1, 1], [], []>} : vector<16x8xf32>, vector<8x32xf32>, vector<16x32xf32> -> vector<16x32xf32>
    %210 = arith.addf %190, %209 : vector<16x32xf32>
    %211 = vector.extract_strided_slice %167 {offsets = [0, 32], sizes = [16, 16], strides = [1, 1]} : vector<16x64xf32> to vector<16x16xf32>
    %212 = vector.extract_strided_slice %168 {offsets = [0, 16], sizes = [16, 8], strides = [1, 1]} : vector<16x96xf32> to vector<16x8xf32>
    %213 = vector.extract_strided_slice %168 {offsets = [0, 48], sizes = [16, 8], strides = [1, 1]} : vector<16x96xf32> to vector<16x8xf32>
    %214 = vector.extract_strided_slice %168 {offsets = [0, 80], sizes = [16, 8], strides = [1, 1]} : vector<16x96xf32> to vector<16x8xf32>
    %cst_80 = arith.constant dense<0.000000e+00> : vector<16x16xf32>
    %215 = tpu.matmul %212, %213, %cst_80 {dimension_numbers = #tpu.dot_dimension_numbers<[1], [1], [0], [0], [0, 0, 1, 0], [], []>} : vector<16x8xf32>, vector<16x8xf32>, vector<16x16xf32> -> vector<16x16xf32>
    %216 = arith.addf %215, %211 : vector<16x16xf32>
    %cst_81 = arith.constant dense<0xFF800000> : vector<16xf32>
    %217 = vector.multi_reduction <maximumf>, %216, %cst_81 [1] : vector<16x16xf32> to vector<16xf32>
    %218 = vector.shape_cast %217 : vector<16xf32> to vector<16x1xf32>
    %219 = vector.broadcast %218 : vector<16x1xf32> to vector<16x16xf32>
    %220 = arith.subf %216, %219 : vector<16x16xf32>
    %221 = math.exp %220 : vector<16x16xf32>
    %cst_82 = arith.constant dense<0.000000e+00> : vector<16xf32>
    %222 = vector.multi_reduction <add>, %221, %cst_82 [1] : vector<16x16xf32> to vector<16xf32>
    %223 = vector.shape_cast %222 : vector<16xf32> to vector<16x1xf32>
    %cst_83 = arith.constant dense<0.000000e+00> : vector<16x8xf32>
    %224 = tpu.matmul %221, %214, %cst_83 {dimension_numbers = #tpu.dot_dimension_numbers<[1], [0], [0], [1], [0, 0, 1, 1], [], []>} : vector<16x16xf32>, vector<16x8xf32>, vector<16x8xf32> -> vector<16x8xf32>
    %225 = tpu.reciprocal %223 {approx = true} : vector<16x1xf32> -> vector<16x1xf32>
    %226 = vector.broadcast %225 : vector<16x1xf32> to vector<16x8xf32>
    %227 = arith.mulf %224, %226 : vector<16x8xf32>
    %228 = vector.extract_strided_slice %4 {offsets = [16, 0], sizes = [8, 32], strides = [1, 1]} : vector<32x32xf32> to vector<8x32xf32>
    %cst_84 = arith.constant dense<0.000000e+00> : vector<16x32xf32>
    %229 = tpu.matmul %227, %228, %cst_84 {dimension_numbers = #tpu.dot_dimension_numbers<[1], [0], [0], [1], [0, 0, 1, 1], [], []>} : vector<16x8xf32>, vector<8x32xf32>, vector<16x32xf32> -> vector<16x32xf32>
    %230 = arith.addf %210, %229 : vector<16x32xf32>
    %231 = vector.extract_strided_slice %167 {offsets = [0, 48], sizes = [16, 16], strides = [1, 1]} : vector<16x64xf32> to vector<16x16xf32>
    %232 = vector.extract_strided_slice %168 {offsets = [0, 24], sizes = [16, 8], strides = [1, 1]} : vector<16x96xf32> to vector<16x8xf32>
    %233 = vector.extract_strided_slice %168 {offsets = [0, 56], sizes = [16, 8], strides = [1, 1]} : vector<16x96xf32> to vector<16x8xf32>
    %234 = vector.extract_strided_slice %168 {offsets = [0, 88], sizes = [16, 8], strides = [1, 1]} : vector<16x96xf32> to vector<16x8xf32>
    %cst_85 = arith.constant dense<0.000000e+00> : vector<16x16xf32>
    %235 = tpu.matmul %232, %233, %cst_85 {dimension_numbers = #tpu.dot_dimension_numbers<[1], [1], [0], [0], [0, 0, 1, 0], [], []>} : vector<16x8xf32>, vector<16x8xf32>, vector<16x16xf32> -> vector<16x16xf32>
    %236 = arith.addf %235, %231 : vector<16x16xf32>
    %cst_86 = arith.constant dense<0xFF800000> : vector<16xf32>
    %237 = vector.multi_reduction <maximumf>, %236, %cst_86 [1] : vector<16x16xf32> to vector<16xf32>
    %238 = vector.shape_cast %237 : vector<16xf32> to vector<16x1xf32>
    %239 = vector.broadcast %238 : vector<16x1xf32> to vector<16x16xf32>
    %240 = arith.subf %236, %239 : vector<16x16xf32>
    %241 = math.exp %240 : vector<16x16xf32>
    %cst_87 = arith.constant dense<0.000000e+00> : vector<16xf32>
    %242 = vector.multi_reduction <add>, %241, %cst_87 [1] : vector<16x16xf32> to vector<16xf32>
    %243 = vector.shape_cast %242 : vector<16xf32> to vector<16x1xf32>
    %cst_88 = arith.constant dense<0.000000e+00> : vector<16x8xf32>
    %244 = tpu.matmul %241, %234, %cst_88 {dimension_numbers = #tpu.dot_dimension_numbers<[1], [0], [0], [1], [0, 0, 1, 1], [], []>} : vector<16x16xf32>, vector<16x8xf32>, vector<16x8xf32> -> vector<16x8xf32>
    %245 = tpu.reciprocal %243 {approx = true} : vector<16x1xf32> -> vector<16x1xf32>
    %246 = vector.broadcast %245 : vector<16x1xf32> to vector<16x8xf32>
    %247 = arith.mulf %244, %246 : vector<16x8xf32>
    %248 = vector.extract_strided_slice %4 {offsets = [24, 0], sizes = [8, 32], strides = [1, 1]} : vector<32x32xf32> to vector<8x32xf32>
    %cst_89 = arith.constant dense<0.000000e+00> : vector<16x32xf32>
    %249 = tpu.matmul %247, %248, %cst_89 {dimension_numbers = #tpu.dot_dimension_numbers<[1], [0], [0], [1], [0, 0, 1, 1], [], []>} : vector<16x8xf32>, vector<8x32xf32>, vector<16x32xf32> -> vector<16x32xf32>
    %250 = arith.addf %230, %249 : vector<16x32xf32>
    %c1_90 = arith.constant 1 : index
    %c0_91 = arith.constant 0 : index
    %c0_92 = arith.constant 0 : index
    %251 = vector.load %arg11[%c1_90, %c0_91, %c0_92] : memref<4x16x32xf32, #tpu.memory_space<vmem>>, vector<1x16x32xf32>
    %252 = vector.shape_cast %251 : vector<1x16x32xf32> to vector<16x32xf32>
    %253 = vector.shape_cast %250 : vector<16x32xf32> to vector<1x16x32xf32>
    tpu.vector_store %arg11[%c1_90, %c0_91, %c0_92], %253 {strides = array<i32>} : memref<4x16x32xf32, #tpu.memory_space<vmem>>, vector<1x16x32xf32>,
    %c2 = arith.constant 2 : index
    %c0_93 = arith.constant 0 : index
    %c0_94 = arith.constant 0 : index
    %254 = vector.load %arg2[%c2, %c0_93, %c0_94] : memref<4x16x2xf32, #tpu.memory_space<vmem>>, vector<1x16x2xf32>
    %255 = vector.shape_cast %254 : vector<1x16x2xf32> to vector<16x2xf32>
    %c2_95 = arith.constant 2 : index
    %c0_96 = arith.constant 0 : index
    %c0_97 = arith.constant 0 : index
    %256 = vector.load %arg3[%c2_95, %c0_96, %c0_97] : memref<4x2x16xf32, #tpu.memory_space<vmem>>, vector<1x2x16xf32>
    %257 = vector.shape_cast %256 : vector<1x2x16xf32> to vector<2x16xf32>
    %258 = vector.extract_strided_slice %255 {offsets = [0, 0], sizes = [16, 1], strides = [1, 1]} : vector<16x2xf32> to vector<16x1xf32>
    %259 = vector.extract_strided_slice %257 {offsets = [0, 0], sizes = [1, 16], strides = [1, 1]} : vector<2x16xf32> to vector<1x16xf32>
    %260 = vector.broadcast %258 : vector<16x1xf32> to vector<16x16xf32>
    %261 = vector.broadcast %259 : vector<1x16xf32> to vector<16x16xf32>
    %262 = arith.subf %260, %261 : vector<16x16xf32>
    %263 = vector.extract_strided_slice %255 {offsets = [0, 1], sizes = [16, 1], strides = [1, 1]} : vector<16x2xf32> to vector<16x1xf32>
    %264 = vector.extract_strided_slice %257 {offsets = [1, 0], sizes = [1, 16], strides = [1, 1]} : vector<2x16xf32> to vector<1x16xf32>
    %265 = vector.broadcast %263 : vector<16x1xf32> to vector<16x16xf32>
    %266 = vector.broadcast %264 : vector<1x16xf32> to vector<16x16xf32>
    %267 = arith.subf %265, %266 : vector<16x16xf32>
    %268 = tpu.concatenate %262, %267 in 1 : vector<16x16xf32>, vector<16x16xf32> -> vector<16x32xf32>
    %c0_98 = arith.constant 0 : index
    %c0_99 = arith.constant 0 : index
    %269 = vector.load %arg5[%c0_98, %c0_99] : memref<32x256xf32, #tpu.memory_space<vmem>>, vector<32x256xf32>
    %cst_100 = arith.constant dense<0.000000e+00> : vector<16x256xf32>
    %270 = tpu.matmul %268, %269, %cst_100 {dimension_numbers = #tpu.dot_dimension_numbers<[1], [0], [0], [1], [0, 0, 1, 1], [], []>} : vector<16x32xf32>, vector<32x256xf32>, vector<16x256xf32> -> vector<16x256xf32>
    %c0_101 = arith.constant 0 : index
    %c0_102 = arith.constant 0 : index
    %271 = vector.load %arg6[%c0_101, %c0_102] : memref<1x256xf32, #tpu.memory_space<vmem>>, vector<1x256xf32>
    %272 = vector.broadcast %271 : vector<1x256xf32> to vector<16x256xf32>
    %273 = arith.addf %270, %272 : vector<16x256xf32>
    %cst_103 = arith.constant 5.000000e-01 : f32
    %274 = vector.broadcast %cst_103 : f32 to vector<16x256xf32>
    %275 = arith.mulf %274, %273 : vector<16x256xf32>
    %cst_104 = arith.constant 4.471500e-02 : f32
    %276 = vector.broadcast %cst_104 : f32 to vector<16x256xf32>
    %277 = arith.mulf %276, %273 : vector<16x256xf32>
    %278 = arith.mulf %277, %273 : vector<16x256xf32>
    %279 = arith.mulf %278, %273 : vector<16x256xf32>
    %280 = arith.addf %273, %279 : vector<16x256xf32>
    %cst_105 = arith.constant 0.797884583 : f32
    %281 = vector.broadcast %cst_105 : f32 to vector<16x256xf32>
    %282 = arith.mulf %281, %280 : vector<16x256xf32>
    %283 = math.tanh %282 : vector<16x256xf32>
    %cst_106 = arith.constant 1.000000e+00 : f32
    %284 = vector.broadcast %cst_106 : f32 to vector<16x256xf32>
    %285 = arith.addf %284, %283 : vector<16x256xf32>
    %286 = arith.mulf %275, %285 : vector<16x256xf32>
    %c0_107 = arith.constant 0 : index
    %c0_108 = arith.constant 0 : index
    %287 = vector.load %arg7[%c0_107, %c0_108] : memref<256x64xf32, #tpu.memory_space<vmem>>, vector<256x64xf32>
    %cst_109 = arith.constant dense<0.000000e+00> : vector<16x64xf32>
    %288 = tpu.matmul %286, %287, %cst_109 {dimension_numbers = #tpu.dot_dimension_numbers<[1], [0], [0], [1], [0, 0, 1, 1], [], []>} : vector<16x256xf32>, vector<256x64xf32>, vector<16x64xf32> -> vector<16x64xf32>
    %c0_110 = arith.constant 0 : index
    %c0_111 = arith.constant 0 : index
    %289 = vector.load %arg8[%c0_110, %c0_111] : memref<1x64xf32, #tpu.memory_space<vmem>>, vector<1x64xf32>
    %290 = vector.broadcast %289 : vector<1x64xf32> to vector<16x64xf32>
    %291 = arith.addf %288, %290 : vector<16x64xf32>
    %292 = vector.extract_strided_slice %3 {offsets = [32, 0], sizes = [16, 96], strides = [1, 1]} : vector<64x96xf32> to vector<16x96xf32>
    %293 = vector.shape_cast %5 : vector<1x32xf32> to vector<1x32xf32>
    %294 = vector.broadcast %293 : vector<1x32xf32> to vector<16x32xf32>
    %295 = vector.extract_strided_slice %291 {offsets = [0, 0], sizes = [16, 16], strides = [1, 1]} : vector<16x64xf32> to vector<16x16xf32>
    %296 = vector.extract_strided_slice %292 {offsets = [0, 0], sizes = [16, 8], strides = [1, 1]} : vector<16x96xf32> to vector<16x8xf32>
    %297 = vector.extract_strided_slice %292 {offsets = [0, 32], sizes = [16, 8], strides = [1, 1]} : vector<16x96xf32> to vector<16x8xf32>
    %298 = vector.extract_strided_slice %292 {offsets = [0, 64], sizes = [16, 8], strides = [1, 1]} : vector<16x96xf32> to vector<16x8xf32>
    %cst_112 = arith.constant dense<0.000000e+00> : vector<16x16xf32>
    %299 = tpu.matmul %296, %297, %cst_112 {dimension_numbers = #tpu.dot_dimension_numbers<[1], [1], [0], [0], [0, 0, 1, 0], [], []>} : vector<16x8xf32>, vector<16x8xf32>, vector<16x16xf32> -> vector<16x16xf32>
    %300 = arith.addf %299, %295 : vector<16x16xf32>
    %cst_113 = arith.constant dense<0xFF800000> : vector<16xf32>
    %301 = vector.multi_reduction <maximumf>, %300, %cst_113 [1] : vector<16x16xf32> to vector<16xf32>
    %302 = vector.shape_cast %301 : vector<16xf32> to vector<16x1xf32>
    %303 = vector.broadcast %302 : vector<16x1xf32> to vector<16x16xf32>
    %304 = arith.subf %300, %303 : vector<16x16xf32>
    %305 = math.exp %304 : vector<16x16xf32>
    %cst_114 = arith.constant dense<0.000000e+00> : vector<16xf32>
    %306 = vector.multi_reduction <add>, %305, %cst_114 [1] : vector<16x16xf32> to vector<16xf32>
    %307 = vector.shape_cast %306 : vector<16xf32> to vector<16x1xf32>
    %cst_115 = arith.constant dense<0.000000e+00> : vector<16x8xf32>
    %308 = tpu.matmul %305, %298, %cst_115 {dimension_numbers = #tpu.dot_dimension_numbers<[1], [0], [0], [1], [0, 0, 1, 1], [], []>} : vector<16x16xf32>, vector<16x8xf32>, vector<16x8xf32> -> vector<16x8xf32>
    %309 = tpu.reciprocal %307 {approx = true} : vector<16x1xf32> -> vector<16x1xf32>
    %310 = vector.broadcast %309 : vector<16x1xf32> to vector<16x8xf32>
    %311 = arith.mulf %308, %310 : vector<16x8xf32>
    %312 = vector.extract_strided_slice %4 {offsets = [0, 0], sizes = [8, 32], strides = [1, 1]} : vector<32x32xf32> to vector<8x32xf32>
    %cst_116 = arith.constant dense<0.000000e+00> : vector<16x32xf32>
    %313 = tpu.matmul %311, %312, %cst_116 {dimension_numbers = #tpu.dot_dimension_numbers<[1], [0], [0], [1], [0, 0, 1, 1], [], []>} : vector<16x8xf32>, vector<8x32xf32>, vector<16x32xf32> -> vector<16x32xf32>
    %314 = arith.addf %294, %313 : vector<16x32xf32>
    %315 = vector.extract_strided_slice %291 {offsets = [0, 16], sizes = [16, 16], strides = [1, 1]} : vector<16x64xf32> to vector<16x16xf32>
    %316 = vector.extract_strided_slice %292 {offsets = [0, 8], sizes = [16, 8], strides = [1, 1]} : vector<16x96xf32> to vector<16x8xf32>
    %317 = vector.extract_strided_slice %292 {offsets = [0, 40], sizes = [16, 8], strides = [1, 1]} : vector<16x96xf32> to vector<16x8xf32>
    %318 = vector.extract_strided_slice %292 {offsets = [0, 72], sizes = [16, 8], strides = [1, 1]} : vector<16x96xf32> to vector<16x8xf32>
    %cst_117 = arith.constant dense<0.000000e+00> : vector<16x16xf32>
    %319 = tpu.matmul %316, %317, %cst_117 {dimension_numbers = #tpu.dot_dimension_numbers<[1], [1], [0], [0], [0, 0, 1, 0], [], []>} : vector<16x8xf32>, vector<16x8xf32>, vector<16x16xf32> -> vector<16x16xf32>
    %320 = arith.addf %319, %315 : vector<16x16xf32>
    %cst_118 = arith.constant dense<0xFF800000> : vector<16xf32>
    %321 = vector.multi_reduction <maximumf>, %320, %cst_118 [1] : vector<16x16xf32> to vector<16xf32>
    %322 = vector.shape_cast %321 : vector<16xf32> to vector<16x1xf32>
    %323 = vector.broadcast %322 : vector<16x1xf32> to vector<16x16xf32>
    %324 = arith.subf %320, %323 : vector<16x16xf32>
    %325 = math.exp %324 : vector<16x16xf32>
    %cst_119 = arith.constant dense<0.000000e+00> : vector<16xf32>
    %326 = vector.multi_reduction <add>, %325, %cst_119 [1] : vector<16x16xf32> to vector<16xf32>
    %327 = vector.shape_cast %326 : vector<16xf32> to vector<16x1xf32>
    %cst_120 = arith.constant dense<0.000000e+00> : vector<16x8xf32>
    %328 = tpu.matmul %325, %318, %cst_120 {dimension_numbers = #tpu.dot_dimension_numbers<[1], [0], [0], [1], [0, 0, 1, 1], [], []>} : vector<16x16xf32>, vector<16x8xf32>, vector<16x8xf32> -> vector<16x8xf32>
    %329 = tpu.reciprocal %327 {approx = true} : vector<16x1xf32> -> vector<16x1xf32>
    %330 = vector.broadcast %329 : vector<16x1xf32> to vector<16x8xf32>
    %331 = arith.mulf %328, %330 : vector<16x8xf32>
    %332 = vector.extract_strided_slice %4 {offsets = [8, 0], sizes = [8, 32], strides = [1, 1]} : vector<32x32xf32> to vector<8x32xf32>
    %cst_121 = arith.constant dense<0.000000e+00> : vector<16x32xf32>
    %333 = tpu.matmul %331, %332, %cst_121 {dimension_numbers = #tpu.dot_dimension_numbers<[1], [0], [0], [1], [0, 0, 1, 1], [], []>} : vector<16x8xf32>, vector<8x32xf32>, vector<16x32xf32> -> vector<16x32xf32>
    %334 = arith.addf %314, %333 : vector<16x32xf32>
    %335 = vector.extract_strided_slice %291 {offsets = [0, 32], sizes = [16, 16], strides = [1, 1]} : vector<16x64xf32> to vector<16x16xf32>
    %336 = vector.extract_strided_slice %292 {offsets = [0, 16], sizes = [16, 8], strides = [1, 1]} : vector<16x96xf32> to vector<16x8xf32>
    %337 = vector.extract_strided_slice %292 {offsets = [0, 48], sizes = [16, 8], strides = [1, 1]} : vector<16x96xf32> to vector<16x8xf32>
    %338 = vector.extract_strided_slice %292 {offsets = [0, 80], sizes = [16, 8], strides = [1, 1]} : vector<16x96xf32> to vector<16x8xf32>
    %cst_122 = arith.constant dense<0.000000e+00> : vector<16x16xf32>
    %339 = tpu.matmul %336, %337, %cst_122 {dimension_numbers = #tpu.dot_dimension_numbers<[1], [1], [0], [0], [0, 0, 1, 0], [], []>} : vector<16x8xf32>, vector<16x8xf32>, vector<16x16xf32> -> vector<16x16xf32>
    %340 = arith.addf %339, %335 : vector<16x16xf32>
    %cst_123 = arith.constant dense<0xFF800000> : vector<16xf32>
    %341 = vector.multi_reduction <maximumf>, %340, %cst_123 [1] : vector<16x16xf32> to vector<16xf32>
    %342 = vector.shape_cast %341 : vector<16xf32> to vector<16x1xf32>
    %343 = vector.broadcast %342 : vector<16x1xf32> to vector<16x16xf32>
    %344 = arith.subf %340, %343 : vector<16x16xf32>
    %345 = math.exp %344 : vector<16x16xf32>
    %cst_124 = arith.constant dense<0.000000e+00> : vector<16xf32>
    %346 = vector.multi_reduction <add>, %345, %cst_124 [1] : vector<16x16xf32> to vector<16xf32>
    %347 = vector.shape_cast %346 : vector<16xf32> to vector<16x1xf32>
    %cst_125 = arith.constant dense<0.000000e+00> : vector<16x8xf32>
    %348 = tpu.matmul %345, %338, %cst_125 {dimension_numbers = #tpu.dot_dimension_numbers<[1], [0], [0], [1], [0, 0, 1, 1], [], []>} : vector<16x16xf32>, vector<16x8xf32>, vector<16x8xf32> -> vector<16x8xf32>
    %349 = tpu.reciprocal %347 {approx = true} : vector<16x1xf32> -> vector<16x1xf32>
    %350 = vector.broadcast %349 : vector<16x1xf32> to vector<16x8xf32>
    %351 = arith.mulf %348, %350 : vector<16x8xf32>
    %352 = vector.extract_strided_slice %4 {offsets = [16, 0], sizes = [8, 32], strides = [1, 1]} : vector<32x32xf32> to vector<8x32xf32>
    %cst_126 = arith.constant dense<0.000000e+00> : vector<16x32xf32>
    %353 = tpu.matmul %351, %352, %cst_126 {dimension_numbers = #tpu.dot_dimension_numbers<[1], [0], [0], [1], [0, 0, 1, 1], [], []>} : vector<16x8xf32>, vector<8x32xf32>, vector<16x32xf32> -> vector<16x32xf32>
    %354 = arith.addf %334, %353 : vector<16x32xf32>
    %355 = vector.extract_strided_slice %291 {offsets = [0, 48], sizes = [16, 16], strides = [1, 1]} : vector<16x64xf32> to vector<16x16xf32>
    %356 = vector.extract_strided_slice %292 {offsets = [0, 24], sizes = [16, 8], strides = [1, 1]} : vector<16x96xf32> to vector<16x8xf32>
    %357 = vector.extract_strided_slice %292 {offsets = [0, 56], sizes = [16, 8], strides = [1, 1]} : vector<16x96xf32> to vector<16x8xf32>
    %358 = vector.extract_strided_slice %292 {offsets = [0, 88], sizes = [16, 8], strides = [1, 1]} : vector<16x96xf32> to vector<16x8xf32>
    %cst_127 = arith.constant dense<0.000000e+00> : vector<16x16xf32>
    %359 = tpu.matmul %356, %357, %cst_127 {dimension_numbers = #tpu.dot_dimension_numbers<[1], [1], [0], [0], [0, 0, 1, 0], [], []>} : vector<16x8xf32>, vector<16x8xf32>, vector<16x16xf32> -> vector<16x16xf32>
    %360 = arith.addf %359, %355 : vector<16x16xf32>
    %cst_128 = arith.constant dense<0xFF800000> : vector<16xf32>
    %361 = vector.multi_reduction <maximumf>, %360, %cst_128 [1] : vector<16x16xf32> to vector<16xf32>
    %362 = vector.shape_cast %361 : vector<16xf32> to vector<16x1xf32>
    %363 = vector.broadcast %362 : vector<16x1xf32> to vector<16x16xf32>
    %364 = arith.subf %360, %363 : vector<16x16xf32>
    %365 = math.exp %364 : vector<16x16xf32>
    %cst_129 = arith.constant dense<0.000000e+00> : vector<16xf32>
    %366 = vector.multi_reduction <add>, %365, %cst_129 [1] : vector<16x16xf32> to vector<16xf32>
    %367 = vector.shape_cast %366 : vector<16xf32> to vector<16x1xf32>
    %cst_130 = arith.constant dense<0.000000e+00> : vector<16x8xf32>
    %368 = tpu.matmul %365, %358, %cst_130 {dimension_numbers = #tpu.dot_dimension_numbers<[1], [0], [0], [1], [0, 0, 1, 1], [], []>} : vector<16x16xf32>, vector<16x8xf32>, vector<16x8xf32> -> vector<16x8xf32>
    %369 = tpu.reciprocal %367 {approx = true} : vector<16x1xf32> -> vector<16x1xf32>
    %370 = vector.broadcast %369 : vector<16x1xf32> to vector<16x8xf32>
    %371 = arith.mulf %368, %370 : vector<16x8xf32>
    %372 = vector.extract_strided_slice %4 {offsets = [24, 0], sizes = [8, 32], strides = [1, 1]} : vector<32x32xf32> to vector<8x32xf32>
    %cst_131 = arith.constant dense<0.000000e+00> : vector<16x32xf32>
    %373 = tpu.matmul %371, %372, %cst_131 {dimension_numbers = #tpu.dot_dimension_numbers<[1], [0], [0], [1], [0, 0, 1, 1], [], []>} : vector<16x8xf32>, vector<8x32xf32>, vector<16x32xf32> -> vector<16x32xf32>
    %374 = arith.addf %354, %373 : vector<16x32xf32>
    %c2_132 = arith.constant 2 : index
    %c0_133 = arith.constant 0 : index
    %c0_134 = arith.constant 0 : index
    %375 = vector.load %arg11[%c2_132, %c0_133, %c0_134] : memref<4x16x32xf32, #tpu.memory_space<vmem>>, vector<1x16x32xf32>
    %376 = vector.shape_cast %375 : vector<1x16x32xf32> to vector<16x32xf32>
    %377 = vector.shape_cast %374 : vector<16x32xf32> to vector<1x16x32xf32>
    tpu.vector_store %arg11[%c2_132, %c0_133, %c0_134], %377 {strides = array<i32>} : memref<4x16x32xf32, #tpu.memory_space<vmem>>, vector<1x16x32xf32>,
    %c3 = arith.constant 3 : index
    %c0_135 = arith.constant 0 : index
    %c0_136 = arith.constant 0 : index
    %378 = vector.load %arg2[%c3, %c0_135, %c0_136] : memref<4x16x2xf32, #tpu.memory_space<vmem>>, vector<1x16x2xf32>
    %379 = vector.shape_cast %378 : vector<1x16x2xf32> to vector<16x2xf32>
    %c3_137 = arith.constant 3 : index
    %c0_138 = arith.constant 0 : index
    %c0_139 = arith.constant 0 : index
    %380 = vector.load %arg3[%c3_137, %c0_138, %c0_139] : memref<4x2x16xf32, #tpu.memory_space<vmem>>, vector<1x2x16xf32>
    %381 = vector.shape_cast %380 : vector<1x2x16xf32> to vector<2x16xf32>
    %382 = vector.extract_strided_slice %379 {offsets = [0, 0], sizes = [16, 1], strides = [1, 1]} : vector<16x2xf32> to vector<16x1xf32>
    %383 = vector.extract_strided_slice %381 {offsets = [0, 0], sizes = [1, 16], strides = [1, 1]} : vector<2x16xf32> to vector<1x16xf32>
    %384 = vector.broadcast %382 : vector<16x1xf32> to vector<16x16xf32>
    %385 = vector.broadcast %383 : vector<1x16xf32> to vector<16x16xf32>
    %386 = arith.subf %384, %385 : vector<16x16xf32>
    %387 = vector.extract_strided_slice %379 {offsets = [0, 1], sizes = [16, 1], strides = [1, 1]} : vector<16x2xf32> to vector<16x1xf32>
    %388 = vector.extract_strided_slice %381 {offsets = [1, 0], sizes = [1, 16], strides = [1, 1]} : vector<2x16xf32> to vector<1x16xf32>
    %389 = vector.broadcast %387 : vector<16x1xf32> to vector<16x16xf32>
    %390 = vector.broadcast %388 : vector<1x16xf32> to vector<16x16xf32>
    %391 = arith.subf %389, %390 : vector<16x16xf32>
    %392 = tpu.concatenate %386, %391 in 1 : vector<16x16xf32>, vector<16x16xf32> -> vector<16x32xf32>
    %c0_140 = arith.constant 0 : index
    %c0_141 = arith.constant 0 : index
    %393 = vector.load %arg5[%c0_140, %c0_141] : memref<32x256xf32, #tpu.memory_space<vmem>>, vector<32x256xf32>
    %cst_142 = arith.constant dense<0.000000e+00> : vector<16x256xf32>
    %394 = tpu.matmul %392, %393, %cst_142 {dimension_numbers = #tpu.dot_dimension_numbers<[1], [0], [0], [1], [0, 0, 1, 1], [], []>} : vector<16x32xf32>, vector<32x256xf32>, vector<16x256xf32> -> vector<16x256xf32>
    %c0_143 = arith.constant 0 : index
    %c0_144 = arith.constant 0 : index
    %395 = vector.load %arg6[%c0_143, %c0_144] : memref<1x256xf32, #tpu.memory_space<vmem>>, vector<1x256xf32>
    %396 = vector.broadcast %395 : vector<1x256xf32> to vector<16x256xf32>
    %397 = arith.addf %394, %396 : vector<16x256xf32>
    %cst_145 = arith.constant 5.000000e-01 : f32
    %398 = vector.broadcast %cst_145 : f32 to vector<16x256xf32>
    %399 = arith.mulf %398, %397 : vector<16x256xf32>
    %cst_146 = arith.constant 4.471500e-02 : f32
    %400 = vector.broadcast %cst_146 : f32 to vector<16x256xf32>
    %401 = arith.mulf %400, %397 : vector<16x256xf32>
    %402 = arith.mulf %401, %397 : vector<16x256xf32>
    %403 = arith.mulf %402, %397 : vector<16x256xf32>
    %404 = arith.addf %397, %403 : vector<16x256xf32>
    %cst_147 = arith.constant 0.797884583 : f32
    %405 = vector.broadcast %cst_147 : f32 to vector<16x256xf32>
    %406 = arith.mulf %405, %404 : vector<16x256xf32>
    %407 = math.tanh %406 : vector<16x256xf32>
    %cst_148 = arith.constant 1.000000e+00 : f32
    %408 = vector.broadcast %cst_148 : f32 to vector<16x256xf32>
    %409 = arith.addf %408, %407 : vector<16x256xf32>
    %410 = arith.mulf %399, %409 : vector<16x256xf32>
    %c0_149 = arith.constant 0 : index
    %c0_150 = arith.constant 0 : index
    %411 = vector.load %arg7[%c0_149, %c0_150] : memref<256x64xf32, #tpu.memory_space<vmem>>, vector<256x64xf32>
    %cst_151 = arith.constant dense<0.000000e+00> : vector<16x64xf32>
    %412 = tpu.matmul %410, %411, %cst_151 {dimension_numbers = #tpu.dot_dimension_numbers<[1], [0], [0], [1], [0, 0, 1, 1], [], []>} : vector<16x256xf32>, vector<256x64xf32>, vector<16x64xf32> -> vector<16x64xf32>
    %c0_152 = arith.constant 0 : index
    %c0_153 = arith.constant 0 : index
    %413 = vector.load %arg8[%c0_152, %c0_153] : memref<1x64xf32, #tpu.memory_space<vmem>>, vector<1x64xf32>
    %414 = vector.broadcast %413 : vector<1x64xf32> to vector<16x64xf32>
    %415 = arith.addf %412, %414 : vector<16x64xf32>
    %416 = vector.extract_strided_slice %3 {offsets = [48, 0], sizes = [16, 96], strides = [1, 1]} : vector<64x96xf32> to vector<16x96xf32>
    %417 = vector.shape_cast %5 : vector<1x32xf32> to vector<1x32xf32>
    %418 = vector.broadcast %417 : vector<1x32xf32> to vector<16x32xf32>
    %419 = vector.extract_strided_slice %415 {offsets = [0, 0], sizes = [16, 16], strides = [1, 1]} : vector<16x64xf32> to vector<16x16xf32>
    %420 = vector.extract_strided_slice %416 {offsets = [0, 0], sizes = [16, 8], strides = [1, 1]} : vector<16x96xf32> to vector<16x8xf32>
    %421 = vector.extract_strided_slice %416 {offsets = [0, 32], sizes = [16, 8], strides = [1, 1]} : vector<16x96xf32> to vector<16x8xf32>
    %422 = vector.extract_strided_slice %416 {offsets = [0, 64], sizes = [16, 8], strides = [1, 1]} : vector<16x96xf32> to vector<16x8xf32>
    %cst_154 = arith.constant dense<0.000000e+00> : vector<16x16xf32>
    %423 = tpu.matmul %420, %421, %cst_154 {dimension_numbers = #tpu.dot_dimension_numbers<[1], [1], [0], [0], [0, 0, 1, 0], [], []>} : vector<16x8xf32>, vector<16x8xf32>, vector<16x16xf32> -> vector<16x16xf32>
    %424 = arith.addf %423, %419 : vector<16x16xf32>
    %cst_155 = arith.constant dense<0xFF800000> : vector<16xf32>
    %425 = vector.multi_reduction <maximumf>, %424, %cst_155 [1] : vector<16x16xf32> to vector<16xf32>
    %426 = vector.shape_cast %425 : vector<16xf32> to vector<16x1xf32>
    %427 = vector.broadcast %426 : vector<16x1xf32> to vector<16x16xf32>
    %428 = arith.subf %424, %427 : vector<16x16xf32>
    %429 = math.exp %428 : vector<16x16xf32>
    %cst_156 = arith.constant dense<0.000000e+00> : vector<16xf32>
    %430 = vector.multi_reduction <add>, %429, %cst_156 [1] : vector<16x16xf32> to vector<16xf32>
    %431 = vector.shape_cast %430 : vector<16xf32> to vector<16x1xf32>
    %cst_157 = arith.constant dense<0.000000e+00> : vector<16x8xf32>
    %432 = tpu.matmul %429, %422, %cst_157 {dimension_numbers = #tpu.dot_dimension_numbers<[1], [0], [0], [1], [0, 0, 1, 1], [], []>} : vector<16x16xf32>, vector<16x8xf32>, vector<16x8xf32> -> vector<16x8xf32>
    %433 = tpu.reciprocal %431 {approx = true} : vector<16x1xf32> -> vector<16x1xf32>
    %434 = vector.broadcast %433 : vector<16x1xf32> to vector<16x8xf32>
    %435 = arith.mulf %432, %434 : vector<16x8xf32>
    %436 = vector.extract_strided_slice %4 {offsets = [0, 0], sizes = [8, 32], strides = [1, 1]} : vector<32x32xf32> to vector<8x32xf32>
    %cst_158 = arith.constant dense<0.000000e+00> : vector<16x32xf32>
    %437 = tpu.matmul %435, %436, %cst_158 {dimension_numbers = #tpu.dot_dimension_numbers<[1], [0], [0], [1], [0, 0, 1, 1], [], []>} : vector<16x8xf32>, vector<8x32xf32>, vector<16x32xf32> -> vector<16x32xf32>
    %438 = arith.addf %418, %437 : vector<16x32xf32>
    %439 = vector.extract_strided_slice %415 {offsets = [0, 16], sizes = [16, 16], strides = [1, 1]} : vector<16x64xf32> to vector<16x16xf32>
    %440 = vector.extract_strided_slice %416 {offsets = [0, 8], sizes = [16, 8], strides = [1, 1]} : vector<16x96xf32> to vector<16x8xf32>
    %441 = vector.extract_strided_slice %416 {offsets = [0, 40], sizes = [16, 8], strides = [1, 1]} : vector<16x96xf32> to vector<16x8xf32>
    %442 = vector.extract_strided_slice %416 {offsets = [0, 72], sizes = [16, 8], strides = [1, 1]} : vector<16x96xf32> to vector<16x8xf32>
    %cst_159 = arith.constant dense<0.000000e+00> : vector<16x16xf32>
    %443 = tpu.matmul %440, %441, %cst_159 {dimension_numbers = #tpu.dot_dimension_numbers<[1], [1], [0], [0], [0, 0, 1, 0], [], []>} : vector<16x8xf32>, vector<16x8xf32>, vector<16x16xf32> -> vector<16x16xf32>
    %444 = arith.addf %443, %439 : vector<16x16xf32>
    %cst_160 = arith.constant dense<0xFF800000> : vector<16xf32>
    %445 = vector.multi_reduction <maximumf>, %444, %cst_160 [1] : vector<16x16xf32> to vector<16xf32>
    %446 = vector.shape_cast %445 : vector<16xf32> to vector<16x1xf32>
    %447 = vector.broadcast %446 : vector<16x1xf32> to vector<16x16xf32>
    %448 = arith.subf %444, %447 : vector<16x16xf32>
    %449 = math.exp %448 : vector<16x16xf32>
    %cst_161 = arith.constant dense<0.000000e+00> : vector<16xf32>
    %450 = vector.multi_reduction <add>, %449, %cst_161 [1] : vector<16x16xf32> to vector<16xf32>
    %451 = vector.shape_cast %450 : vector<16xf32> to vector<16x1xf32>
    %cst_162 = arith.constant dense<0.000000e+00> : vector<16x8xf32>
    %452 = tpu.matmul %449, %442, %cst_162 {dimension_numbers = #tpu.dot_dimension_numbers<[1], [0], [0], [1], [0, 0, 1, 1], [], []>} : vector<16x16xf32>, vector<16x8xf32>, vector<16x8xf32> -> vector<16x8xf32>
    %453 = tpu.reciprocal %451 {approx = true} : vector<16x1xf32> -> vector<16x1xf32>
    %454 = vector.broadcast %453 : vector<16x1xf32> to vector<16x8xf32>
    %455 = arith.mulf %452, %454 : vector<16x8xf32>
    %456 = vector.extract_strided_slice %4 {offsets = [8, 0], sizes = [8, 32], strides = [1, 1]} : vector<32x32xf32> to vector<8x32xf32>
    %cst_163 = arith.constant dense<0.000000e+00> : vector<16x32xf32>
    %457 = tpu.matmul %455, %456, %cst_163 {dimension_numbers = #tpu.dot_dimension_numbers<[1], [0], [0], [1], [0, 0, 1, 1], [], []>} : vector<16x8xf32>, vector<8x32xf32>, vector<16x32xf32> -> vector<16x32xf32>
    %458 = arith.addf %438, %457 : vector<16x32xf32>
    %459 = vector.extract_strided_slice %415 {offsets = [0, 32], sizes = [16, 16], strides = [1, 1]} : vector<16x64xf32> to vector<16x16xf32>
    %460 = vector.extract_strided_slice %416 {offsets = [0, 16], sizes = [16, 8], strides = [1, 1]} : vector<16x96xf32> to vector<16x8xf32>
    %461 = vector.extract_strided_slice %416 {offsets = [0, 48], sizes = [16, 8], strides = [1, 1]} : vector<16x96xf32> to vector<16x8xf32>
    %462 = vector.extract_strided_slice %416 {offsets = [0, 80], sizes = [16, 8], strides = [1, 1]} : vector<16x96xf32> to vector<16x8xf32>
    %cst_164 = arith.constant dense<0.000000e+00> : vector<16x16xf32>
    %463 = tpu.matmul %460, %461, %cst_164 {dimension_numbers = #tpu.dot_dimension_numbers<[1], [1], [0], [0], [0, 0, 1, 0], [], []>} : vector<16x8xf32>, vector<16x8xf32>, vector<16x16xf32> -> vector<16x16xf32>
    %464 = arith.addf %463, %459 : vector<16x16xf32>
    %cst_165 = arith.constant dense<0xFF800000> : vector<16xf32>
    %465 = vector.multi_reduction <maximumf>, %464, %cst_165 [1] : vector<16x16xf32> to vector<16xf32>
    %466 = vector.shape_cast %465 : vector<16xf32> to vector<16x1xf32>
    %467 = vector.broadcast %466 : vector<16x1xf32> to vector<16x16xf32>
    %468 = arith.subf %464, %467 : vector<16x16xf32>
    %469 = math.exp %468 : vector<16x16xf32>
    %cst_166 = arith.constant dense<0.000000e+00> : vector<16xf32>
    %470 = vector.multi_reduction <add>, %469, %cst_166 [1] : vector<16x16xf32> to vector<16xf32>
    %471 = vector.shape_cast %470 : vector<16xf32> to vector<16x1xf32>
    %cst_167 = arith.constant dense<0.000000e+00> : vector<16x8xf32>
    %472 = tpu.matmul %469, %462, %cst_167 {dimension_numbers = #tpu.dot_dimension_numbers<[1], [0], [0], [1], [0, 0, 1, 1], [], []>} : vector<16x16xf32>, vector<16x8xf32>, vector<16x8xf32> -> vector<16x8xf32>
    %473 = tpu.reciprocal %471 {approx = true} : vector<16x1xf32> -> vector<16x1xf32>
    %474 = vector.broadcast %473 : vector<16x1xf32> to vector<16x8xf32>
    %475 = arith.mulf %472, %474 : vector<16x8xf32>
    %476 = vector.extract_strided_slice %4 {offsets = [16, 0], sizes = [8, 32], strides = [1, 1]} : vector<32x32xf32> to vector<8x32xf32>
    %cst_168 = arith.constant dense<0.000000e+00> : vector<16x32xf32>
    %477 = tpu.matmul %475, %476, %cst_168 {dimension_numbers = #tpu.dot_dimension_numbers<[1], [0], [0], [1], [0, 0, 1, 1], [], []>} : vector<16x8xf32>, vector<8x32xf32>, vector<16x32xf32> -> vector<16x32xf32>
    %478 = arith.addf %458, %477 : vector<16x32xf32>
    %479 = vector.extract_strided_slice %415 {offsets = [0, 48], sizes = [16, 16], strides = [1, 1]} : vector<16x64xf32> to vector<16x16xf32>
    %480 = vector.extract_strided_slice %416 {offsets = [0, 24], sizes = [16, 8], strides = [1, 1]} : vector<16x96xf32> to vector<16x8xf32>
    %481 = vector.extract_strided_slice %416 {offsets = [0, 56], sizes = [16, 8], strides = [1, 1]} : vector<16x96xf32> to vector<16x8xf32>
    %482 = vector.extract_strided_slice %416 {offsets = [0, 88], sizes = [16, 8], strides = [1, 1]} : vector<16x96xf32> to vector<16x8xf32>
    %cst_169 = arith.constant dense<0.000000e+00> : vector<16x16xf32>
    %483 = tpu.matmul %480, %481, %cst_169 {dimension_numbers = #tpu.dot_dimension_numbers<[1], [1], [0], [0], [0, 0, 1, 0], [], []>} : vector<16x8xf32>, vector<16x8xf32>, vector<16x16xf32> -> vector<16x16xf32>
    %484 = arith.addf %483, %479 : vector<16x16xf32>
    %cst_170 = arith.constant dense<0xFF800000> : vector<16xf32>
    %485 = vector.multi_reduction <maximumf>, %484, %cst_170 [1] : vector<16x16xf32> to vector<16xf32>
    %486 = vector.shape_cast %485 : vector<16xf32> to vector<16x1xf32>
    %487 = vector.broadcast %486 : vector<16x1xf32> to vector<16x16xf32>
    %488 = arith.subf %484, %487 : vector<16x16xf32>
    %489 = math.exp %488 : vector<16x16xf32>
    %cst_171 = arith.constant dense<0.000000e+00> : vector<16xf32>
    %490 = vector.multi_reduction <add>, %489, %cst_171 [1] : vector<16x16xf32> to vector<16xf32>
    %491 = vector.shape_cast %490 : vector<16xf32> to vector<16x1xf32>
    %cst_172 = arith.constant dense<0.000000e+00> : vector<16x8xf32>
    %492 = tpu.matmul %489, %482, %cst_172 {dimension_numbers = #tpu.dot_dimension_numbers<[1], [0], [0], [1], [0, 0, 1, 1], [], []>} : vector<16x16xf32>, vector<16x8xf32>, vector<16x8xf32> -> vector<16x8xf32>
    %493 = tpu.reciprocal %491 {approx = true} : vector<16x1xf32> -> vector<16x1xf32>
    %494 = vector.broadcast %493 : vector<16x1xf32> to vector<16x8xf32>
    %495 = arith.mulf %492, %494 : vector<16x8xf32>
    %496 = vector.extract_strided_slice %4 {offsets = [24, 0], sizes = [8, 32], strides = [1, 1]} : vector<32x32xf32> to vector<8x32xf32>
    %cst_173 = arith.constant dense<0.000000e+00> : vector<16x32xf32>
    %497 = tpu.matmul %495, %496, %cst_173 {dimension_numbers = #tpu.dot_dimension_numbers<[1], [0], [0], [1], [0, 0, 1, 1], [], []>} : vector<16x8xf32>, vector<8x32xf32>, vector<16x32xf32> -> vector<16x32xf32>
    %498 = arith.addf %478, %497 : vector<16x32xf32>
    %c3_174 = arith.constant 3 : index
    %c0_175 = arith.constant 0 : index
    %c0_176 = arith.constant 0 : index
    %499 = vector.load %arg11[%c3_174, %c0_175, %c0_176] : memref<4x16x32xf32, #tpu.memory_space<vmem>>, vector<1x16x32xf32>
    %500 = vector.shape_cast %499 : vector<1x16x32xf32> to vector<16x32xf32>
    %501 = vector.shape_cast %498 : vector<16x32xf32> to vector<1x16x32xf32>
    tpu.vector_store %arg11[%c3_174, %c0_175, %c0_176], %501 {strides = array<i32>} : memref<4x16x32xf32, #tpu.memory_space<vmem>>, vector<1x16x32xf32>,
    return
  }
  func.func @transform_0(%arg0: i32) -> (i32, i32, i32) {
    %c0_i32 = arith.constant 0 : i32
    %c0_i32_0 = arith.constant 0 : i32
    %c0_i32_1 = arith.constant 0 : i32
    return %arg0, %c0_i32, %c0_i32_0 : i32, i32, i32
  }
  func.func @transform_1(%arg0: i32) -> (i32, i32, i32) {
    %c0_i32 = arith.constant 0 : i32
    %c0_i32_0 = arith.constant 0 : i32
    %c0_i32_1 = arith.constant 0 : i32
    return %arg0, %c0_i32, %c0_i32_0 : i32, i32, i32
  }
  func.func @transform_2(%arg0: i32) -> (i32, i32, i32) {
    %c0_i32 = arith.constant 0 : i32
    %c0_i32_0 = arith.constant 0 : i32
    %c0_i32_1 = arith.constant 0 : i32
    return %arg0, %c0_i32, %c0_i32_0 : i32, i32, i32
  }
  func.func @transform_3(%arg0: i32) -> (i32, i32) {
    %c0_i32 = arith.constant 0 : i32
    %c0_i32_0 = arith.constant 0 : i32
    %c0_i32_1 = arith.constant 0 : i32
    return %c0_i32, %c0_i32_0 : i32, i32
  }
  func.func @transform_4(%arg0: i32) -> (i32, i32) {
    %c0_i32 = arith.constant 0 : i32
    %c0_i32_0 = arith.constant 0 : i32
    %c0_i32_1 = arith.constant 0 : i32
    return %c0_i32, %c0_i32_0 : i32, i32
  }
  func.func @transform_5(%arg0: i32) -> (i32, i32) {
    %c0_i32 = arith.constant 0 : i32
    %c0_i32_0 = arith.constant 0 : i32
    %c0_i32_1 = arith.constant 0 : i32
    return %c0_i32, %c0_i32_0 : i32, i32
  }
  func.func @transform_6(%arg0: i32) -> (i32, i32) {
    %c0_i32 = arith.constant 0 : i32
    %c0_i32_0 = arith.constant 0 : i32
    %c0_i32_1 = arith.constant 0 : i32
    return %c0_i32, %c0_i32_0 : i32, i32
  }
  func.func @transform_7(%arg0: i32) -> (i32, i32) {
    %c0_i32 = arith.constant 0 : i32
    %c0_i32_0 = arith.constant 0 : i32
    %c0_i32_1 = arith.constant 0 : i32
    return %c0_i32, %c0_i32_0 : i32, i32
  }
  func.func @transform_8(%arg0: i32) -> (i32, i32) {
    %c0_i32 = arith.constant 0 : i32
    %c0_i32_0 = arith.constant 0 : i32
    %c0_i32_1 = arith.constant 0 : i32
    return %c0_i32, %c0_i32_0 : i32, i32
  }
  func.func @transform_9(%arg0: i32) -> (i32, i32) {
    %c0_i32 = arith.constant 0 : i32
    %c0_i32_0 = arith.constant 0 : i32
    %c0_i32_1 = arith.constant 0 : i32
    return %c0_i32, %c0_i32_0 : i32, i32
  }
  func.func @transform_10(%arg0: i32) -> (i32, i32, i32) {
    %c0_i32 = arith.constant 0 : i32
    %c0_i32_0 = arith.constant 0 : i32
    %c0_i32_1 = arith.constant 0 : i32
    return %arg0, %c0_i32, %c0_i32_0 : i32, i32, i32
  }
}

</mosaic_0001>

<llo_original>
// kernel: tpu_custom_call.1
$region0: #{tpu_custom_call.1}
  #allocation0 [shape = 'u32[]', space=smem, size = 0x4, offset = 0x4, fixed_abs, tag = 'smem constant byte address 0x4 - core index']
  #allocation1 [shape = 'u32[72,128]{1,0:T(1,128)}', space=vmem, size = 0x9000, scoped, tag = 'internal scratch']
  %s0 = inlined_call_operand.vmem [shape: f32[4,16,32], index: 0, kind: input, shape index: {}]
  %s1 = inlined_call_operand.vmem [shape: f32[4,16,2], index: 1, kind: input, shape index: {}]
  %s2 = inlined_call_operand.vmem [shape: f32[4,2,16], index: 2, kind: input, shape index: {}]
  %s3 = inlined_call_operand.vmem [shape: f32[32,96], index: 3, kind: input, shape index: {}]
  %s4 = inlined_call_operand.vmem [shape: f32[32,256], index: 4, kind: input, shape index: {}]
  %s5 = inlined_call_operand.vmem [shape: f32[1,256], index: 5, kind: input, shape index: {}]
  %s6 = inlined_call_operand.vmem [shape: f32[256,64], index: 6, kind: input, shape index: {}]
  %s7 = inlined_call_operand.vmem [shape: f32[1,64], index: 7, kind: input, shape index: {}]
  %s8 = inlined_call_operand.vmem [shape: f32[32,32], index: 8, kind: input, shape index: {}]
  %s9 = inlined_call_operand.vmem [shape: f32[1,32], index: 9, kind: input, shape index: {}]
  %s10 = inlined_call_operand.hbm [shape: f32[4,16,32], index: 10, kind: output, shape index: {}]
  %s11 = sld [smem:[#allocation0]]
  $region50: #{tpu_custom_call.1} parent=0
    _
  %s13 = ssub.s32 1, %s11
  %s14 = scalar_select 0, %s13, %s11
  $region1: #{tpu_custom_call.1} parent=0
    #allocation2 [shape = 'u8[32768]{0}', space=vmem, size = 0x8000, scoped, tag = 'output window, operand 0, single buffered']
    #allocation3 [shape = 's32[1]{0}', space=sflag, size = 0x4, scoped, tag = 'scoped memory for tpu_custom_call.1']
    %15 = vsyncpa [#allocation3], 0
    // Predicated region
    $region2: #{tpu_custom_call.1} parent=1 // pred_check
      _
    $region3: #{tpu_custom_call.1} parent=1 // pred_check_branch
      %17 = sbr.rel (0) target = $region5
    $region4: #{tpu_custom_call.1} parent=1 // pred_region
      _
    $region5: #{tpu_custom_call.1} parent=1 // pred_fallthru
      _
    // Predicated region
    $region6: #{tpu_custom_call.1} parent=1 // pred_check
      _
    $region7: #{tpu_custom_call.1} parent=1 // pred_check_branch
      %19 = sbr.rel (0) target = $region9
    $region8: #{tpu_custom_call.1} parent=1 // pred_region
      _
    $region9: #{tpu_custom_call.1} parent=1 // pred_fallthru
      _
    // Predicated region
    $region10: #{tpu_custom_call.1} parent=1 // pred_check
      _
    $region11: #{tpu_custom_call.1} parent=1 // pred_check_branch
      %21 = sbr.rel (0) target = $region13
    $region12: #{tpu_custom_call.1} parent=1 // pred_region
      _
    $region13: #{tpu_custom_call.1} parent=1 // pred_fallthru
      _
    // Predicated region
    $region14: #{tpu_custom_call.1} parent=1 // pred_check
      _
    $region15: #{tpu_custom_call.1} parent=1 // pred_check_branch
      %23 = sbr.rel (0) target = $region17
    $region16: #{tpu_custom_call.1} parent=1 // pred_region
      _
    $region17: #{tpu_custom_call.1} parent=1 // pred_fallthru
      _
    // Predicated region
    $region18: #{tpu_custom_call.1} parent=1 // pred_check
      _
    $region19: #{tpu_custom_call.1} parent=1 // pred_check_branch
      %25 = sbr.rel (0) target = $region21
    $region20: #{tpu_custom_call.1} parent=1 // pred_region
      _
    $region21: #{tpu_custom_call.1} parent=1 // pred_fallthru
      _
    // Predicated region
    $region22: #{tpu_custom_call.1} parent=1 // pred_check
      _
    $region23: #{tpu_custom_call.1} parent=1 // pred_check_branch
      %27 = sbr.rel (0) target = $region25
    $region24: #{tpu_custom_call.1} parent=1 // pred_region
      _
    $region25: #{tpu_custom_call.1} parent=1 // pred_fallthru
      _
    // Predicated region
    $region26: #{tpu_custom_call.1} parent=1 // pred_check
      _
    $region27: #{tpu_custom_call.1} parent=1 // pred_check_branch
      %29 = sbr.rel (0) target = $region29
    $region28: #{tpu_custom_call.1} parent=1 // pred_region
      _
    $region29: #{tpu_custom_call.1} parent=1 // pred_fallthru
      _
    // Predicated region
    $region30: #{tpu_custom_call.1} parent=1 // pred_check
      _
    $region31: #{tpu_custom_call.1} parent=1 // pred_check_branch
      %31 = sbr.rel (0) target = $region33
    $region32: #{tpu_custom_call.1} parent=1 // pred_region
      _
    $region33: #{tpu_custom_call.1} parent=1 // pred_fallthru
      _
    // Predicated region
    $region34: #{tpu_custom_call.1} parent=1 // pred_check
      _
    $region35: #{tpu_custom_call.1} parent=1 // pred_check_branch
      %33 = sbr.rel (0) target = $region37
    $region36: #{tpu_custom_call.1} parent=1 // pred_region
      _
    $region37: #{tpu_custom_call.1} parent=1 // pred_fallthru
      _
    // Predicated region
    $region38: #{tpu_custom_call.1} parent=1 // pred_check
      _
    $region39: #{tpu_custom_call.1} parent=1 // pred_check_branch
      %35 = sbr.rel (0) target = $region41
    $region40: #{tpu_custom_call.1} parent=1 // pred_region
      _
    $region41: #{tpu_custom_call.1} parent=1 // pred_fallthru
      _
    %v36 = vld [vmem:[%s0] sm:$0xff]
    %v37 = vld [vmem:[%s0 + $0x8] sm:$0xff]
    %v38 = vld [vmem:[%s0 + $0x10] sm:$0xff]
    %v39 = vld [vmem:[%s0 + $0x18] sm:$0xff]
    %v40 = vld [vmem:[%s0 + $0x20] sm:$0xff]
    %v41 = vld [vmem:[%s0 + $0x28] sm:$0xff]
    %v42 = vld [vmem:[%s0 + $0x30] sm:$0xff]
    %v43 = vld [vmem:[%s0 + $0x38] sm:$0xff]
    %v44 = vld [vmem:[%s3] sm:$0xff]
    %v45 = vld [vmem:[%s3 + $0x8] sm:$0xff]
    %v46 = vld [vmem:[%s3 + $0x10] sm:$0xff]
    %v47 = vld [vmem:[%s3 + $0x18] sm:$0xff]
    %vm48 = vcmask 261120
    %v50 = vsel %vm48, %v36, 0
    %v53 = vsel %vm48, %v37, 0
    %v56 = vsel %vm48, %v38, 0
    %v59 = vsel %vm48, %v39, 0
    %v62 = vsel %vm48, %v40, 0
    %v65 = vsel %vm48, %v41, 0
    %v68 = vsel %vm48, %v42, 0
    %v71 = vsel %vm48, %v43, 0
    %73 = vmatpush.msra.mxu0 0.0
    %74 = vmatpush.msra.mxu0 0.0
    %75 = vmatpush.msra.mxu0 0.0
    %76 = vmatpush.msra.mxu0 0.0
    %77 = vmatpush.msra.mxu0 0.0
    %78 = vmatpush.msra.mxu0 0.0
    %79 = vmatpush.msra.mxu0 0.0
    %80 = vmatpush.msra.mxu0 0.0
    %81 = vmatpush.msra.mxu0 0.0
    %82 = vmatpush.msra.mxu0 0.0
    %83 = vmatpush.msra.mxu0 0.0
    %84 = vmatpush.msra.mxu0 0.0
    %85 = vmatpush.msra.mxu0 %v47
    %86 = vmatpush.msra.mxu0 %v46
    %87 = vmatpush.msra.mxu0 %v45
    %88 = vmatpush.msra.mxu0 %v44
    %89 = vmatmul.f32.gmra.mxu0 %v50
    %v90 = vpop.f32.mrf.mxu0
    %v91 = vadd.f32 0.0, %v90
    %92 = vmatmul.f32.gmra.mxu0 %v53
    %v93 = vpop.f32.mrf.mxu0
    %v94 = vadd.f32 0.0, %v93
    %95 = vmatmul.f32.gmra.mxu0 %v56
    %v96 = vpop.f32.mrf.mxu0
    %v97 = vadd.f32 0.0, %v96
    %98 = vmatmul.f32.gmra.mxu0 %v59
    %v99 = vpop.f32.mrf.mxu0
    %v100 = vadd.f32 0.0, %v99
    %101 = vmatmul.f32.gmra.mxu0 %v62
    %v102 = vpop.f32.mrf.mxu0
    %v103 = vadd.f32 0.0, %v102
    %104 = vmatmul.f32.gmra.mxu0 %v65
    %v105 = vpop.f32.mrf.mxu0
    %v106 = vadd.f32 0.0, %v105
    %107 = vmatmul.f32.gmra.mxu0 %v68
    %v108 = vpop.f32.mrf.mxu0
    %v109 = vadd.f32 0.0, %v108
    %110 = vmatmul.f32.gmra.mxu0 %v71
    %v111 = vpop.f32.mrf.mxu0
    %v112 = vadd.f32 0.0, %v111
    %113 = vdwg.mxu0
    %v114 = vld [vmem:[%s8] sm:$0xff]
    %v115 = vld [vmem:[%s8 + $0x8] sm:$0xff]
    %v116 = vld [vmem:[%s8 + $0x10] sm:$0xff]
    %v117 = vld [vmem:[%s8 + $0x18] sm:$0xff]
    %v118 = vld [vmem:[%s9] sm:$0x1]
    %v119 = vld [vmem:[%s1] sm:$0xff]
    %v120 = vld [vmem:[%s1 + $0x8] sm:$0xff]
    %v121 = vld [vmem:[%s2] sm:$0x3]
    %123 = vset.pattern.permute.xlu0 0
    %124 = vperm.xlu0 %123, %v119
    %v125 = vpop.permute.xlu0 %124
    %128 = vset.pattern.permute.xlu0 0
    %129 = vperm.xlu0 %128, %v120
    %v130 = vpop.permute.xlu0 %129
    %v132 = vperm.slane %v121, 0
    %v133 = vsub.f32 %v125, %v132
    %v134 = vsub.f32 %v130, %v132
    %135 = vset.pattern.permute.xlu0 1
    %136 = vperm.xlu0 %135, %v119
    %v137 = vpop.permute.xlu0 %136
    %139 = vset.pattern.permute.xlu0 1
    %140 = vperm.xlu0 %139, %v120
    %v141 = vpop.permute.xlu0 %140
    %v143 = vperm.slane %v121, 1
    %v144 = vsub.f32 %v137, %v143
    %v145 = vsub.f32 %v141, %v143
    %148 = vrot.lane.b32.xlu0 %v144, 16
    %v149 = vpop.permute.xlu0 %148
    %150 = vrot.lane.b32.xlu0 %v145, 16
    %v151 = vpop.permute.xlu0 %150
    %vm154 = vcmask 130048
    %v155 = vsel %vm154, %v133, %v149
    %v156 = vsel %vm154, %v134, %v151
    %v157 = vld [vmem:[%s4] sm:$0xff]
    %v158 = vld [vmem:[%s4 + $0x8] sm:$0xff]
    %v159 = vld [vmem:[%s4 + $0x10] sm:$0xff]
    %v160 = vld [vmem:[%s4 + $0x18] sm:$0xff]
    %v161 = vld [vmem:[%s4 + $0x20] sm:$0xff]
    %v162 = vld [vmem:[%s4 + $0x28] sm:$0xff]
    %v163 = vld [vmem:[%s4 + $0x30] sm:$0xff]
    %v164 = vld [vmem:[%s4 + $0x38] sm:$0xff]
    %v165 = vld [vmem:[%s5] sm:$0x3]
    %v167 = vperm.slane %v165, 0
    %v168 = vperm.slane %v165, 1
    %v172 = vsel %vm48, %v155, 0
    %v175 = vsel %vm48, %v156, 0
    %177 = vmatpush.msra.mxu0 0.0
    %178 = vmatpush.msra.mxu0 0.0
    %179 = vmatpush.msra.mxu0 0.0
    %180 = vmatpush.msra.mxu0 0.0
    %181 = vmatpush.msra.mxu0 0.0
    %182 = vmatpush.msra.mxu0 0.0
    %183 = vmatpush.msra.mxu0 0.0
    %184 = vmatpush.msra.mxu0 0.0
    %185 = vmatpush.msra.mxu0 0.0
    %186 = vmatpush.msra.mxu0 0.0
    %187 = vmatpush.msra.mxu0 0.0
    %188 = vmatpush.msra.mxu0 0.0
    %189 = vmatpush.msra.mxu0 %v163
    %190 = vmatpush.msra.mxu0 %v161
    %191 = vmatpush.msra.mxu0 %v159
    %192 = vmatpush.msra.mxu0 %v157
    %193 = vmatmul.f32.gmra.mxu0 %v172
    %v194 = vpop.f32.mrf.mxu0
    %v195 = vadd.f32 %v167, %v194
    %196 = vmatmul.f32.gmra.mxu0 %v175
    %v197 = vpop.f32.mrf.mxu0
    %v198 = vadd.f32 %v167, %v197
    %199 = vdwg.mxu0
    %200 = vmatpush.msra.mxu0 0.0
    %201 = vmatpush.msra.mxu0 0.0
    %202 = vmatpush.msra.mxu0 0.0
    %203 = vmatpush.msra.mxu0 0.0
    %204 = vmatpush.msra.mxu0 0.0
    %205 = vmatpush.msra.mxu0 0.0
    %206 = vmatpush.msra.mxu0 0.0
    %207 = vmatpush.msra.mxu0 0.0
    %208 = vmatpush.msra.mxu0 0.0
    %209 = vmatpush.msra.mxu0 0.0
    %210 = vmatpush.msra.mxu0 0.0
    %211 = vmatpush.msra.mxu0 0.0
    %212 = vmatpush.msra.mxu0 %v164
    %213 = vmatpush.msra.mxu0 %v162
    %214 = vmatpush.msra.mxu0 %v160
    %215 = vmatpush.msra.mxu0 %v158
    %216 = vmatmul.f32.gmra.mxu0 %v172
    %v217 = vpop.f32.mrf.mxu0
    %v218 = vadd.f32 %v168, %v217
    %219 = vmatmul.f32.gmra.mxu0 %v175
    %v220 = vpop.f32.mrf.mxu0
    %v221 = vadd.f32 %v168, %v220
    %222 = vdwg.mxu0
    %v223 = vmul.f32 %v195, 0.5
    %v224 = vmul.f32 %v218, 0.5
    %v225 = vmul.f32 %v198, 0.5
    %v226 = vmul.f32 %v221, 0.5
    %v227 = vmul.f32 %v195, 0.044715
    %v228 = vmul.f32 %v218, 0.044715
    %v229 = vmul.f32 %v198, 0.044715
    %v230 = vmul.f32 %v221, 0.044715
    %v231 = vmul.f32 %v227, %v195
    %v232 = vmul.f32 %v228, %v218
    %v233 = vmul.f32 %v229, %v198
    %v234 = vmul.f32 %v230, %v221
    %v235 = vmul.f32 %v231, %v195
    %v236 = vmul.f32 %v232, %v218
    %v237 = vmul.f32 %v233, %v198
    %v238 = vmul.f32 %v234, %v221
    %v239 = vadd.f32 %v195, %v235
    %v240 = vadd.f32 %v218, %v236
    %v241 = vadd.f32 %v198, %v237
    %v242 = vadd.f32 %v221, %v238
    %v243 = vmul.f32 %v239, 0.7978846
    %v244 = vmul.f32 %v240, 0.7978846
    %v245 = vmul.f32 %v241, 0.7978846
    %v246 = vmul.f32 %v242, 0.7978846
    %v247 = vtanh.pop %v243
    %v248 = vtanh.pop %v244
    %v249 = vtanh.pop %v245
    %v250 = vtanh.pop %v246
    %v251 = vadd.f32 %v247, 1.0
    %v252 = vadd.f32 %v248, 1.0
    %v253 = vadd.f32 %v249, 1.0
    %v254 = vadd.f32 %v250, 1.0
    %v255 = vmul.f32 %v223, %v251
    %v256 = vmul.f32 %v224, %v252
    %v257 = vmul.f32 %v225, %v253
    %v258 = vmul.f32 %v226, %v254
    %v259 = vld [vmem:[%s6] sm:$0xff]
    %v260 = vld [vmem:[%s6 + $0x8] sm:$0xff]
    %v261 = vld [vmem:[%s6 + $0x10] sm:$0xff]
    %v262 = vld [vmem:[%s6 + $0x18] sm:$0xff]
    %v263 = vld [vmem:[%s6 + $0x20] sm:$0xff]
    %v264 = vld [vmem:[%s6 + $0x28] sm:$0xff]
    %v265 = vld [vmem:[%s6 + $0x30] sm:$0xff]
    %v266 = vld [vmem:[%s6 + $0x38] sm:$0xff]
    %v267 = vld [vmem:[%s6 + $0x40] sm:$0xff]
    %v268 = vld [vmem:[%s6 + $0x48] sm:$0xff]
    %v269 = vld [vmem:[%s6 + $0x50] sm:$0xff]
    %v270 = vld [vmem:[%s6 + $0x58] sm:$0xff]
    %v271 = vld [vmem:[%s6 + $0x60] sm:$0xff]
    %v272 = vld [vmem:[%s6 + $0x68] sm:$0xff]
    %v273 = vld [vmem:[%s6 + $0x70] sm:$0xff]
    %v274 = vld [vmem:[%s6 + $0x78] sm:$0xff]
    %v275 = vld [vmem:[%s6 + $0x80] sm:$0xff]
    %v276 = vld [vmem:[%s6 + $0x88] sm:$0xff]
    %v277 = vld [vmem:[%s6 + $0x90] sm:$0xff]
    %v278 = vld [vmem:[%s6 + $0x98] sm:$0xff]
    %v279 = vld [vmem:[%s6 + $0xa0] sm:$0xff]
    %v280 = vld [vmem:[%s6 + $0xa8] sm:$0xff]
    %v281 = vld [vmem:[%s6 + $0xb0] sm:$0xff]
    %v282 = vld [vmem:[%s6 + $0xb8] sm:$0xff]
    %v283 = vld [vmem:[%s6 + $0xc0] sm:$0xff]
    %v284 = vld [vmem:[%s6 + $0xc8] sm:$0xff]
    %v285 = vld [vmem:[%s6 + $0xd0] sm:$0xff]
    %v286 = vld [vmem:[%s6 + $0xd8] sm:$0xff]
    %v287 = vld [vmem:[%s6 + $0xe0] sm:$0xff]
    %v288 = vld [vmem:[%s6 + $0xe8] sm:$0xff]
    %v289 = vld [vmem:[%s6 + $0xf0] sm:$0xff]
    %v290 = vld [vmem:[%s6 + $0xf8] sm:$0xff]
    %v291 = vld [vmem:[%s7] sm:$0x1]
    %v293 = vperm.slane %v291, 0
    %295 = vmatpush.msra.mxu0 %v274
    %296 = vmatpush.msra.mxu0 %v273
    %297 = vmatpush.msra.mxu0 %v272
    %298 = vmatpush.msra.mxu0 %v271
    %299 = vmatpush.msra.mxu0 %v270
    %300 = vmatpush.msra.mxu0 %v269
    %301 = vmatpush.msra.mxu0 %v268
    %302 = vmatpush.msra.mxu0 %v267
    %303 = vmatpush.msra.mxu0 %v266
    %304 = vmatpush.msra.mxu0 %v265
    %305 = vmatpush.msra.mxu0 %v264
    %306 = vmatpush.msra.mxu0 %v263
    %307 = vmatpush.msra.mxu0 %v262
    %308 = vmatpush.msra.mxu0 %v261
    %309 = vmatpush.msra.mxu0 %v260
    %310 = vmatpush.msra.mxu0 %v259
    %311 = vmatmul.f32.gmra.mxu0 %v255
    %v312 = vpop.f32.mrf.mxu0
    %v313 = vadd.f32 %v293, %v312
    %314 = vmatmul.f32.gmra.mxu0 %v257
    %v315 = vpop.f32.mrf.mxu0
    %v316 = vadd.f32 %v293, %v315
    %317 = vdwg.mxu0
    %318 = vmatpush.msra.mxu0 %v290
    %319 = vmatpush.msra.mxu0 %v289
    %320 = vmatpush.msra.mxu0 %v288
    %321 = vmatpush.msra.mxu0 %v287
    %322 = vmatpush.msra.mxu0 %v286
    %323 = vmatpush.msra.mxu0 %v285
    %324 = vmatpush.msra.mxu0 %v284
    %325 = vmatpush.msra.mxu0 %v283
    %326 = vmatpush.msra.mxu0 %v282
    %327 = vmatpush.msra.mxu0 %v281
    %328 = vmatpush.msra.mxu0 %v280
    %329 = vmatpush.msra.mxu0 %v279
    %330 = vmatpush.msra.mxu0 %v278
    %331 = vmatpush.msra.mxu0 %v277
    %332 = vmatpush.msra.mxu0 %v276
    %333 = vmatpush.msra.mxu0 %v275
    %334 = vmatmul.f32.gmra.mxu0 %v256
    %v335 = vpop.f32.mrf.mxu0
    %v336 = vadd.f32 %v313, %v335
    %337 = vmatmul.f32.gmra.mxu0 %v258
    %v338 = vpop.f32.mrf.mxu0
    %v339 = vadd.f32 %v316, %v338
    %340 = vdwg.mxu0
    %v342 = vperm.slane %v118, 0
    %346 = vrot.lane.b32.xlu0 %v91, 96
    %v347 = vpop.permute.xlu0 %346
    %348 = vrot.lane.b32.xlu0 %v94, 96
    %v349 = vpop.permute.xlu0 %348
    %vm350 = vcmask 64512
    %v351 = vsel %vm350, %v91, 0
    %v353 = vsel %vm350, %v94, 0
    %v355 = vsel %vm350, %v347, 0
    %v357 = vsel %vm350, %v349, 0
    %359 = vmatpush.xpose.msra.mxu0 0.0
    %360 = vmatpush.xpose.msra.mxu0 0.0
    %361 = vmatpush.xpose.msra.mxu0 0.0
    %362 = vmatpush.xpose.msra.mxu0 0.0
    %363 = vmatpush.xpose.msra.mxu0 0.0
    %364 = vmatpush.xpose.msra.mxu0 0.0
    %365 = vmatpush.xpose.msra.mxu0 0.0
    %366 = vmatpush.xpose.msra.mxu0 0.0
    %367 = vmatpush.xpose.msra.mxu0 0.0
    %368 = vmatpush.xpose.msra.mxu0 0.0
    %369 = vmatpush.xpose.msra.mxu0 0.0
    %370 = vmatpush.xpose.msra.mxu0 0.0
    %371 = vmatpush.xpose.msra.mxu0 0.0
    %372 = vmatpush.xpose.msra.mxu0 0.0
    %373 = vmatpush.xpose.msra.mxu0 %v357
    %374 = vmatpush.xpose.msra.mxu0 %v355
    %375 = vmatmul.f32.gmra.mxu0 %v351
    %v376 = vpop.f32.mrf.mxu0
    %v377 = vadd.f32 %v336, %v376
    %378 = vmatmul.f32.gmra.mxu0 %v353
    %v379 = vpop.f32.mrf.mxu0
    %v380 = vadd.f32 %v339, %v379
    %381 = vdwg.mxu0
    %v382 = vsel %vm154, %v377, -inf
    %383 = vmax.xlane.f32.xlu0 %v382
    %v384 = vpop.xlane.xlu0 %383
    %v385 = vsel %vm154, %v380, -inf
    %386 = vmax.xlane.f32.xlu0 %v385
    %v387 = vpop.xlane.xlu0 %386
    %v388 = vsub.f32 %v377, %v384
    %v389 = vsub.f32 %v380, %v387
    %v390 = vmul.f32 %v388, 1.442695
    %v391 = vpow.pop %v390
    %v392 = vmul.f32 %v389, 1.442695
    %v393 = vpow.pop %v392
    %v394 = vsel %vm154, %v391, 0.0
    %395 = vadd.xlane.f32.xlu0 %v394
    %v396 = vpop.xlane.xlu0 %395
    %v397 = vsel %vm154, %v393, 0.0
    %398 = vadd.xlane.f32.xlu0 %v397
    %v399 = vpop.xlane.xlu0 %398
    %400 = vrot.lane.b32.xlu0 %v91, 64
    %v401 = vpop.permute.xlu0 %400
    %402 = vrot.lane.b32.xlu0 %v94, 64
    %v403 = vpop.permute.xlu0 %402
    %v407 = vsel %vm154, %v391, 0
    %v410 = vsel %vm154, %v393, 0
    %412 = vmatpush.msra.mxu0 0.0
    %413 = vmatpush.msra.mxu0 0.0
    %414 = vmatpush.msra.mxu0 0.0
    %415 = vmatpush.msra.mxu0 0.0
    %416 = vmatpush.msra.mxu0 0.0
    %417 = vmatpush.msra.mxu0 0.0
    %418 = vmatpush.msra.mxu0 0.0
    %419 = vmatpush.msra.mxu0 0.0
    %420 = vmatpush.msra.mxu0 0.0
    %421 = vmatpush.msra.mxu0 0.0
    %422 = vmatpush.msra.mxu0 0.0
    %423 = vmatpush.msra.mxu0 0.0
    %424 = vmatpush.msra.mxu0 0.0
    %425 = vmatpush.msra.mxu0 0.0
    %426 = vmatpush.msra.mxu0 %v403
    %427 = vmatpush.msra.mxu0 %v401
    %428 = vmatmul.f32.gmra.mxu0 %v407
    %v429 = vpop.f32.mrf.mxu0
    %v430 = vadd.f32 0.0, %v429
    %431 = vmatmul.f32.gmra.mxu0 %v410
    %v432 = vpop.f32.mrf.mxu0
    %v433 = vadd.f32 0.0, %v432
    %434 = vdwg.mxu0
    %v435 = vrcp.pop %v396
    %v436 = vrcp.pop %v399
    %v437 = vmul.f32 %v430, %v435
    %v438 = vmul.f32 %v433, %v436
    %v440 = vsel %vm350, %v437, 0
    %v443 = vsel %vm350, %v438, 0
    %445 = vmatpush.msra.mxu0 0.0
    %446 = vmatpush.msra.mxu0 0.0
    %447 = vmatpush.msra.mxu0 0.0
    %448 = vmatpush.msra.mxu0 0.0
    %449 = vmatpush.msra.mxu0 0.0
    %450 = vmatpush.msra.mxu0 0.0
    %451 = vmatpush.msra.mxu0 0.0
    %452 = vmatpush.msra.mxu0 0.0
    %453 = vmatpush.msra.mxu0 0.0
    %454 = vmatpush.msra.mxu0 0.0
    %455 = vmatpush.msra.mxu0 0.0
    %456 = vmatpush.msra.mxu0 0.0
    %457 = vmatpush.msra.mxu0 0.0
    %458 = vmatpush.msra.mxu0 0.0
    %459 = vmatpush.msra.mxu0 0.0
    %460 = vmatpush.msra.mxu0 %v114
    %461 = vmatmul.f32.gmra.mxu0 %v440
    %v462 = vpop.f32.mrf.mxu0
    %v463 = vadd.f32 0.0, %v462
    %464 = vmatmul.f32.gmra.mxu0 %v443
    %v465 = vpop.f32.mrf.mxu0
    %v466 = vadd.f32 0.0, %v465
    %467 = vdwg.mxu0
    %v468 = vadd.f32 %v342, %v463
    %v469 = vadd.f32 %v342, %v466
    %470 = vrot.lane.b32.xlu0 %v91, 120
    %v471 = vpop.permute.xlu0 %470
    %472 = vrot.lane.b32.xlu0 %v94, 120
    %v473 = vpop.permute.xlu0 %472
    %474 = vrot.lane.b32.xlu0 %v91, 88
    %v475 = vpop.permute.xlu0 %474
    %476 = vrot.lane.b32.xlu0 %v94, 88
    %v477 = vpop.permute.xlu0 %476
    %480 = vrot.lane.b32.xlu0 %v336, 112
    %v481 = vpop.permute.xlu0 %480
    %482 = vrot.lane.b32.xlu0 %v339, 112
    %v483 = vpop.permute.xlu0 %482
    %v486 = vsel %vm350, %v471, 0
    %v488 = vsel %vm350, %v473, 0
    %v490 = vsel %vm350, %v475, 0
    %v492 = vsel %vm350, %v477, 0
    %494 = vmatpush.xpose.msra.mxu0 0.0
    %495 = vmatpush.xpose.msra.mxu0 0.0
    %496 = vmatpush.xpose.msra.mxu0 0.0
    %497 = vmatpush.xpose.msra.mxu0 0.0
    %498 = vmatpush.xpose.msra.mxu0 0.0
    %499 = vmatpush.xpose.msra.mxu0 0.0
    %500 = vmatpush.xpose.msra.mxu0 0.0
    %501 = vmatpush.xpose.msra.mxu0 0.0
    %502 = vmatpush.xpose.msra.mxu0 0.0
    %503 = vmatpush.xpose.msra.mxu0 0.0
    %504 = vmatpush.xpose.msra.mxu0 0.0
    %505 = vmatpush.xpose.msra.mxu0 0.0
    %506 = vmatpush.xpose.msra.mxu0 0.0
    %507 = vmatpush.xpose.msra.mxu0 0.0
    %508 = vmatpush.xpose.msra.mxu0 %v492
    %509 = vmatpush.xpose.msra.mxu0 %v490
    %510 = vmatmul.f32.gmra.mxu0 %v486
    %v511 = vpop.f32.mrf.mxu0
    %v512 = vadd.f32 %v481, %v511
    %513 = vmatmul.f32.gmra.mxu0 %v488
    %v514 = vpop.f32.mrf.mxu0
    %v515 = vadd.f32 %v483, %v514
    %516 = vdwg.mxu0
    %v517 = vsel %vm154, %v512, -inf
    %518 = vmax.xlane.f32.xlu0 %v517
    %v519 = vpop.xlane.xlu0 %518
    %v520 = vsel %vm154, %v515, -inf
    %521 = vmax.xlane.f32.xlu0 %v520
    %v522 = vpop.xlane.xlu0 %521
    %v523 = vsub.f32 %v512, %v519
    %v524 = vsub.f32 %v515, %v522
    %v525 = vmul.f32 %v523, 1.442695
    %v526 = vpow.pop %v525
    %v527 = vmul.f32 %v524, 1.442695
    %v528 = vpow.pop %v527
    %v529 = vsel %vm154, %v526, 0.0
    %530 = vadd.xlane.f32.xlu0 %v529
    %v531 = vpop.xlane.xlu0 %530
    %v532 = vsel %vm154, %v528, 0.0
    %533 = vadd.xlane.f32.xlu0 %v532
    %v534 = vpop.xlane.xlu0 %533
    %535 = vrot.lane.b32.xlu0 %v91, 56
    %v536 = vpop.permute.xlu0 %535
    %537 = vrot.lane.b32.xlu0 %v94, 56
    %v538 = vpop.permute.xlu0 %537
    %v542 = vsel %vm154, %v526, 0
    %v545 = vsel %vm154, %v528, 0
    %547 = vmatpush.msra.mxu0 0.0
    %548 = vmatpush.msra.mxu0 0.0
    %549 = vmatpush.msra.mxu0 0.0
    %550 = vmatpush.msra.mxu0 0.0
    %551 = vmatpush.msra.mxu0 0.0
    %552 = vmatpush.msra.mxu0 0.0
    %553 = vmatpush.msra.mxu0 0.0
    %554 = vmatpush.msra.mxu0 0.0
    %555 = vmatpush.msra.mxu0 0.0
    %556 = vmatpush.msra.mxu0 0.0
    %557 = vmatpush.msra.mxu0 0.0
    %558 = vmatpush.msra.mxu0 0.0
    %559 = vmatpush.msra.mxu0 0.0
    %560 = vmatpush.msra.mxu0 0.0
    %561 = vmatpush.msra.mxu0 %v538
    %562 = vmatpush.msra.mxu0 %v536
    %563 = vmatmul.f32.gmra.mxu0 %v542
    %v564 = vpop.f32.mrf.mxu0
    %v565 = vadd.f32 0.0, %v564
    %566 = vmatmul.f32.gmra.mxu0 %v545
    %v567 = vpop.f32.mrf.mxu0
    %v568 = vadd.f32 0.0, %v567
    %569 = vdwg.mxu0
    %v570 = vrcp.pop %v531
    %v571 = vrcp.pop %v534
    %v572 = vmul.f32 %v565, %v570
    %v573 = vmul.f32 %v568, %v571
    %v575 = vsel %vm350, %v572, 0
    %v578 = vsel %vm350, %v573, 0
    %580 = vmatpush.msra.mxu0 0.0
    %581 = vmatpush.msra.mxu0 0.0
    %582 = vmatpush.msra.mxu0 0.0
    %583 = vmatpush.msra.mxu0 0.0
    %584 = vmatpush.msra.mxu0 0.0
    %585 = vmatpush.msra.mxu0 0.0
    %586 = vmatpush.msra.mxu0 0.0
    %587 = vmatpush.msra.mxu0 0.0
    %588 = vmatpush.msra.mxu0 0.0
    %589 = vmatpush.msra.mxu0 0.0
    %590 = vmatpush.msra.mxu0 0.0
    %591 = vmatpush.msra.mxu0 0.0
    %592 = vmatpush.msra.mxu0 0.0
    %593 = vmatpush.msra.mxu0 0.0
    %594 = vmatpush.msra.mxu0 0.0
    %595 = vmatpush.msra.mxu0 %v115
    %596 = vmatmul.f32.gmra.mxu0 %v575
    %v597 = vpop.f32.mrf.mxu0
    %v598 = vadd.f32 0.0, %v597
    %599 = vmatmul.f32.gmra.mxu0 %v578
    %v600 = vpop.f32.mrf.mxu0
    %v601 = vadd.f32 0.0, %v600
    %602 = vdwg.mxu0
    %v603 = vadd.f32 %v468, %v598
    %v604 = vadd.f32 %v469, %v601
    %605 = vrot.lane.b32.xlu0 %v91, 112
    %v606 = vpop.permute.xlu0 %605
    %607 = vrot.lane.b32.xlu0 %v94, 112
    %v608 = vpop.permute.xlu0 %607
    %609 = vrot.lane.b32.xlu0 %v91, 80
    %v610 = vpop.permute.xlu0 %609
    %611 = vrot.lane.b32.xlu0 %v94, 80
    %v612 = vpop.permute.xlu0 %611
    %613 = vrot.lane.b32.xlu0 %v336, 96
    %v614 = vpop.permute.xlu0 %613
    %615 = vrot.lane.b32.xlu0 %v339, 96
    %v616 = vpop.permute.xlu0 %615
    %v619 = vsel %vm350, %v606, 0
    %v621 = vsel %vm350, %v608, 0
    %v623 = vsel %vm350, %v610, 0
    %v625 = vsel %vm350, %v612, 0
    %627 = vmatpush.xpose.msra.mxu0 0.0
    %628 = vmatpush.xpose.msra.mxu0 0.0
    %629 = vmatpush.xpose.msra.mxu0 0.0
    %630 = vmatpush.xpose.msra.mxu0 0.0
    %631 = vmatpush.xpose.msra.mxu0 0.0
    %632 = vmatpush.xpose.msra.mxu0 0.0
    %633 = vmatpush.xpose.msra.mxu0 0.0
    %634 = vmatpush.xpose.msra.mxu0 0.0
    %635 = vmatpush.xpose.msra.mxu0 0.0
    %636 = vmatpush.xpose.msra.mxu0 0.0
    %637 = vmatpush.xpose.msra.mxu0 0.0
    %638 = vmatpush.xpose.msra.mxu0 0.0
    %639 = vmatpush.xpose.msra.mxu0 0.0
    %640 = vmatpush.xpose.msra.mxu0 0.0
    %641 = vmatpush.xpose.msra.mxu0 %v625
    %642 = vmatpush.xpose.msra.mxu0 %v623
    %643 = vmatmul.f32.gmra.mxu0 %v619
    %v644 = vpop.f32.mrf.mxu0
    %v645 = vadd.f32 %v614, %v644
    %646 = vmatmul.f32.gmra.mxu0 %v621
    %v647 = vpop.f32.mrf.mxu0
    %v648 = vadd.f32 %v616, %v647
    %649 = vdwg.mxu0
    %v650 = vsel %vm154, %v645, -inf
    %651 = vmax.xlane.f32.xlu0 %v650
    %v652 = vpop.xlane.xlu0 %651
    %v653 = vsel %vm154, %v648, -inf
    %654 = vmax.xlane.f32.xlu0 %v653
    %v655 = vpop.xlane.xlu0 %654
    %v656 = vsub.f32 %v645, %v652
    %v657 = vsub.f32 %v648, %v655
    %v658 = vmul.f32 %v656, 1.442695
    %v659 = vpow.pop %v658
    %v660 = vmul.f32 %v657, 1.442695
    %v661 = vpow.pop %v660
    %v662 = vsel %vm154, %v659, 0.0
    %663 = vadd.xlane.f32.xlu0 %v662
    %v664 = vpop.xlane.xlu0 %663
    %v665 = vsel %vm154, %v661, 0.0
    %666 = vadd.xlane.f32.xlu0 %v665
    %v667 = vpop.xlane.xlu0 %666
    %668 = vrot.lane.b32.xlu0 %v91, 48
    %v669 = vpop.permute.xlu0 %668
    %670 = vrot.lane.b32.xlu0 %v94, 48
    %v671 = vpop.permute.xlu0 %670
    %v675 = vsel %vm154, %v659, 0
    %v678 = vsel %vm154, %v661, 0
    %680 = vmatpush.msra.mxu0 0.0
    %681 = vmatpush.msra.mxu0 0.0
    %682 = vmatpush.msra.mxu0 0.0
    %683 = vmatpush.msra.mxu0 0.0
    %684 = vmatpush.msra.mxu0 0.0
    %685 = vmatpush.msra.mxu0 0.0
    %686 = vmatpush.msra.mxu0 0.0
    %687 = vmatpush.msra.mxu0 0.0
    %688 = vmatpush.msra.mxu0 0.0
    %689 = vmatpush.msra.mxu0 0.0
    %690 = vmatpush.msra.mxu0 0.0
    %691 = vmatpush.msra.mxu0 0.0
    %692 = vmatpush.msra.mxu0 0.0
    %693 = vmatpush.msra.mxu0 0.0
    %694 = vmatpush.msra.mxu0 %v671
    %695 = vmatpush.msra.mxu0 %v669
    %696 = vmatmul.f32.gmra.mxu0 %v675
    %v697 = vpop.f32.mrf.mxu0
    %v698 = vadd.f32 0.0, %v697
    %699 = vmatmul.f32.gmra.mxu0 %v678
    %v700 = vpop.f32.mrf.mxu0
    %v701 = vadd.f32 0.0, %v700
    %702 = vdwg.mxu0
    %v703 = vrcp.pop %v664
    %v704 = vrcp.pop %v667
    %v705 = vmul.f32 %v698, %v703
    %v706 = vmul.f32 %v701, %v704
    %v708 = vsel %vm350, %v705, 0
    %v711 = vsel %vm350, %v706, 0
    %713 = vmatpush.msra.mxu0 0.0
    %714 = vmatpush.msra.mxu0 0.0
    %715 = vmatpush.msra.mxu0 0.0
    %716 = vmatpush.msra.mxu0 0.0
    %717 = vmatpush.msra.mxu0 0.0
    %718 = vmatpush.msra.mxu0 0.0
    %719 = vmatpush.msra.mxu0 0.0
    %720 = vmatpush.msra.mxu0 0.0
    %721 = vmatpush.msra.mxu0 0.0
    %722 = vmatpush.msra.mxu0 0.0
    %723 = vmatpush.msra.mxu0 0.0
    %724 = vmatpush.msra.mxu0 0.0
    %725 = vmatpush.msra.mxu0 0.0
    %726 = vmatpush.msra.mxu0 0.0
    %727 = vmatpush.msra.mxu0 0.0
    %728 = vmatpush.msra.mxu0 %v116
    %729 = vmatmul.f32.gmra.mxu0 %v708
    %v730 = vpop.f32.mrf.mxu0
    %v731 = vadd.f32 0.0, %v730
    %732 = vmatmul.f32.gmra.mxu0 %v711
    %v733 = vpop.f32.mrf.mxu0
    %v734 = vadd.f32 0.0, %v733
    %735 = vdwg.mxu0
    %v736 = vadd.f32 %v603, %v731
    %v737 = vadd.f32 %v604, %v734
    %738 = vrot.lane.b32.xlu0 %v91, 104
    %v739 = vpop.permute.xlu0 %738
    %740 = vrot.lane.b32.xlu0 %v94, 104
    %v741 = vpop.permute.xlu0 %740
    %742 = vrot.lane.b32.xlu0 %v91, 72
    %v743 = vpop.permute.xlu0 %742
    %744 = vrot.lane.b32.xlu0 %v94, 72
    %v745 = vpop.permute.xlu0 %744
    %746 = vrot.lane.b32.xlu0 %v336, 80
    %v747 = vpop.permute.xlu0 %746
    %748 = vrot.lane.b32.xlu0 %v339, 80
    %v749 = vpop.permute.xlu0 %748
    %v752 = vsel %vm350, %v739, 0
    %v754 = vsel %vm350, %v741, 0
    %v756 = vsel %vm350, %v743, 0
    %v758 = vsel %vm350, %v745, 0
    %760 = vmatpush.xpose.msra.mxu0 0.0
    %761 = vmatpush.xpose.msra.mxu0 0.0
    %762 = vmatpush.xpose.msra.mxu0 0.0
    %763 = vmatpush.xpose.msra.mxu0 0.0
    %764 = vmatpush.xpose.msra.mxu0 0.0
    %765 = vmatpush.xpose.msra.mxu0 0.0
    %766 = vmatpush.xpose.msra.mxu0 0.0
    %767 = vmatpush.xpose.msra.mxu0 0.0
    %768 = vmatpush.xpose.msra.mxu0 0.0
    %769 = vmatpush.xpose.msra.mxu0 0.0
    %770 = vmatpush.xpose.msra.mxu0 0.0
    %771 = vmatpush.xpose.msra.mxu0 0.0
    %772 = vmatpush.xpose.msra.mxu0 0.0
    %773 = vmatpush.xpose.msra.mxu0 0.0
    %774 = vmatpush.xpose.msra.mxu0 %v758
    %775 = vmatpush.xpose.msra.mxu0 %v756
    %776 = vmatmul.f32.gmra.mxu0 %v752
    %v777 = vpop.f32.mrf.mxu0
    %v778 = vadd.f32 %v747, %v777
    %779 = vmatmul.f32.gmra.mxu0 %v754
    %v780 = vpop.f32.mrf.mxu0
    %v781 = vadd.f32 %v749, %v780
    %782 = vdwg.mxu0
    %v783 = vsel %vm154, %v778, -inf
    %784 = vmax.xlane.f32.xlu0 %v783
    %v785 = vpop.xlane.xlu0 %784
    %v786 = vsel %vm154, %v781, -inf
    %787 = vmax.xlane.f32.xlu0 %v786
    %v788 = vpop.xlane.xlu0 %787
    %v789 = vsub.f32 %v778, %v785
    %v790 = vsub.f32 %v781, %v788
    %v791 = vmul.f32 %v789, 1.442695
    %v792 = vpow.pop %v791
    %v793 = vmul.f32 %v790, 1.442695
    %v794 = vpow.pop %v793
    %v795 = vsel %vm154, %v792, 0.0
    %796 = vadd.xlane.f32.xlu0 %v795
    %v797 = vpop.xlane.xlu0 %796
    %v798 = vsel %vm154, %v794, 0.0
    %799 = vadd.xlane.f32.xlu0 %v798
    %v800 = vpop.xlane.xlu0 %799
    %801 = vrot.lane.b32.xlu0 %v91, 40
    %v802 = vpop.permute.xlu0 %801
    %803 = vrot.lane.b32.xlu0 %v94, 40
    %v804 = vpop.permute.xlu0 %803
    %v808 = vsel %vm154, %v792, 0
    %v811 = vsel %vm154, %v794, 0
    %813 = vmatpush.msra.mxu0 0.0
    %814 = vmatpush.msra.mxu0 0.0
    %815 = vmatpush.msra.mxu0 0.0
    %816 = vmatpush.msra.mxu0 0.0
    %817 = vmatpush.msra.mxu0 0.0
    %818 = vmatpush.msra.mxu0 0.0
    %819 = vmatpush.msra.mxu0 0.0
    %820 = vmatpush.msra.mxu0 0.0
    %821 = vmatpush.msra.mxu0 0.0
    %822 = vmatpush.msra.mxu0 0.0
    %823 = vmatpush.msra.mxu0 0.0
    %824 = vmatpush.msra.mxu0 0.0
    %825 = vmatpush.msra.mxu0 0.0
    %826 = vmatpush.msra.mxu0 0.0
    %827 = vmatpush.msra.mxu0 %v804
    %828 = vmatpush.msra.mxu0 %v802
    %829 = vmatmul.f32.gmra.mxu0 %v808
    %v830 = vpop.f32.mrf.mxu0
    %v831 = vadd.f32 0.0, %v830
    %832 = vmatmul.f32.gmra.mxu0 %v811
    %v833 = vpop.f32.mrf.mxu0
    %v834 = vadd.f32 0.0, %v833
    %835 = vdwg.mxu0
    %v836 = vrcp.pop %v797
    %v837 = vrcp.pop %v800
    %v838 = vmul.f32 %v831, %v836
    %v839 = vmul.f32 %v834, %v837
    %v841 = vsel %vm350, %v838, 0
    %v844 = vsel %vm350, %v839, 0
    %846 = vmatpush.msra.mxu0 0.0
    %847 = vmatpush.msra.mxu0 0.0
    %848 = vmatpush.msra.mxu0 0.0
    %849 = vmatpush.msra.mxu0 0.0
    %850 = vmatpush.msra.mxu0 0.0
    %851 = vmatpush.msra.mxu0 0.0
    %852 = vmatpush.msra.mxu0 0.0
    %853 = vmatpush.msra.mxu0 0.0
    %854 = vmatpush.msra.mxu0 0.0
    %855 = vmatpush.msra.mxu0 0.0
    %856 = vmatpush.msra.mxu0 0.0
    %857 = vmatpush.msra.mxu0 0.0
    %858 = vmatpush.msra.mxu0 0.0
    %859 = vmatpush.msra.mxu0 0.0
    %860 = vmatpush.msra.mxu0 0.0
    %861 = vmatpush.msra.mxu0 %v117
    %862 = vmatmul.f32.gmra.mxu0 %v841
    %v863 = vpop.f32.mrf.mxu0
    %v864 = vadd.f32 0.0, %v863
    %865 = vmatmul.f32.gmra.mxu0 %v844
    %v866 = vpop.f32.mrf.mxu0
    %v867 = vadd.f32 0.0, %v866
    %868 = vdwg.mxu0
    %v869 = vadd.f32 %v736, %v864
    %v870 = vadd.f32 %v737, %v867
    %871 = vst.msk [vmem:[#allocation2] sm:$0xff] %vm48, %v869
    %872 = vst.msk [vmem:[#allocation2 + $0x8] sm:$0xff] %vm48, %v870
    %s873 = scalar_lea.vmem %s1, 16
    %v874 = vld [vmem:[%s873] sm:$0xff]
    %v875 = vld [vmem:[%s873 + $0x8] sm:$0xff]
    %s876 = scalar_lea.vmem %s2, 2
    %v877 = vld [vmem:[%s876] sm:$0x3]
    %879 = vset.pattern.permute.xlu0 0
    %880 = vperm.xlu0 %879, %v874
    %v881 = vpop.permute.xlu0 %880
    %884 = vset.pattern.permute.xlu0 0
    %885 = vperm.xlu0 %884, %v875
    %v886 = vpop.permute.xlu0 %885
    %v888 = vperm.slane %v877, 0
    %v889 = vsub.f32 %v881, %v888
    %v890 = vsub.f32 %v886, %v888
    %891 = vset.pattern.permute.xlu0 1
    %892 = vperm.xlu0 %891, %v874
    %v893 = vpop.permute.xlu0 %892
    %895 = vset.pattern.permute.xlu0 1
    %896 = vperm.xlu0 %895, %v875
    %v897 = vpop.permute.xlu0 %896
    %v899 = vperm.slane %v877, 1
    %v900 = vsub.f32 %v893, %v899
    %v901 = vsub.f32 %v897, %v899
    %904 = vrot.lane.b32.xlu0 %v900, 16
    %v905 = vpop.permute.xlu0 %904
    %906 = vrot.lane.b32.xlu0 %v901, 16
    %v907 = vpop.permute.xlu0 %906
    %v910 = vsel %vm154, %v889, %v905
    %v911 = vsel %vm154, %v890, %v907
    %v912 = vld [vmem:[%s4] sm:$0xff]
    %v913 = vld [vmem:[%s4 + $0x8] sm:$0xff]
    %v914 = vld [vmem:[%s4 + $0x10] sm:$0xff]
    %v915 = vld [vmem:[%s4 + $0x18] sm:$0xff]
    %v916 = vld [vmem:[%s4 + $0x20] sm:$0xff]
    %v917 = vld [vmem:[%s4 + $0x28] sm:$0xff]
    %v918 = vld [vmem:[%s4 + $0x30] sm:$0xff]
    %v919 = vld [vmem:[%s4 + $0x38] sm:$0xff]
    %v920 = vld [vmem:[%s5] sm:$0x3]
    %v922 = vperm.slane %v920, 0
    %v923 = vperm.slane %v920, 1
    %v927 = vsel %vm48, %v910, 0
    %v930 = vsel %vm48, %v911, 0
    %932 = vmatpush.msra.mxu0 0.0
    %933 = vmatpush.msra.mxu0 0.0
    %934 = vmatpush.msra.mxu0 0.0
    %935 = vmatpush.msra.mxu0 0.0
    %936 = vmatpush.msra.mxu0 0.0
    %937 = vmatpush.msra.mxu0 0.0
    %938 = vmatpush.msra.mxu0 0.0
    %939 = vmatpush.msra.mxu0 0.0
    %940 = vmatpush.msra.mxu0 0.0
    %941 = vmatpush.msra.mxu0 0.0
    %942 = vmatpush.msra.mxu0 0.0
    %943 = vmatpush.msra.mxu0 0.0
    %944 = vmatpush.msra.mxu0 %v918
    %945 = vmatpush.msra.mxu0 %v916
    %946 = vmatpush.msra.mxu0 %v914
    %947 = vmatpush.msra.mxu0 %v912
    %948 = vmatmul.f32.gmra.mxu0 %v927
    %v949 = vpop.f32.mrf.mxu0
    %v950 = vadd.f32 %v922, %v949
    %951 = vmatmul.f32.gmra.mxu0 %v930
    %v952 = vpop.f32.mrf.mxu0
    %v953 = vadd.f32 %v922, %v952
    %954 = vdwg.mxu0
    %955 = vmatpush.msra.mxu0 0.0
    %956 = vmatpush.msra.mxu0 0.0
    %957 = vmatpush.msra.mxu0 0.0
    %958 = vmatpush.msra.mxu0 0.0
    %959 = vmatpush.msra.mxu0 0.0
    %960 = vmatpush.msra.mxu0 0.0
    %961 = vmatpush.msra.mxu0 0.0
    %962 = vmatpush.msra.mxu0 0.0
    %963 = vmatpush.msra.mxu0 0.0
    %964 = vmatpush.msra.mxu0 0.0
    %965 = vmatpush.msra.mxu0 0.0
    %966 = vmatpush.msra.mxu0 0.0
    %967 = vmatpush.msra.mxu0 %v919
    %968 = vmatpush.msra.mxu0 %v917
    %969 = vmatpush.msra.mxu0 %v915
    %970 = vmatpush.msra.mxu0 %v913
    %971 = vmatmul.f32.gmra.mxu0 %v927
    %v972 = vpop.f32.mrf.mxu0
    %v973 = vadd.f32 %v923, %v972
    %974 = vmatmul.f32.gmra.mxu0 %v930
    %v975 = vpop.f32.mrf.mxu0
    %v976 = vadd.f32 %v923, %v975
    %977 = vdwg.mxu0
    %v978 = vmul.f32 %v950, 0.5
    %v979 = vmul.f32 %v973, 0.5
    %v980 = vmul.f32 %v953, 0.5
    %v981 = vmul.f32 %v976, 0.5
    %v982 = vmul.f32 %v950, 0.044715
    %v983 = vmul.f32 %v973, 0.044715
    %v984 = vmul.f32 %v953, 0.044715
    %v985 = vmul.f32 %v976, 0.044715
    %v986 = vmul.f32 %v982, %v950
    %v987 = vmul.f32 %v983, %v973
    %v988 = vmul.f32 %v984, %v953
    %v989 = vmul.f32 %v985, %v976
    %v990 = vmul.f32 %v986, %v950
    %v991 = vmul.f32 %v987, %v973
    %v992 = vmul.f32 %v988, %v953
    %v993 = vmul.f32 %v989, %v976
    %v994 = vadd.f32 %v950, %v990
    %v995 = vadd.f32 %v973, %v991
    %v996 = vadd.f32 %v953, %v992
    %v997 = vadd.f32 %v976, %v993
    %v998 = vmul.f32 %v994, 0.7978846
    %v999 = vmul.f32 %v995, 0.7978846
    %v1000 = vmul.f32 %v996, 0.7978846
    %v1001 = vmul.f32 %v997, 0.7978846
    %v1002 = vtanh.pop %v998
    %v1003 = vtanh.pop %v999
    %v1004 = vtanh.pop %v1000
    %v1005 = vtanh.pop %v1001
    %v1006 = vadd.f32 %v1002, 1.0
    %v1007 = vadd.f32 %v1003, 1.0
    %v1008 = vadd.f32 %v1004, 1.0
    %v1009 = vadd.f32 %v1005, 1.0
    %v1010 = vmul.f32 %v978, %v1006
    %v1011 = vmul.f32 %v979, %v1007
    %v1012 = vmul.f32 %v980, %v1008
    %v1013 = vmul.f32 %v981, %v1009
    %v1014 = vld [vmem:[%s6] sm:$0xff]
    %v1015 = vld [vmem:[%s6 + $0x8] sm:$0xff]
    %v1016 = vld [vmem:[%s6 + $0x10] sm:$0xff]
    %v1017 = vld [vmem:[%s6 + $0x18] sm:$0xff]
    %v1018 = vld [vmem:[%s6 + $0x20] sm:$0xff]
    %v1019 = vld [vmem:[%s6 + $0x28] sm:$0xff]
    %v1020 = vld [vmem:[%s6 + $0x30] sm:$0xff]
    %v1021 = vld [vmem:[%s6 + $0x38] sm:$0xff]
    %v1022 = vld [vmem:[%s6 + $0x40] sm:$0xff]
    %v1023 = vld [vmem:[%s6 + $0x48] sm:$0xff]
    %v1024 = vld [vmem:[%s6 + $0x50] sm:$0xff]
    %v1025 = vld [vmem:[%s6 + $0x58] sm:$0xff]
    %v1026 = vld [vmem:[%s6 + $0x60] sm:$0xff]
    %v1027 = vld [vmem:[%s6 + $0x68] sm:$0xff]
    %v1028 = vld [vmem:[%s6 + $0x70] sm:$0xff]
    %v1029 = vld [vmem:[%s6 + $0x78] sm:$0xff]
    %v1030 = vld [vmem:[%s6 + $0x80] sm:$0xff]
    %v1031 = vld [vmem:[%s6 + $0x88] sm:$0xff]
    %v1032 = vld [vmem:[%s6 + $0x90] sm:$0xff]
    %v1033 = vld [vmem:[%s6 + $0x98] sm:$0xff]
    %v1034 = vld [vmem:[%s6 + $0xa0] sm:$0xff]
    %v1035 = vld [vmem:[%s6 + $0xa8] sm:$0xff]
    %v1036 = vld [vmem:[%s6 + $0xb0] sm:$0xff]
    %v1037 = vld [vmem:[%s6 + $0xb8] sm:$0xff]
    %v1038 = vld [vmem:[%s6 + $0xc0] sm:$0xff]
    %v1039 = vld [vmem:[%s6 + $0xc8] sm:$0xff]
    %v1040 = vld [vmem:[%s6 + $0xd0] sm:$0xff]
    %v1041 = vld [vmem:[%s6 + $0xd8] sm:$0xff]
    %v1042 = vld [vmem:[%s6 + $0xe0] sm:$0xff]
    %v1043 = vld [vmem:[%s6 + $0xe8] sm:$0xff]
    %v1044 = vld [vmem:[%s6 + $0xf0] sm:$0xff]
    %v1045 = vld [vmem:[%s6 + $0xf8] sm:$0xff]
    %v1046 = vld [vmem:[%s7] sm:$0x1]
    %v1048 = vperm.slane %v1046, 0
    %1050 = vmatpush.msra.mxu0 %v1029
    %1051 = vmatpush.msra.mxu0 %v1028
    %1052 = vmatpush.msra.mxu0 %v1027
    %1053 = vmatpush.msra.mxu0 %v1026
    %1054 = vmatpush.msra.mxu0 %v1025
    %1055 = vmatpush.msra.mxu0 %v1024
    %1056 = vmatpush.msra.mxu0 %v1023
    %1057 = vmatpush.msra.mxu0 %v1022
    %1058 = vmatpush.msra.mxu0 %v1021
    %1059 = vmatpush.msra.mxu0 %v1020
    %1060 = vmatpush.msra.mxu0 %v1019
    %1061 = vmatpush.msra.mxu0 %v1018
    %1062 = vmatpush.msra.mxu0 %v1017
    %1063 = vmatpush.msra.mxu0 %v1016
    %1064 = vmatpush.msra.mxu0 %v1015
    %1065 = vmatpush.msra.mxu0 %v1014
    %1066 = vmatmul.f32.gmra.mxu0 %v1010
    %v1067 = vpop.f32.mrf.mxu0
    %v1068 = vadd.f32 %v1048, %v1067
    %1069 = vmatmul.f32.gmra.mxu0 %v1012
    %v1070 = vpop.f32.mrf.mxu0
    %v1071 = vadd.f32 %v1048, %v1070
    %1072 = vdwg.mxu0
    %1073 = vmatpush.msra.mxu0 %v1045
    %1074 = vmatpush.msra.mxu0 %v1044
    %1075 = vmatpush.msra.mxu0 %v1043
    %1076 = vmatpush.msra.mxu0 %v1042
    %1077 = vmatpush.msra.mxu0 %v1041
    %1078 = vmatpush.msra.mxu0 %v1040
    %1079 = vmatpush.msra.mxu0 %v1039
    %1080 = vmatpush.msra.mxu0 %v1038
    %1081 = vmatpush.msra.mxu0 %v1037
    %1082 = vmatpush.msra.mxu0 %v1036
    %1083 = vmatpush.msra.mxu0 %v1035
    %1084 = vmatpush.msra.mxu0 %v1034
    %1085 = vmatpush.msra.mxu0 %v1033
    %1086 = vmatpush.msra.mxu0 %v1032
    %1087 = vmatpush.msra.mxu0 %v1031
    %1088 = vmatpush.msra.mxu0 %v1030
    %1089 = vmatmul.f32.gmra.mxu0 %v1011
    %v1090 = vpop.f32.mrf.mxu0
    %v1091 = vadd.f32 %v1068, %v1090
    %1092 = vmatmul.f32.gmra.mxu0 %v1013
    %v1093 = vpop.f32.mrf.mxu0
    %v1094 = vadd.f32 %v1071, %v1093
    %1095 = vdwg.mxu0
    %1098 = vrot.lane.b32.xlu0 %v97, 96
    %v1099 = vpop.permute.xlu0 %1098
    %1100 = vrot.lane.b32.xlu0 %v100, 96
    %v1101 = vpop.permute.xlu0 %1100
    %v1102 = vsel %vm350, %v97, 0
    %v1104 = vsel %vm350, %v100, 0
    %v1106 = vsel %vm350, %v1099, 0
    %v1108 = vsel %vm350, %v1101, 0
    %1110 = vmatpush.xpose.msra.mxu0 0.0
    %1111 = vmatpush.xpose.msra.mxu0 0.0
    %1112 = vmatpush.xpose.msra.mxu0 0.0
    %1113 = vmatpush.xpose.msra.mxu0 0.0
    %1114 = vmatpush.xpose.msra.mxu0 0.0
    %1115 = vmatpush.xpose.msra.mxu0 0.0
    %1116 = vmatpush.xpose.msra.mxu0 0.0
    %1117 = vmatpush.xpose.msra.mxu0 0.0
    %1118 = vmatpush.xpose.msra.mxu0 0.0
    %1119 = vmatpush.xpose.msra.mxu0 0.0
    %1120 = vmatpush.xpose.msra.mxu0 0.0
    %1121 = vmatpush.xpose.msra.mxu0 0.0
    %1122 = vmatpush.xpose.msra.mxu0 0.0
    %1123 = vmatpush.xpose.msra.mxu0 0.0
    %1124 = vmatpush.xpose.msra.mxu0 %v1108
    %1125 = vmatpush.xpose.msra.mxu0 %v1106
    %1126 = vmatmul.f32.gmra.mxu0 %v1102
    %v1127 = vpop.f32.mrf.mxu0
    %v1128 = vadd.f32 %v1091, %v1127
    %1129 = vmatmul.f32.gmra.mxu0 %v1104
    %v1130 = vpop.f32.mrf.mxu0
    %v1131 = vadd.f32 %v1094, %v1130
    %1132 = vdwg.mxu0
    %v1133 = vsel %vm154, %v1128, -inf
    %1134 = vmax.xlane.f32.xlu0 %v1133
    %v1135 = vpop.xlane.xlu0 %1134
    %v1136 = vsel %vm154, %v1131, -inf
    %1137 = vmax.xlane.f32.xlu0 %v1136
    %v1138 = vpop.xlane.xlu0 %1137
    %v1139 = vsub.f32 %v1128, %v1135
    %v1140 = vsub.f32 %v1131, %v1138
    %v1141 = vmul.f32 %v1139, 1.442695
    %v1142 = vpow.pop %v1141
    %v1143 = vmul.f32 %v1140, 1.442695
    %v1144 = vpow.pop %v1143
    %v1145 = vsel %vm154, %v1142, 0.0
    %1146 = vadd.xlane.f32.xlu0 %v1145
    %v1147 = vpop.xlane.xlu0 %1146
    %v1148 = vsel %vm154, %v1144, 0.0
    %1149 = vadd.xlane.f32.xlu0 %v1148
    %v1150 = vpop.xlane.xlu0 %1149
    %1151 = vrot.lane.b32.xlu0 %v97, 64
    %v1152 = vpop.permute.xlu0 %1151
    %1153 = vrot.lane.b32.xlu0 %v100, 64
    %v1154 = vpop.permute.xlu0 %1153
    %v1158 = vsel %vm154, %v1142, 0
    %v1161 = vsel %vm154, %v1144, 0
    %1163 = vmatpush.msra.mxu0 0.0
    %1164 = vmatpush.msra.mxu0 0.0
    %1165 = vmatpush.msra.mxu0 0.0
    %1166 = vmatpush.msra.mxu0 0.0
    %1167 = vmatpush.msra.mxu0 0.0
    %1168 = vmatpush.msra.mxu0 0.0
    %1169 = vmatpush.msra.mxu0 0.0
    %1170 = vmatpush.msra.mxu0 0.0
    %1171 = vmatpush.msra.mxu0 0.0
    %1172 = vmatpush.msra.mxu0 0.0
    %1173 = vmatpush.msra.mxu0 0.0
    %1174 = vmatpush.msra.mxu0 0.0
    %1175 = vmatpush.msra.mxu0 0.0
    %1176 = vmatpush.msra.mxu0 0.0
    %1177 = vmatpush.msra.mxu0 %v1154
    %1178 = vmatpush.msra.mxu0 %v1152
    %1179 = vmatmul.f32.gmra.mxu0 %v1158
    %v1180 = vpop.f32.mrf.mxu0
    %v1181 = vadd.f32 0.0, %v1180
    %1182 = vmatmul.f32.gmra.mxu0 %v1161
    %v1183 = vpop.f32.mrf.mxu0
    %v1184 = vadd.f32 0.0, %v1183
    %1185 = vdwg.mxu0
    %v1186 = vrcp.pop %v1147
    %v1187 = vrcp.pop %v1150
    %v1188 = vmul.f32 %v1181, %v1186
    %v1189 = vmul.f32 %v1184, %v1187
    %v1191 = vsel %vm350, %v1188, 0
    %v1194 = vsel %vm350, %v1189, 0
    %1196 = vmatpush.msra.mxu0 0.0
    %1197 = vmatpush.msra.mxu0 0.0
    %1198 = vmatpush.msra.mxu0 0.0
    %1199 = vmatpush.msra.mxu0 0.0
    %1200 = vmatpush.msra.mxu0 0.0
    %1201 = vmatpush.msra.mxu0 0.0
    %1202 = vmatpush.msra.mxu0 0.0
    %1203 = vmatpush.msra.mxu0 0.0
    %1204 = vmatpush.msra.mxu0 0.0
    %1205 = vmatpush.msra.mxu0 0.0
    %1206 = vmatpush.msra.mxu0 0.0
    %1207 = vmatpush.msra.mxu0 0.0
    %1208 = vmatpush.msra.mxu0 0.0
    %1209 = vmatpush.msra.mxu0 0.0
    %1210 = vmatpush.msra.mxu0 0.0
    %1211 = vmatpush.msra.mxu0 %v114
    %1212 = vmatmul.f32.gmra.mxu0 %v1191
    %v1213 = vpop.f32.mrf.mxu0
    %v1214 = vadd.f32 0.0, %v1213
    %1215 = vmatmul.f32.gmra.mxu0 %v1194
    %v1216 = vpop.f32.mrf.mxu0
    %v1217 = vadd.f32 0.0, %v1216
    %1218 = vdwg.mxu0
    %v1219 = vadd.f32 %v342, %v1214
    %v1220 = vadd.f32 %v342, %v1217
    %1221 = vrot.lane.b32.xlu0 %v97, 120
    %v1222 = vpop.permute.xlu0 %1221
    %1223 = vrot.lane.b32.xlu0 %v100, 120
    %v1224 = vpop.permute.xlu0 %1223
    %1225 = vrot.lane.b32.xlu0 %v97, 88
    %v1226 = vpop.permute.xlu0 %1225
    %1227 = vrot.lane.b32.xlu0 %v100, 88
    %v1228 = vpop.permute.xlu0 %1227
    %1231 = vrot.lane.b32.xlu0 %v1091, 112
    %v1232 = vpop.permute.xlu0 %1231
    %1233 = vrot.lane.b32.xlu0 %v1094, 112
    %v1234 = vpop.permute.xlu0 %1233
    %v1237 = vsel %vm350, %v1222, 0
    %v1239 = vsel %vm350, %v1224, 0
    %v1241 = vsel %vm350, %v1226, 0
    %v1243 = vsel %vm350, %v1228, 0
    %1245 = vmatpush.xpose.msra.mxu0 0.0
    %1246 = vmatpush.xpose.msra.mxu0 0.0
    %1247 = vmatpush.xpose.msra.mxu0 0.0
    %1248 = vmatpush.xpose.msra.mxu0 0.0
    %1249 = vmatpush.xpose.msra.mxu0 0.0
    %1250 = vmatpush.xpose.msra.mxu0 0.0
    %1251 = vmatpush.xpose.msra.mxu0 0.0
    %1252 = vmatpush.xpose.msra.mxu0 0.0
    %1253 = vmatpush.xpose.msra.mxu0 0.0
    %1254 = vmatpush.xpose.msra.mxu0 0.0
    %1255 = vmatpush.xpose.msra.mxu0 0.0
    %1256 = vmatpush.xpose.msra.mxu0 0.0
    %1257 = vmatpush.xpose.msra.mxu0 0.0
    %1258 = vmatpush.xpose.msra.mxu0 0.0
    %1259 = vmatpush.xpose.msra.mxu0 %v1243
    %1260 = vmatpush.xpose.msra.mxu0 %v1241
    %1261 = vmatmul.f32.gmra.mxu0 %v1237
    %v1262 = vpop.f32.mrf.mxu0
    %v1263 = vadd.f32 %v1232, %v1262
    %1264 = vmatmul.f32.gmra.mxu0 %v1239
    %v1265 = vpop.f32.mrf.mxu0
    %v1266 = vadd.f32 %v1234, %v1265
    %1267 = vdwg.mxu0
    %v1268 = vsel %vm154, %v1263, -inf
    %1269 = vmax.xlane.f32.xlu0 %v1268
    %v1270 = vpop.xlane.xlu0 %1269
    %v1271 = vsel %vm154, %v1266, -inf
    %1272 = vmax.xlane.f32.xlu0 %v1271
    %v1273 = vpop.xlane.xlu0 %1272
    %v1274 = vsub.f32 %v1263, %v1270
    %v1275 = vsub.f32 %v1266, %v1273
    %v1276 = vmul.f32 %v1274, 1.442695
    %v1277 = vpow.pop %v1276
    %v1278 = vmul.f32 %v1275, 1.442695
    %v1279 = vpow.pop %v1278
    %v1280 = vsel %vm154, %v1277, 0.0
    %1281 = vadd.xlane.f32.xlu0 %v1280
    %v1282 = vpop.xlane.xlu0 %1281
    %v1283 = vsel %vm154, %v1279, 0.0
    %1284 = vadd.xlane.f32.xlu0 %v1283
    %v1285 = vpop.xlane.xlu0 %1284
    %1286 = vrot.lane.b32.xlu0 %v97, 56
    %v1287 = vpop.permute.xlu0 %1286
    %1288 = vrot.lane.b32.xlu0 %v100, 56
    %v1289 = vpop.permute.xlu0 %1288
    %v1293 = vsel %vm154, %v1277, 0
    %v1296 = vsel %vm154, %v1279, 0
    %1298 = vmatpush.msra.mxu0 0.0
    %1299 = vmatpush.msra.mxu0 0.0
    %1300 = vmatpush.msra.mxu0 0.0
    %1301 = vmatpush.msra.mxu0 0.0
    %1302 = vmatpush.msra.mxu0 0.0
    %1303 = vmatpush.msra.mxu0 0.0
    %1304 = vmatpush.msra.mxu0 0.0
    %1305 = vmatpush.msra.mxu0 0.0
    %1306 = vmatpush.msra.mxu0 0.0
    %1307 = vmatpush.msra.mxu0 0.0
    %1308 = vmatpush.msra.mxu0 0.0
    %1309 = vmatpush.msra.mxu0 0.0
    %1310 = vmatpush.msra.mxu0 0.0
    %1311 = vmatpush.msra.mxu0 0.0
    %1312 = vmatpush.msra.mxu0 %v1289
    %1313 = vmatpush.msra.mxu0 %v1287
    %1314 = vmatmul.f32.gmra.mxu0 %v1293
    %v1315 = vpop.f32.mrf.mxu0
    %v1316 = vadd.f32 0.0, %v1315
    %1317 = vmatmul.f32.gmra.mxu0 %v1296
    %v1318 = vpop.f32.mrf.mxu0
    %v1319 = vadd.f32 0.0, %v1318
    %1320 = vdwg.mxu0
    %v1321 = vrcp.pop %v1282
    %v1322 = vrcp.pop %v1285
    %v1323 = vmul.f32 %v1316, %v1321
    %v1324 = vmul.f32 %v1319, %v1322
    %v1326 = vsel %vm350, %v1323, 0
    %v1329 = vsel %vm350, %v1324, 0
    %1331 = vmatpush.msra.mxu0 0.0
    %1332 = vmatpush.msra.mxu0 0.0
    %1333 = vmatpush.msra.mxu0 0.0
    %1334 = vmatpush.msra.mxu0 0.0
    %1335 = vmatpush.msra.mxu0 0.0
    %1336 = vmatpush.msra.mxu0 0.0
    %1337 = vmatpush.msra.mxu0 0.0
    %1338 = vmatpush.msra.mxu0 0.0
    %1339 = vmatpush.msra.mxu0 0.0
    %1340 = vmatpush.msra.mxu0 0.0
    %1341 = vmatpush.msra.mxu0 0.0
    %1342 = vmatpush.msra.mxu0 0.0
    %1343 = vmatpush.msra.mxu0 0.0
    %1344 = vmatpush.msra.mxu0 0.0
    %1345 = vmatpush.msra.mxu0 0.0
    %1346 = vmatpush.msra.mxu0 %v115
    %1347 = vmatmul.f32.gmra.mxu0 %v1326
    %v1348 = vpop.f32.mrf.mxu0
    %v1349 = vadd.f32 0.0, %v1348
    %1350 = vmatmul.f32.gmra.mxu0 %v1329
    %v1351 = vpop.f32.mrf.mxu0
    %v1352 = vadd.f32 0.0, %v1351
    %1353 = vdwg.mxu0
    %v1354 = vadd.f32 %v1219, %v1349
    %v1355 = vadd.f32 %v1220, %v1352
    %1356 = vrot.lane.b32.xlu0 %v97, 112
    %v1357 = vpop.permute.xlu0 %1356
    %1358 = vrot.lane.b32.xlu0 %v100, 112
    %v1359 = vpop.permute.xlu0 %1358
    %1360 = vrot.lane.b32.xlu0 %v97, 80
    %v1361 = vpop.permute.xlu0 %1360
    %1362 = vrot.lane.b32.xlu0 %v100, 80
    %v1363 = vpop.permute.xlu0 %1362
    %1364 = vrot.lane.b32.xlu0 %v1091, 96
    %v1365 = vpop.permute.xlu0 %1364
    %1366 = vrot.lane.b32.xlu0 %v1094, 96
    %v1367 = vpop.permute.xlu0 %1366
    %v1370 = vsel %vm350, %v1357, 0
    %v1372 = vsel %vm350, %v1359, 0
    %v1374 = vsel %vm350, %v1361, 0
    %v1376 = vsel %vm350, %v1363, 0
    %1378 = vmatpush.xpose.msra.mxu0 0.0
    %1379 = vmatpush.xpose.msra.mxu0 0.0
    %1380 = vmatpush.xpose.msra.mxu0 0.0
    %1381 = vmatpush.xpose.msra.mxu0 0.0
    %1382 = vmatpush.xpose.msra.mxu0 0.0
    %1383 = vmatpush.xpose.msra.mxu0 0.0
    %1384 = vmatpush.xpose.msra.mxu0 0.0
    %1385 = vmatpush.xpose.msra.mxu0 0.0
    %1386 = vmatpush.xpose.msra.mxu0 0.0
    %1387 = vmatpush.xpose.msra.mxu0 0.0
    %1388 = vmatpush.xpose.msra.mxu0 0.0
    %1389 = vmatpush.xpose.msra.mxu0 0.0
    %1390 = vmatpush.xpose.msra.mxu0 0.0
    %1391 = vmatpush.xpose.msra.mxu0 0.0
    %1392 = vmatpush.xpose.msra.mxu0 %v1376
    %1393 = vmatpush.xpose.msra.mxu0 %v1374
    %1394 = vmatmul.f32.gmra.mxu0 %v1370
    %v1395 = vpop.f32.mrf.mxu0
    %v1396 = vadd.f32 %v1365, %v1395
    %1397 = vmatmul.f32.gmra.mxu0 %v1372
    %v1398 = vpop.f32.mrf.mxu0
    %v1399 = vadd.f32 %v1367, %v1398
    %1400 = vdwg.mxu0
    %v1401 = vsel %vm154, %v1396, -inf
    %1402 = vmax.xlane.f32.xlu0 %v1401
    %v1403 = vpop.xlane.xlu0 %1402
    %v1404 = vsel %vm154, %v1399, -inf
    %1405 = vmax.xlane.f32.xlu0 %v1404
    %v1406 = vpop.xlane.xlu0 %1405
    %v1407 = vsub.f32 %v1396, %v1403
    %v1408 = vsub.f32 %v1399, %v1406
    %v1409 = vmul.f32 %v1407, 1.442695
    %v1410 = vpow.pop %v1409
    %v1411 = vmul.f32 %v1408, 1.442695
    %v1412 = vpow.pop %v1411
    %v1413 = vsel %vm154, %v1410, 0.0
    %1414 = vadd.xlane.f32.xlu0 %v1413
    %v1415 = vpop.xlane.xlu0 %1414
    %v1416 = vsel %vm154, %v1412, 0.0
    %1417 = vadd.xlane.f32.xlu0 %v1416
    %v1418 = vpop.xlane.xlu0 %1417
    %1419 = vrot.lane.b32.xlu0 %v97, 48
    %v1420 = vpop.permute.xlu0 %1419
    %1421 = vrot.lane.b32.xlu0 %v100, 48
    %v1422 = vpop.permute.xlu0 %1421
    %v1426 = vsel %vm154, %v1410, 0
    %v1429 = vsel %vm154, %v1412, 0
    %1431 = vmatpush.msra.mxu0 0.0
    %1432 = vmatpush.msra.mxu0 0.0
    %1433 = vmatpush.msra.mxu0 0.0
    %1434 = vmatpush.msra.mxu0 0.0
    %1435 = vmatpush.msra.mxu0 0.0
    %1436 = vmatpush.msra.mxu0 0.0
    %1437 = vmatpush.msra.mxu0 0.0
    %1438 = vmatpush.msra.mxu0 0.0
    %1439 = vmatpush.msra.mxu0 0.0
    %1440 = vmatpush.msra.mxu0 0.0
    %1441 = vmatpush.msra.mxu0 0.0
    %1442 = vmatpush.msra.mxu0 0.0
    %1443 = vmatpush.msra.mxu0 0.0
    %1444 = vmatpush.msra.mxu0 0.0
    %1445 = vmatpush.msra.mxu0 %v1422
    %1446 = vmatpush.msra.mxu0 %v1420
    %1447 = vmatmul.f32.gmra.mxu0 %v1426
    %v1448 = vpop.f32.mrf.mxu0
    %v1449 = vadd.f32 0.0, %v1448
    %1450 = vmatmul.f32.gmra.mxu0 %v1429
    %v1451 = vpop.f32.mrf.mxu0
    %v1452 = vadd.f32 0.0, %v1451
    %1453 = vdwg.mxu0
    %v1454 = vrcp.pop %v1415
    %v1455 = vrcp.pop %v1418
    %v1456 = vmul.f32 %v1449, %v1454
    %v1457 = vmul.f32 %v1452, %v1455
    %v1459 = vsel %vm350, %v1456, 0
    %v1462 = vsel %vm350, %v1457, 0
    %1464 = vmatpush.msra.mxu0 0.0
    %1465 = vmatpush.msra.mxu0 0.0
    %1466 = vmatpush.msra.mxu0 0.0
    %1467 = vmatpush.msra.mxu0 0.0
    %1468 = vmatpush.msra.mxu0 0.0
    %1469 = vmatpush.msra.mxu0 0.0
    %1470 = vmatpush.msra.mxu0 0.0
    %1471 = vmatpush.msra.mxu0 0.0
    %1472 = vmatpush.msra.mxu0 0.0
    %1473 = vmatpush.msra.mxu0 0.0
    %1474 = vmatpush.msra.mxu0 0.0
    %1475 = vmatpush.msra.mxu0 0.0
    %1476 = vmatpush.msra.mxu0 0.0
    %1477 = vmatpush.msra.mxu0 0.0
    %1478 = vmatpush.msra.mxu0 0.0
    %1479 = vmatpush.msra.mxu0 %v116
    %1480 = vmatmul.f32.gmra.mxu0 %v1459
    %v1481 = vpop.f32.mrf.mxu0
    %v1482 = vadd.f32 0.0, %v1481
    %1483 = vmatmul.f32.gmra.mxu0 %v1462
    %v1484 = vpop.f32.mrf.mxu0
    %v1485 = vadd.f32 0.0, %v1484
    %1486 = vdwg.mxu0
    %v1487 = vadd.f32 %v1354, %v1482
    %v1488 = vadd.f32 %v1355, %v1485
    %1489 = vrot.lane.b32.xlu0 %v97, 104
    %v1490 = vpop.permute.xlu0 %1489
    %1491 = vrot.lane.b32.xlu0 %v100, 104
    %v1492 = vpop.permute.xlu0 %1491
    %1493 = vrot.lane.b32.xlu0 %v97, 72
    %v1494 = vpop.permute.xlu0 %1493
    %1495 = vrot.lane.b32.xlu0 %v100, 72
    %v1496 = vpop.permute.xlu0 %1495
    %1497 = vrot.lane.b32.xlu0 %v1091, 80
    %v1498 = vpop.permute.xlu0 %1497
    %1499 = vrot.lane.b32.xlu0 %v1094, 80
    %v1500 = vpop.permute.xlu0 %1499
    %v1503 = vsel %vm350, %v1490, 0
    %v1505 = vsel %vm350, %v1492, 0
    %v1507 = vsel %vm350, %v1494, 0
    %v1509 = vsel %vm350, %v1496, 0
    %1511 = vmatpush.xpose.msra.mxu0 0.0
    %1512 = vmatpush.xpose.msra.mxu0 0.0
    %1513 = vmatpush.xpose.msra.mxu0 0.0
    %1514 = vmatpush.xpose.msra.mxu0 0.0
    %1515 = vmatpush.xpose.msra.mxu0 0.0
    %1516 = vmatpush.xpose.msra.mxu0 0.0
    %1517 = vmatpush.xpose.msra.mxu0 0.0
    %1518 = vmatpush.xpose.msra.mxu0 0.0
    %1519 = vmatpush.xpose.msra.mxu0 0.0
    %1520 = vmatpush.xpose.msra.mxu0 0.0
    %1521 = vmatpush.xpose.msra.mxu0 0.0
    %1522 = vmatpush.xpose.msra.mxu0 0.0
    %1523 = vmatpush.xpose.msra.mxu0 0.0
    %1524 = vmatpush.xpose.msra.mxu0 0.0
    %1525 = vmatpush.xpose.msra.mxu0 %v1509
    %1526 = vmatpush.xpose.msra.mxu0 %v1507
    %1527 = vmatmul.f32.gmra.mxu0 %v1503
    %v1528 = vpop.f32.mrf.mxu0
    %v1529 = vadd.f32 %v1498, %v1528
    %1530 = vmatmul.f32.gmra.mxu0 %v1505
    %v1531 = vpop.f32.mrf.mxu0
    %v1532 = vadd.f32 %v1500, %v1531
    %1533 = vdwg.mxu0
    %v1534 = vsel %vm154, %v1529, -inf
    %1535 = vmax.xlane.f32.xlu0 %v1534
    %v1536 = vpop.xlane.xlu0 %1535
    %v1537 = vsel %vm154, %v1532, -inf
    %1538 = vmax.xlane.f32.xlu0 %v1537
    %v1539 = vpop.xlane.xlu0 %1538
    %v1540 = vsub.f32 %v1529, %v1536
    %v1541 = vsub.f32 %v1532, %v1539
    %v1542 = vmul.f32 %v1540, 1.442695
    %v1543 = vpow.pop %v1542
    %v1544 = vmul.f32 %v1541, 1.442695
    %v1545 = vpow.pop %v1544
    %v1546 = vsel %vm154, %v1543, 0.0
    %1547 = vadd.xlane.f32.xlu0 %v1546
    %v1548 = vpop.xlane.xlu0 %1547
    %v1549 = vsel %vm154, %v1545, 0.0
    %1550 = vadd.xlane.f32.xlu0 %v1549
    %v1551 = vpop.xlane.xlu0 %1550
    %1552 = vrot.lane.b32.xlu0 %v97, 40
    %v1553 = vpop.permute.xlu0 %1552
    %1554 = vrot.lane.b32.xlu0 %v100, 40
    %v1555 = vpop.permute.xlu0 %1554
    %v1559 = vsel %vm154, %v1543, 0
    %v1562 = vsel %vm154, %v1545, 0
    %1564 = vmatpush.msra.mxu0 0.0
    %1565 = vmatpush.msra.mxu0 0.0
    %1566 = vmatpush.msra.mxu0 0.0
    %1567 = vmatpush.msra.mxu0 0.0
    %1568 = vmatpush.msra.mxu0 0.0
    %1569 = vmatpush.msra.mxu0 0.0
    %1570 = vmatpush.msra.mxu0 0.0
    %1571 = vmatpush.msra.mxu0 0.0
    %1572 = vmatpush.msra.mxu0 0.0
    %1573 = vmatpush.msra.mxu0 0.0
    %1574 = vmatpush.msra.mxu0 0.0
    %1575 = vmatpush.msra.mxu0 0.0
    %1576 = vmatpush.msra.mxu0 0.0
    %1577 = vmatpush.msra.mxu0 0.0
    %1578 = vmatpush.msra.mxu0 %v1555
    %1579 = vmatpush.msra.mxu0 %v1553
    %1580 = vmatmul.f32.gmra.mxu0 %v1559
    %v1581 = vpop.f32.mrf.mxu0
    %v1582 = vadd.f32 0.0, %v1581
    %1583 = vmatmul.f32.gmra.mxu0 %v1562
    %v1584 = vpop.f32.mrf.mxu0
    %v1585 = vadd.f32 0.0, %v1584
    %1586 = vdwg.mxu0
    %v1587 = vrcp.pop %v1548
    %v1588 = vrcp.pop %v1551
    %v1589 = vmul.f32 %v1582, %v1587
    %v1590 = vmul.f32 %v1585, %v1588
    %v1592 = vsel %vm350, %v1589, 0
    %v1595 = vsel %vm350, %v1590, 0
    %1597 = vmatpush.msra.mxu0 0.0
    %1598 = vmatpush.msra.mxu0 0.0
    %1599 = vmatpush.msra.mxu0 0.0
    %1600 = vmatpush.msra.mxu0 0.0
    %1601 = vmatpush.msra.mxu0 0.0
    %1602 = vmatpush.msra.mxu0 0.0
    %1603 = vmatpush.msra.mxu0 0.0
    %1604 = vmatpush.msra.mxu0 0.0
    %1605 = vmatpush.msra.mxu0 0.0
    %1606 = vmatpush.msra.mxu0 0.0
    %1607 = vmatpush.msra.mxu0 0.0
    %1608 = vmatpush.msra.mxu0 0.0
    %1609 = vmatpush.msra.mxu0 0.0
    %1610 = vmatpush.msra.mxu0 0.0
    %1611 = vmatpush.msra.mxu0 0.0
    %1612 = vmatpush.msra.mxu0 %v117
    %1613 = vmatmul.f32.gmra.mxu0 %v1592
    %v1614 = vpop.f32.mrf.mxu0
    %v1615 = vadd.f32 0.0, %v1614
    %1616 = vmatmul.f32.gmra.mxu0 %v1595
    %v1617 = vpop.f32.mrf.mxu0
    %v1618 = vadd.f32 0.0, %v1617
    %1619 = vdwg.mxu0
    %v1620 = vadd.f32 %v1487, %v1615
    %v1621 = vadd.f32 %v1488, %v1618
    %s1622 = scalar_lea.vmem [#allocation2], 16
    %1623 = vst.msk [vmem:[%s1622] sm:$0xff] %vm48, %v1620
    %1624 = vst.msk [vmem:[%s1622 + $0x8] sm:$0xff] %vm48, %v1621
    %s1625 = scalar_lea.vmem %s1, 32
    %v1626 = vld [vmem:[%s1625] sm:$0xff]
    %v1627 = vld [vmem:[%s1625 + $0x8] sm:$0xff]
    %s1628 = scalar_lea.vmem %s2, 4
    %v1629 = vld [vmem:[%s1628] sm:$0x3]
    %1631 = vset.pattern.permute.xlu0 0
    %1632 = vperm.xlu0 %1631, %v1626
    %v1633 = vpop.permute.xlu0 %1632
    %1636 = vset.pattern.permute.xlu0 0
    %1637 = vperm.xlu0 %1636, %v1627
    %v1638 = vpop.permute.xlu0 %1637
    %v1640 = vperm.slane %v1629, 0
    %v1641 = vsub.f32 %v1633, %v1640
    %v1642 = vsub.f32 %v1638, %v1640
    %1643 = vset.pattern.permute.xlu0 1
    %1644 = vperm.xlu0 %1643, %v1626
    %v1645 = vpop.permute.xlu0 %1644
    %1647 = vset.pattern.permute.xlu0 1
    %1648 = vperm.xlu0 %1647, %v1627
    %v1649 = vpop.permute.xlu0 %1648
    %v1651 = vperm.slane %v1629, 1
    %v1652 = vsub.f32 %v1645, %v1651
    %v1653 = vsub.f32 %v1649, %v1651
    %1656 = vrot.lane.b32.xlu0 %v1652, 16
    %v1657 = vpop.permute.xlu0 %1656
    %1658 = vrot.lane.b32.xlu0 %v1653, 16
    %v1659 = vpop.permute.xlu0 %1658
    %v1662 = vsel %vm154, %v1641, %v1657
    %v1663 = vsel %vm154, %v1642, %v1659
    %v1664 = vld [vmem:[%s4] sm:$0xff]
    %v1665 = vld [vmem:[%s4 + $0x8] sm:$0xff]
    %v1666 = vld [vmem:[%s4 + $0x10] sm:$0xff]
    %v1667 = vld [vmem:[%s4 + $0x18] sm:$0xff]
    %v1668 = vld [vmem:[%s4 + $0x20] sm:$0xff]
    %v1669 = vld [vmem:[%s4 + $0x28] sm:$0xff]
    %v1670 = vld [vmem:[%s4 + $0x30] sm:$0xff]
    %v1671 = vld [vmem:[%s4 + $0x38] sm:$0xff]
    %v1672 = vld [vmem:[%s5] sm:$0x3]
    %v1674 = vperm.slane %v1672, 0
    %v1675 = vperm.slane %v1672, 1
    %v1679 = vsel %vm48, %v1662, 0
    %v1682 = vsel %vm48, %v1663, 0
    %1684 = vmatpush.msra.mxu0 0.0
    %1685 = vmatpush.msra.mxu0 0.0
    %1686 = vmatpush.msra.mxu0 0.0
    %1687 = vmatpush.msra.mxu0 0.0
    %1688 = vmatpush.msra.mxu0 0.0
    %1689 = vmatpush.msra.mxu0 0.0
    %1690 = vmatpush.msra.mxu0 0.0
    %1691 = vmatpush.msra.mxu0 0.0
    %1692 = vmatpush.msra.mxu0 0.0
    %1693 = vmatpush.msra.mxu0 0.0
    %1694 = vmatpush.msra.mxu0 0.0
    %1695 = vmatpush.msra.mxu0 0.0
    %1696 = vmatpush.msra.mxu0 %v1670
    %1697 = vmatpush.msra.mxu0 %v1668
    %1698 = vmatpush.msra.mxu0 %v1666
    %1699 = vmatpush.msra.mxu0 %v1664
    %1700 = vmatmul.f32.gmra.mxu0 %v1679
    %v1701 = vpop.f32.mrf.mxu0
    %v1702 = vadd.f32 %v1674, %v1701
    %1703 = vmatmul.f32.gmra.mxu0 %v1682
    %v1704 = vpop.f32.mrf.mxu0
    %v1705 = vadd.f32 %v1674, %v1704
    %1706 = vdwg.mxu0
    %1707 = vmatpush.msra.mxu0 0.0
    %1708 = vmatpush.msra.mxu0 0.0
    %1709 = vmatpush.msra.mxu0 0.0
    %1710 = vmatpush.msra.mxu0 0.0
    %1711 = vmatpush.msra.mxu0 0.0
    %1712 = vmatpush.msra.mxu0 0.0
    %1713 = vmatpush.msra.mxu0 0.0
    %1714 = vmatpush.msra.mxu0 0.0
    %1715 = vmatpush.msra.mxu0 0.0
    %1716 = vmatpush.msra.mxu0 0.0
    %1717 = vmatpush.msra.mxu0 0.0
    %1718 = vmatpush.msra.mxu0 0.0
    %1719 = vmatpush.msra.mxu0 %v1671
    %1720 = vmatpush.msra.mxu0 %v1669
    %1721 = vmatpush.msra.mxu0 %v1667
    %1722 = vmatpush.msra.mxu0 %v1665
    %1723 = vmatmul.f32.gmra.mxu0 %v1679
    %v1724 = vpop.f32.mrf.mxu0
    %v1725 = vadd.f32 %v1675, %v1724
    %1726 = vmatmul.f32.gmra.mxu0 %v1682
    %v1727 = vpop.f32.mrf.mxu0
    %v1728 = vadd.f32 %v1675, %v1727
    %1729 = vdwg.mxu0
    %v1730 = vmul.f32 %v1702, 0.5
    %v1731 = vmul.f32 %v1725, 0.5
    %v1732 = vmul.f32 %v1705, 0.5
    %v1733 = vmul.f32 %v1728, 0.5
    %v1734 = vmul.f32 %v1702, 0.044715
    %v1735 = vmul.f32 %v1725, 0.044715
    %v1736 = vmul.f32 %v1705, 0.044715
    %v1737 = vmul.f32 %v1728, 0.044715
    %v1738 = vmul.f32 %v1734, %v1702
    %v1739 = vmul.f32 %v1735, %v1725
    %v1740 = vmul.f32 %v1736, %v1705
    %v1741 = vmul.f32 %v1737, %v1728
    %v1742 = vmul.f32 %v1738, %v1702
    %v1743 = vmul.f32 %v1739, %v1725
    %v1744 = vmul.f32 %v1740, %v1705
    %v1745 = vmul.f32 %v1741, %v1728
    %v1746 = vadd.f32 %v1702, %v1742
    %v1747 = vadd.f32 %v1725, %v1743
    %v1748 = vadd.f32 %v1705, %v1744
    %v1749 = vadd.f32 %v1728, %v1745
    %v1750 = vmul.f32 %v1746, 0.7978846
    %v1751 = vmul.f32 %v1747, 0.7978846
    %v1752 = vmul.f32 %v1748, 0.7978846
    %v1753 = vmul.f32 %v1749, 0.7978846
    %v1754 = vtanh.pop %v1750
    %v1755 = vtanh.pop %v1751
    %v1756 = vtanh.pop %v1752
    %v1757 = vtanh.pop %v1753
    %v1758 = vadd.f32 %v1754, 1.0
    %v1759 = vadd.f32 %v1755, 1.0
    %v1760 = vadd.f32 %v1756, 1.0
    %v1761 = vadd.f32 %v1757, 1.0
    %v1762 = vmul.f32 %v1730, %v1758
    %v1763 = vmul.f32 %v1731, %v1759
    %v1764 = vmul.f32 %v1732, %v1760
    %v1765 = vmul.f32 %v1733, %v1761
    %v1766 = vld [vmem:[%s6] sm:$0xff]
    %v1767 = vld [vmem:[%s6 + $0x8] sm:$0xff]
    %v1768 = vld [vmem:[%s6 + $0x10] sm:$0xff]
    %v1769 = vld [vmem:[%s6 + $0x18] sm:$0xff]
    %v1770 = vld [vmem:[%s6 + $0x20] sm:$0xff]
    %v1771 = vld [vmem:[%s6 + $0x28] sm:$0xff]
    %v1772 = vld [vmem:[%s6 + $0x30] sm:$0xff]
    %v1773 = vld [vmem:[%s6 + $0x38] sm:$0xff]
    %v1774 = vld [vmem:[%s6 + $0x40] sm:$0xff]
    %v1775 = vld [vmem:[%s6 + $0x48] sm:$0xff]
    %v1776 = vld [vmem:[%s6 + $0x50] sm:$0xff]
    %v1777 = vld [vmem:[%s6 + $0x58] sm:$0xff]
    %v1778 = vld [vmem:[%s6 + $0x60] sm:$0xff]
    %v1779 = vld [vmem:[%s6 + $0x68] sm:$0xff]
    %v1780 = vld [vmem:[%s6 + $0x70] sm:$0xff]
    %v1781 = vld [vmem:[%s6 + $0x78] sm:$0xff]
    %v1782 = vld [vmem:[%s6 + $0x80] sm:$0xff]
    %v1783 = vld [vmem:[%s6 + $0x88] sm:$0xff]
    %v1784 = vld [vmem:[%s6 + $0x90] sm:$0xff]
    %v1785 = vld [vmem:[%s6 + $0x98] sm:$0xff]
    %v1786 = vld [vmem:[%s6 + $0xa0] sm:$0xff]
    %v1787 = vld [vmem:[%s6 + $0xa8] sm:$0xff]
    %v1788 = vld [vmem:[%s6 + $0xb0] sm:$0xff]
    %v1789 = vld [vmem:[%s6 + $0xb8] sm:$0xff]
    %v1790 = vld [vmem:[%s6 + $0xc0] sm:$0xff]
    %v1791 = vld [vmem:[%s6 + $0xc8] sm:$0xff]
    %v1792 = vld [vmem:[%s6 + $0xd0] sm:$0xff]
    %v1793 = vld [vmem:[%s6 + $0xd8] sm:$0xff]
    %v1794 = vld [vmem:[%s6 + $0xe0] sm:$0xff]
    %v1795 = vld [vmem:[%s6 + $0xe8] sm:$0xff]
    %v1796 = vld [vmem:[%s6 + $0xf0] sm:$0xff]
    %v1797 = vld [vmem:[%s6 + $0xf8] sm:$0xff]
    %v1798 = vld [vmem:[%s7] sm:$0x1]
    %v1800 = vperm.slane %v1798, 0
    %1802 = vmatpush.msra.mxu0 %v1781
    %1803 = vmatpush.msra.mxu0 %v1780
    %1804 = vmatpush.msra.mxu0 %v1779
    %1805 = vmatpush.msra.mxu0 %v1778
    %1806 = vmatpush.msra.mxu0 %v1777
    %1807 = vmatpush.msra.mxu0 %v1776
    %1808 = vmatpush.msra.mxu0 %v1775
    %1809 = vmatpush.msra.mxu0 %v1774
    %1810 = vmatpush.msra.mxu0 %v1773
    %1811 = vmatpush.msra.mxu0 %v1772
    %1812 = vmatpush.msra.mxu0 %v1771
    %1813 = vmatpush.msra.mxu0 %v1770
    %1814 = vmatpush.msra.mxu0 %v1769
    %1815 = vmatpush.msra.mxu0 %v1768
    %1816 = vmatpush.msra.mxu0 %v1767
    %1817 = vmatpush.msra.mxu0 %v1766
    %1818 = vmatmul.f32.gmra.mxu0 %v1762
    %v1819 = vpop.f32.mrf.mxu0
    %v1820 = vadd.f32 %v1800, %v1819
    %1821 = vmatmul.f32.gmra.mxu0 %v1764
    %v1822 = vpop.f32.mrf.mxu0
    %v1823 = vadd.f32 %v1800, %v1822
    %1824 = vdwg.mxu0
    %1825 = vmatpush.msra.mxu0 %v1797
    %1826 = vmatpush.msra.mxu0 %v1796
    %1827 = vmatpush.msra.mxu0 %v1795
    %1828 = vmatpush.msra.mxu0 %v1794
    %1829 = vmatpush.msra.mxu0 %v1793
    %1830 = vmatpush.msra.mxu0 %v1792
    %1831 = vmatpush.msra.mxu0 %v1791
    %1832 = vmatpush.msra.mxu0 %v1790
    %1833 = vmatpush.msra.mxu0 %v1789
    %1834 = vmatpush.msra.mxu0 %v1788
    %1835 = vmatpush.msra.mxu0 %v1787
    %1836 = vmatpush.msra.mxu0 %v1786
    %1837 = vmatpush.msra.mxu0 %v1785
    %1838 = vmatpush.msra.mxu0 %v1784
    %1839 = vmatpush.msra.mxu0 %v1783
    %1840 = vmatpush.msra.mxu0 %v1782
    %1841 = vmatmul.f32.gmra.mxu0 %v1763
    %v1842 = vpop.f32.mrf.mxu0
    %v1843 = vadd.f32 %v1820, %v1842
    %1844 = vmatmul.f32.gmra.mxu0 %v1765
    %v1845 = vpop.f32.mrf.mxu0
    %v1846 = vadd.f32 %v1823, %v1845
    %1847 = vdwg.mxu0
    %1850 = vrot.lane.b32.xlu0 %v103, 96
    %v1851 = vpop.permute.xlu0 %1850
    %1852 = vrot.lane.b32.xlu0 %v106, 96
    %v1853 = vpop.permute.xlu0 %1852
    %v1854 = vsel %vm350, %v103, 0
    %v1856 = vsel %vm350, %v106, 0
    %v1858 = vsel %vm350, %v1851, 0
    %v1860 = vsel %vm350, %v1853, 0
    %1862 = vmatpush.xpose.msra.mxu0 0.0
    %1863 = vmatpush.xpose.msra.mxu0 0.0
    %1864 = vmatpush.xpose.msra.mxu0 0.0
    %1865 = vmatpush.xpose.msra.mxu0 0.0
    %1866 = vmatpush.xpose.msra.mxu0 0.0
    %1867 = vmatpush.xpose.msra.mxu0 0.0
    %1868 = vmatpush.xpose.msra.mxu0 0.0
    %1869 = vmatpush.xpose.msra.mxu0 0.0
    %1870 = vmatpush.xpose.msra.mxu0 0.0
    %1871 = vmatpush.xpose.msra.mxu0 0.0
    %1872 = vmatpush.xpose.msra.mxu0 0.0
    %1873 = vmatpush.xpose.msra.mxu0 0.0
    %1874 = vmatpush.xpose.msra.mxu0 0.0
    %1875 = vmatpush.xpose.msra.mxu0 0.0
    %1876 = vmatpush.xpose.msra.mxu0 %v1860
    %1877 = vmatpush.xpose.msra.mxu0 %v1858
    %1878 = vmatmul.f32.gmra.mxu0 %v1854
    %v1879 = vpop.f32.mrf.mxu0
    %v1880 = vadd.f32 %v1843, %v1879
    %1881 = vmatmul.f32.gmra.mxu0 %v1856
    %v1882 = vpop.f32.mrf.mxu0
    %v1883 = vadd.f32 %v1846, %v1882
    %1884 = vdwg.mxu0
    %v1885 = vsel %vm154, %v1880, -inf
    %1886 = vmax.xlane.f32.xlu0 %v1885
    %v1887 = vpop.xlane.xlu0 %1886
    %v1888 = vsel %vm154, %v1883, -inf
    %1889 = vmax.xlane.f32.xlu0 %v1888
    %v1890 = vpop.xlane.xlu0 %1889
    %v1891 = vsub.f32 %v1880, %v1887
    %v1892 = vsub.f32 %v1883, %v1890
    %v1893 = vmul.f32 %v1891, 1.442695
    %v1894 = vpow.pop %v1893
    %v1895 = vmul.f32 %v1892, 1.442695
    %v1896 = vpow.pop %v1895
    %v1897 = vsel %vm154, %v1894, 0.0
    %1898 = vadd.xlane.f32.xlu0 %v1897
    %v1899 = vpop.xlane.xlu0 %1898
    %v1900 = vsel %vm154, %v1896, 0.0
    %1901 = vadd.xlane.f32.xlu0 %v1900
    %v1902 = vpop.xlane.xlu0 %1901
    %1903 = vrot.lane.b32.xlu0 %v103, 64
    %v1904 = vpop.permute.xlu0 %1903
    %1905 = vrot.lane.b32.xlu0 %v106, 64
    %v1906 = vpop.permute.xlu0 %1905
    %v1910 = vsel %vm154, %v1894, 0
    %v1913 = vsel %vm154, %v1896, 0
    %1915 = vmatpush.msra.mxu0 0.0
    %1916 = vmatpush.msra.mxu0 0.0
    %1917 = vmatpush.msra.mxu0 0.0
    %1918 = vmatpush.msra.mxu0 0.0
    %1919 = vmatpush.msra.mxu0 0.0
    %1920 = vmatpush.msra.mxu0 0.0
    %1921 = vmatpush.msra.mxu0 0.0
    %1922 = vmatpush.msra.mxu0 0.0
    %1923 = vmatpush.msra.mxu0 0.0
    %1924 = vmatpush.msra.mxu0 0.0
    %1925 = vmatpush.msra.mxu0 0.0
    %1926 = vmatpush.msra.mxu0 0.0
    %1927 = vmatpush.msra.mxu0 0.0
    %1928 = vmatpush.msra.mxu0 0.0
    %1929 = vmatpush.msra.mxu0 %v1906
    %1930 = vmatpush.msra.mxu0 %v1904
    %1931 = vmatmul.f32.gmra.mxu0 %v1910
    %v1932 = vpop.f32.mrf.mxu0
    %v1933 = vadd.f32 0.0, %v1932
    %1934 = vmatmul.f32.gmra.mxu0 %v1913
    %v1935 = vpop.f32.mrf.mxu0
    %v1936 = vadd.f32 0.0, %v1935
    %1937 = vdwg.mxu0
    %v1938 = vrcp.pop %v1899
    %v1939 = vrcp.pop %v1902
    %v1940 = vmul.f32 %v1933, %v1938
    %v1941 = vmul.f32 %v1936, %v1939
    %v1943 = vsel %vm350, %v1940, 0
    %v1946 = vsel %vm350, %v1941, 0
    %1948 = vmatpush.msra.mxu0 0.0
    %1949 = vmatpush.msra.mxu0 0.0
    %1950 = vmatpush.msra.mxu0 0.0
    %1951 = vmatpush.msra.mxu0 0.0
    %1952 = vmatpush.msra.mxu0 0.0
    %1953 = vmatpush.msra.mxu0 0.0
    %1954 = vmatpush.msra.mxu0 0.0
    %1955 = vmatpush.msra.mxu0 0.0
    %1956 = vmatpush.msra.mxu0 0.0
    %1957 = vmatpush.msra.mxu0 0.0
    %1958 = vmatpush.msra.mxu0 0.0
    %1959 = vmatpush.msra.mxu0 0.0
    %1960 = vmatpush.msra.mxu0 0.0
    %1961 = vmatpush.msra.mxu0 0.0
    %1962 = vmatpush.msra.mxu0 0.0
    %1963 = vmatpush.msra.mxu0 %v114
    %1964 = vmatmul.f32.gmra.mxu0 %v1943
    %v1965 = vpop.f32.mrf.mxu0
    %v1966 = vadd.f32 0.0, %v1965
    %1967 = vmatmul.f32.gmra.mxu0 %v1946
    %v1968 = vpop.f32.mrf.mxu0
    %v1969 = vadd.f32 0.0, %v1968
    %1970 = vdwg.mxu0
    %v1971 = vadd.f32 %v342, %v1966
    %v1972 = vadd.f32 %v342, %v1969
    %1973 = vrot.lane.b32.xlu0 %v103, 120
    %v1974 = vpop.permute.xlu0 %1973
    %1975 = vrot.lane.b32.xlu0 %v106, 120
    %v1976 = vpop.permute.xlu0 %1975
    %1977 = vrot.lane.b32.xlu0 %v103, 88
    %v1978 = vpop.permute.xlu0 %1977
    %1979 = vrot.lane.b32.xlu0 %v106, 88
    %v1980 = vpop.permute.xlu0 %1979
    %1983 = vrot.lane.b32.xlu0 %v1843, 112
    %v1984 = vpop.permute.xlu0 %1983
    %1985 = vrot.lane.b32.xlu0 %v1846, 112
    %v1986 = vpop.permute.xlu0 %1985
    %v1989 = vsel %vm350, %v1974, 0
    %v1991 = vsel %vm350, %v1976, 0
    %v1993 = vsel %vm350, %v1978, 0
    %v1995 = vsel %vm350, %v1980, 0
    %1997 = vmatpush.xpose.msra.mxu0 0.0
    %1998 = vmatpush.xpose.msra.mxu0 0.0
    %1999 = vmatpush.xpose.msra.mxu0 0.0
    %2000 = vmatpush.xpose.msra.mxu0 0.0
    %2001 = vmatpush.xpose.msra.mxu0 0.0
    %2002 = vmatpush.xpose.msra.mxu0 0.0
    %2003 = vmatpush.xpose.msra.mxu0 0.0
    %2004 = vmatpush.xpose.msra.mxu0 0.0
    %2005 = vmatpush.xpose.msra.mxu0 0.0
    %2006 = vmatpush.xpose.msra.mxu0 0.0
    %2007 = vmatpush.xpose.msra.mxu0 0.0
    %2008 = vmatpush.xpose.msra.mxu0 0.0
    %2009 = vmatpush.xpose.msra.mxu0 0.0
    %2010 = vmatpush.xpose.msra.mxu0 0.0
    %2011 = vmatpush.xpose.msra.mxu0 %v1995
    %2012 = vmatpush.xpose.msra.mxu0 %v1993
    %2013 = vmatmul.f32.gmra.mxu0 %v1989
    %v2014 = vpop.f32.mrf.mxu0
    %v2015 = vadd.f32 %v1984, %v2014
    %2016 = vmatmul.f32.gmra.mxu0 %v1991
    %v2017 = vpop.f32.mrf.mxu0
    %v2018 = vadd.f32 %v1986, %v2017
    %2019 = vdwg.mxu0
    %v2020 = vsel %vm154, %v2015, -inf
    %2021 = vmax.xlane.f32.xlu0 %v2020
    %v2022 = vpop.xlane.xlu0 %2021
    %v2023 = vsel %vm154, %v2018, -inf
    %2024 = vmax.xlane.f32.xlu0 %v2023
    %v2025 = vpop.xlane.xlu0 %2024
    %v2026 = vsub.f32 %v2015, %v2022
    %v2027 = vsub.f32 %v2018, %v2025
    %v2028 = vmul.f32 %v2026, 1.442695
    %v2029 = vpow.pop %v2028
    %v2030 = vmul.f32 %v2027, 1.442695
    %v2031 = vpow.pop %v2030
    %v2032 = vsel %vm154, %v2029, 0.0
    %2033 = vadd.xlane.f32.xlu0 %v2032
    %v2034 = vpop.xlane.xlu0 %2033
    %v2035 = vsel %vm154, %v2031, 0.0
    %2036 = vadd.xlane.f32.xlu0 %v2035
    %v2037 = vpop.xlane.xlu0 %2036
    %2038 = vrot.lane.b32.xlu0 %v103, 56
    %v2039 = vpop.permute.xlu0 %2038
    %2040 = vrot.lane.b32.xlu0 %v106, 56
    %v2041 = vpop.permute.xlu0 %2040
    %v2045 = vsel %vm154, %v2029, 0
    %v2048 = vsel %vm154, %v2031, 0
    %2050 = vmatpush.msra.mxu0 0.0
    %2051 = vmatpush.msra.mxu0 0.0
    %2052 = vmatpush.msra.mxu0 0.0
    %2053 = vmatpush.msra.mxu0 0.0
    %2054 = vmatpush.msra.mxu0 0.0
    %2055 = vmatpush.msra.mxu0 0.0
    %2056 = vmatpush.msra.mxu0 0.0
    %2057 = vmatpush.msra.mxu0 0.0
    %2058 = vmatpush.msra.mxu0 0.0
    %2059 = vmatpush.msra.mxu0 0.0
    %2060 = vmatpush.msra.mxu0 0.0
    %2061 = vmatpush.msra.mxu0 0.0
    %2062 = vmatpush.msra.mxu0 0.0
    %2063 = vmatpush.msra.mxu0 0.0
    %2064 = vmatpush.msra.mxu0 %v2041
    %2065 = vmatpush.msra.mxu0 %v2039
    %2066 = vmatmul.f32.gmra.mxu0 %v2045
    %v2067 = vpop.f32.mrf.mxu0
    %v2068 = vadd.f32 0.0, %v2067
    %2069 = vmatmul.f32.gmra.mxu0 %v2048
    %v2070 = vpop.f32.mrf.mxu0
    %v2071 = vadd.f32 0.0, %v2070
    %2072 = vdwg.mxu0
    %v2073 = vrcp.pop %v2034
    %v2074 = vrcp.pop %v2037
    %v2075 = vmul.f32 %v2068, %v2073
    %v2076 = vmul.f32 %v2071, %v2074
    %v2078 = vsel %vm350, %v2075, 0
    %v2081 = vsel %vm350, %v2076, 0
    %2083 = vmatpush.msra.mxu0 0.0
    %2084 = vmatpush.msra.mxu0 0.0
    %2085 = vmatpush.msra.mxu0 0.0
    %2086 = vmatpush.msra.mxu0 0.0
    %2087 = vmatpush.msra.mxu0 0.0
    %2088 = vmatpush.msra.mxu0 0.0
    %2089 = vmatpush.msra.mxu0 0.0
    %2090 = vmatpush.msra.mxu0 0.0
    %2091 = vmatpush.msra.mxu0 0.0
    %2092 = vmatpush.msra.mxu0 0.0
    %2093 = vmatpush.msra.mxu0 0.0
    %2094 = vmatpush.msra.mxu0 0.0
    %2095 = vmatpush.msra.mxu0 0.0
    %2096 = vmatpush.msra.mxu0 0.0
    %2097 = vmatpush.msra.mxu0 0.0
    %2098 = vmatpush.msra.mxu0 %v115
    %2099 = vmatmul.f32.gmra.mxu0 %v2078
    %v2100 = vpop.f32.mrf.mxu0
    %v2101 = vadd.f32 0.0, %v2100
    %2102 = vmatmul.f32.gmra.mxu0 %v2081
    %v2103 = vpop.f32.mrf.mxu0
    %v2104 = vadd.f32 0.0, %v2103
    %2105 = vdwg.mxu0
    %v2106 = vadd.f32 %v1971, %v2101
    %v2107 = vadd.f32 %v1972, %v2104
    %2108 = vrot.lane.b32.xlu0 %v103, 112
    %v2109 = vpop.permute.xlu0 %2108
    %2110 = vrot.lane.b32.xlu0 %v106, 112
    %v2111 = vpop.permute.xlu0 %2110
    %2112 = vrot.lane.b32.xlu0 %v103, 80
    %v2113 = vpop.permute.xlu0 %2112
    %2114 = vrot.lane.b32.xlu0 %v106, 80
    %v2115 = vpop.permute.xlu0 %2114
    %2116 = vrot.lane.b32.xlu0 %v1843, 96
    %v2117 = vpop.permute.xlu0 %2116
    %2118 = vrot.lane.b32.xlu0 %v1846, 96
    %v2119 = vpop.permute.xlu0 %2118
    %v2122 = vsel %vm350, %v2109, 0
    %v2124 = vsel %vm350, %v2111, 0
    %v2126 = vsel %vm350, %v2113, 0
    %v2128 = vsel %vm350, %v2115, 0
    %2130 = vmatpush.xpose.msra.mxu0 0.0
    %2131 = vmatpush.xpose.msra.mxu0 0.0
    %2132 = vmatpush.xpose.msra.mxu0 0.0
    %2133 = vmatpush.xpose.msra.mxu0 0.0
    %2134 = vmatpush.xpose.msra.mxu0 0.0
    %2135 = vmatpush.xpose.msra.mxu0 0.0
    %2136 = vmatpush.xpose.msra.mxu0 0.0
    %2137 = vmatpush.xpose.msra.mxu0 0.0
    %2138 = vmatpush.xpose.msra.mxu0 0.0
    %2139 = vmatpush.xpose.msra.mxu0 0.0
    %2140 = vmatpush.xpose.msra.mxu0 0.0
    %2141 = vmatpush.xpose.msra.mxu0 0.0
    %2142 = vmatpush.xpose.msra.mxu0 0.0
    %2143 = vmatpush.xpose.msra.mxu0 0.0
    %2144 = vmatpush.xpose.msra.mxu0 %v2128
    %2145 = vmatpush.xpose.msra.mxu0 %v2126
    %2146 = vmatmul.f32.gmra.mxu0 %v2122
    %v2147 = vpop.f32.mrf.mxu0
    %v2148 = vadd.f32 %v2117, %v2147
    %2149 = vmatmul.f32.gmra.mxu0 %v2124
    %v2150 = vpop.f32.mrf.mxu0
    %v2151 = vadd.f32 %v2119, %v2150
    %2152 = vdwg.mxu0
    %v2153 = vsel %vm154, %v2148, -inf
    %2154 = vmax.xlane.f32.xlu0 %v2153
    %v2155 = vpop.xlane.xlu0 %2154
    %v2156 = vsel %vm154, %v2151, -inf
    %2157 = vmax.xlane.f32.xlu0 %v2156
    %v2158 = vpop.xlane.xlu0 %2157
    %v2159 = vsub.f32 %v2148, %v2155
    %v2160 = vsub.f32 %v2151, %v2158
    %v2161 = vmul.f32 %v2159, 1.442695
    %v2162 = vpow.pop %v2161
    %v2163 = vmul.f32 %v2160, 1.442695
    %v2164 = vpow.pop %v2163
    %v2165 = vsel %vm154, %v2162, 0.0
    %2166 = vadd.xlane.f32.xlu0 %v2165
    %v2167 = vpop.xlane.xlu0 %2166
    %v2168 = vsel %vm154, %v2164, 0.0
    %2169 = vadd.xlane.f32.xlu0 %v2168
    %v2170 = vpop.xlane.xlu0 %2169
    %2171 = vrot.lane.b32.xlu0 %v103, 48
    %v2172 = vpop.permute.xlu0 %2171
    %2173 = vrot.lane.b32.xlu0 %v106, 48
    %v2174 = vpop.permute.xlu0 %2173
    %v2178 = vsel %vm154, %v2162, 0
    %v2181 = vsel %vm154, %v2164, 0
    %2183 = vmatpush.msra.mxu0 0.0
    %2184 = vmatpush.msra.mxu0 0.0
    %2185 = vmatpush.msra.mxu0 0.0
    %2186 = vmatpush.msra.mxu0 0.0
    %2187 = vmatpush.msra.mxu0 0.0
    %2188 = vmatpush.msra.mxu0 0.0
    %2189 = vmatpush.msra.mxu0 0.0
    %2190 = vmatpush.msra.mxu0 0.0
    %2191 = vmatpush.msra.mxu0 0.0
    %2192 = vmatpush.msra.mxu0 0.0
    %2193 = vmatpush.msra.mxu0 0.0
    %2194 = vmatpush.msra.mxu0 0.0
    %2195 = vmatpush.msra.mxu0 0.0
    %2196 = vmatpush.msra.mxu0 0.0
    %2197 = vmatpush.msra.mxu0 %v2174
    %2198 = vmatpush.msra.mxu0 %v2172
    %2199 = vmatmul.f32.gmra.mxu0 %v2178
    %v2200 = vpop.f32.mrf.mxu0
    %v2201 = vadd.f32 0.0, %v2200
    %2202 = vmatmul.f32.gmra.mxu0 %v2181
    %v2203 = vpop.f32.mrf.mxu0
    %v2204 = vadd.f32 0.0, %v2203
    %2205 = vdwg.mxu0
    %v2206 = vrcp.pop %v2167
    %v2207 = vrcp.pop %v2170
    %v2208 = vmul.f32 %v2201, %v2206
    %v2209 = vmul.f32 %v2204, %v2207
    %v2211 = vsel %vm350, %v2208, 0
    %v2214 = vsel %vm350, %v2209, 0
    %2216 = vmatpush.msra.mxu0 0.0
    %2217 = vmatpush.msra.mxu0 0.0
    %2218 = vmatpush.msra.mxu0 0.0
    %2219 = vmatpush.msra.mxu0 0.0
    %2220 = vmatpush.msra.mxu0 0.0
    %2221 = vmatpush.msra.mxu0 0.0
    %2222 = vmatpush.msra.mxu0 0.0
    %2223 = vmatpush.msra.mxu0 0.0
    %2224 = vmatpush.msra.mxu0 0.0
    %2225 = vmatpush.msra.mxu0 0.0
    %2226 = vmatpush.msra.mxu0 0.0
    %2227 = vmatpush.msra.mxu0 0.0
    %2228 = vmatpush.msra.mxu0 0.0
    %2229 = vmatpush.msra.mxu0 0.0
    %2230 = vmatpush.msra.mxu0 0.0
    %2231 = vmatpush.msra.mxu0 %v116
    %2232 = vmatmul.f32.gmra.mxu0 %v2211
    %v2233 = vpop.f32.mrf.mxu0
    %v2234 = vadd.f32 0.0, %v2233
    %2235 = vmatmul.f32.gmra.mxu0 %v2214
    %v2236 = vpop.f32.mrf.mxu0
    %v2237 = vadd.f32 0.0, %v2236
    %2238 = vdwg.mxu0
    %v2239 = vadd.f32 %v2106, %v2234
    %v2240 = vadd.f32 %v2107, %v2237
    %2241 = vrot.lane.b32.xlu0 %v103, 104
    %v2242 = vpop.permute.xlu0 %2241
    %2243 = vrot.lane.b32.xlu0 %v106, 104
    %v2244 = vpop.permute.xlu0 %2243
    %2245 = vrot.lane.b32.xlu0 %v103, 72
    %v2246 = vpop.permute.xlu0 %2245
    %2247 = vrot.lane.b32.xlu0 %v106, 72
    %v2248 = vpop.permute.xlu0 %2247
    %2249 = vrot.lane.b32.xlu0 %v1843, 80
    %v2250 = vpop.permute.xlu0 %2249
    %2251 = vrot.lane.b32.xlu0 %v1846, 80
    %v2252 = vpop.permute.xlu0 %2251
    %v2255 = vsel %vm350, %v2242, 0
    %v2257 = vsel %vm350, %v2244, 0
    %v2259 = vsel %vm350, %v2246, 0
    %v2261 = vsel %vm350, %v2248, 0
    %2263 = vmatpush.xpose.msra.mxu0 0.0
    %2264 = vmatpush.xpose.msra.mxu0 0.0
    %2265 = vmatpush.xpose.msra.mxu0 0.0
    %2266 = vmatpush.xpose.msra.mxu0 0.0
    %2267 = vmatpush.xpose.msra.mxu0 0.0
    %2268 = vmatpush.xpose.msra.mxu0 0.0
    %2269 = vmatpush.xpose.msra.mxu0 0.0
    %2270 = vmatpush.xpose.msra.mxu0 0.0
    %2271 = vmatpush.xpose.msra.mxu0 0.0
    %2272 = vmatpush.xpose.msra.mxu0 0.0
    %2273 = vmatpush.xpose.msra.mxu0 0.0
    %2274 = vmatpush.xpose.msra.mxu0 0.0
    %2275 = vmatpush.xpose.msra.mxu0 0.0
    %2276 = vmatpush.xpose.msra.mxu0 0.0
    %2277 = vmatpush.xpose.msra.mxu0 %v2261
    %2278 = vmatpush.xpose.msra.mxu0 %v2259
    %2279 = vmatmul.f32.gmra.mxu0 %v2255
    %v2280 = vpop.f32.mrf.mxu0
    %v2281 = vadd.f32 %v2250, %v2280
    %2282 = vmatmul.f32.gmra.mxu0 %v2257
    %v2283 = vpop.f32.mrf.mxu0
    %v2284 = vadd.f32 %v2252, %v2283
    %2285 = vdwg.mxu0
    %v2286 = vsel %vm154, %v2281, -inf
    %2287 = vmax.xlane.f32.xlu0 %v2286
    %v2288 = vpop.xlane.xlu0 %2287
    %v2289 = vsel %vm154, %v2284, -inf
    %2290 = vmax.xlane.f32.xlu0 %v2289
    %v2291 = vpop.xlane.xlu0 %2290
    %v2292 = vsub.f32 %v2281, %v2288
    %v2293 = vsub.f32 %v2284, %v2291
    %v2294 = vmul.f32 %v2292, 1.442695
    %v2295 = vpow.pop %v2294
    %v2296 = vmul.f32 %v2293, 1.442695
    %v2297 = vpow.pop %v2296
    %v2298 = vsel %vm154, %v2295, 0.0
    %2299 = vadd.xlane.f32.xlu0 %v2298
    %v2300 = vpop.xlane.xlu0 %2299
    %v2301 = vsel %vm154, %v2297, 0.0
    %2302 = vadd.xlane.f32.xlu0 %v2301
    %v2303 = vpop.xlane.xlu0 %2302
    %2304 = vrot.lane.b32.xlu0 %v103, 40
    %v2305 = vpop.permute.xlu0 %2304
    %2306 = vrot.lane.b32.xlu0 %v106, 40
    %v2307 = vpop.permute.xlu0 %2306
    %v2311 = vsel %vm154, %v2295, 0
    %v2314 = vsel %vm154, %v2297, 0
    %2316 = vmatpush.msra.mxu0 0.0
    %2317 = vmatpush.msra.mxu0 0.0
    %2318 = vmatpush.msra.mxu0 0.0
    %2319 = vmatpush.msra.mxu0 0.0
    %2320 = vmatpush.msra.mxu0 0.0
    %2321 = vmatpush.msra.mxu0 0.0
    %2322 = vmatpush.msra.mxu0 0.0
    %2323 = vmatpush.msra.mxu0 0.0
    %2324 = vmatpush.msra.mxu0 0.0
    %2325 = vmatpush.msra.mxu0 0.0
    %2326 = vmatpush.msra.mxu0 0.0
    %2327 = vmatpush.msra.mxu0 0.0
    %2328 = vmatpush.msra.mxu0 0.0
    %2329 = vmatpush.msra.mxu0 0.0
    %2330 = vmatpush.msra.mxu0 %v2307
    %2331 = vmatpush.msra.mxu0 %v2305
    %2332 = vmatmul.f32.gmra.mxu0 %v2311
    %v2333 = vpop.f32.mrf.mxu0
    %v2334 = vadd.f32 0.0, %v2333
    %2335 = vmatmul.f32.gmra.mxu0 %v2314
    %v2336 = vpop.f32.mrf.mxu0
    %v2337 = vadd.f32 0.0, %v2336
    %2338 = vdwg.mxu0
    %v2339 = vrcp.pop %v2300
    %v2340 = vrcp.pop %v2303
    %v2341 = vmul.f32 %v2334, %v2339
    %v2342 = vmul.f32 %v2337, %v2340
    %v2344 = vsel %vm350, %v2341, 0
    %v2347 = vsel %vm350, %v2342, 0
    %2349 = vmatpush.msra.mxu0 0.0
    %2350 = vmatpush.msra.mxu0 0.0
    %2351 = vmatpush.msra.mxu0 0.0
    %2352 = vmatpush.msra.mxu0 0.0
    %2353 = vmatpush.msra.mxu0 0.0
    %2354 = vmatpush.msra.mxu0 0.0
    %2355 = vmatpush.msra.mxu0 0.0
    %2356 = vmatpush.msra.mxu0 0.0
    %2357 = vmatpush.msra.mxu0 0.0
    %2358 = vmatpush.msra.mxu0 0.0
    %2359 = vmatpush.msra.mxu0 0.0
    %2360 = vmatpush.msra.mxu0 0.0
    %2361 = vmatpush.msra.mxu0 0.0
    %2362 = vmatpush.msra.mxu0 0.0
    %2363 = vmatpush.msra.mxu0 0.0
    %2364 = vmatpush.msra.mxu0 %v117
    %2365 = vmatmul.f32.gmra.mxu0 %v2344
    %v2366 = vpop.f32.mrf.mxu0
    %v2367 = vadd.f32 0.0, %v2366
    %2368 = vmatmul.f32.gmra.mxu0 %v2347
    %v2369 = vpop.f32.mrf.mxu0
    %v2370 = vadd.f32 0.0, %v2369
    %2371 = vdwg.mxu0
    %v2372 = vadd.f32 %v2239, %v2367
    %v2373 = vadd.f32 %v2240, %v2370
    %s2374 = scalar_lea.vmem [#allocation2], 32
    %2375 = vst.msk [vmem:[%s2374] sm:$0xff] %vm48, %v2372
    %2376 = vst.msk [vmem:[%s2374 + $0x8] sm:$0xff] %vm48, %v2373
    %s2377 = scalar_lea.vmem %s1, 48
    %v2378 = vld [vmem:[%s2377] sm:$0xff]
    %v2379 = vld [vmem:[%s2377 + $0x8] sm:$0xff]
    %s2380 = scalar_lea.vmem %s2, 6
    %v2381 = vld [vmem:[%s2380] sm:$0x3]
    %2383 = vset.pattern.permute.xlu0 0
    %2384 = vperm.xlu0 %2383, %v2378
    %v2385 = vpop.permute.xlu0 %2384
    %2388 = vset.pattern.permute.xlu0 0
    %2389 = vperm.xlu0 %2388, %v2379
    %v2390 = vpop.permute.xlu0 %2389
    %v2392 = vperm.slane %v2381, 0
    %v2393 = vsub.f32 %v2385, %v2392
    %v2394 = vsub.f32 %v2390, %v2392
    %2395 = vset.pattern.permute.xlu0 1
    %2396 = vperm.xlu0 %2395, %v2378
    %v2397 = vpop.permute.xlu0 %2396
    %2399 = vset.pattern.permute.xlu0 1
    %2400 = vperm.xlu0 %2399, %v2379
    %v2401 = vpop.permute.xlu0 %2400
    %v2403 = vperm.slane %v2381, 1
    %v2404 = vsub.f32 %v2397, %v2403
    %v2405 = vsub.f32 %v2401, %v2403
    %2408 = vrot.lane.b32.xlu0 %v2404, 16
    %v2409 = vpop.permute.xlu0 %2408
    %2410 = vrot.lane.b32.xlu0 %v2405, 16
    %v2411 = vpop.permute.xlu0 %2410
    %v2414 = vsel %vm154, %v2393, %v2409
    %v2415 = vsel %vm154, %v2394, %v2411
    %v2416 = vld [vmem:[%s4] sm:$0xff]
    %v2417 = vld [vmem:[%s4 + $0x8] sm:$0xff]
    %v2418 = vld [vmem:[%s4 + $0x10] sm:$0xff]
    %v2419 = vld [vmem:[%s4 + $0x18] sm:$0xff]
    %v2420 = vld [vmem:[%s4 + $0x20] sm:$0xff]
    %v2421 = vld [vmem:[%s4 + $0x28] sm:$0xff]
    %v2422 = vld [vmem:[%s4 + $0x30] sm:$0xff]
    %v2423 = vld [vmem:[%s4 + $0x38] sm:$0xff]
    %v2424 = vld [vmem:[%s5] sm:$0x3]
    %v2426 = vperm.slane %v2424, 0
    %v2427 = vperm.slane %v2424, 1
    %v2431 = vsel %vm48, %v2414, 0
    %v2434 = vsel %vm48, %v2415, 0
    %2436 = vmatpush.msra.mxu0 0.0
    %2437 = vmatpush.msra.mxu0 0.0
    %2438 = vmatpush.msra.mxu0 0.0
    %2439 = vmatpush.msra.mxu0 0.0
    %2440 = vmatpush.msra.mxu0 0.0
    %2441 = vmatpush.msra.mxu0 0.0
    %2442 = vmatpush.msra.mxu0 0.0
    %2443 = vmatpush.msra.mxu0 0.0
    %2444 = vmatpush.msra.mxu0 0.0
    %2445 = vmatpush.msra.mxu0 0.0
    %2446 = vmatpush.msra.mxu0 0.0
    %2447 = vmatpush.msra.mxu0 0.0
    %2448 = vmatpush.msra.mxu0 %v2422
    %2449 = vmatpush.msra.mxu0 %v2420
    %2450 = vmatpush.msra.mxu0 %v2418
    %2451 = vmatpush.msra.mxu0 %v2416
    %2452 = vmatmul.f32.gmra.mxu0 %v2431
    %v2453 = vpop.f32.mrf.mxu0
    %v2454 = vadd.f32 %v2426, %v2453
    %2455 = vmatmul.f32.gmra.mxu0 %v2434
    %v2456 = vpop.f32.mrf.mxu0
    %v2457 = vadd.f32 %v2426, %v2456
    %2458 = vdwg.mxu0
    %2459 = vmatpush.msra.mxu0 0.0
    %2460 = vmatpush.msra.mxu0 0.0
    %2461 = vmatpush.msra.mxu0 0.0
    %2462 = vmatpush.msra.mxu0 0.0
    %2463 = vmatpush.msra.mxu0 0.0
    %2464 = vmatpush.msra.mxu0 0.0
    %2465 = vmatpush.msra.mxu0 0.0
    %2466 = vmatpush.msra.mxu0 0.0
    %2467 = vmatpush.msra.mxu0 0.0
    %2468 = vmatpush.msra.mxu0 0.0
    %2469 = vmatpush.msra.mxu0 0.0
    %2470 = vmatpush.msra.mxu0 0.0
    %2471 = vmatpush.msra.mxu0 %v2423
    %2472 = vmatpush.msra.mxu0 %v2421
    %2473 = vmatpush.msra.mxu0 %v2419
    %2474 = vmatpush.msra.mxu0 %v2417
    %2475 = vmatmul.f32.gmra.mxu0 %v2431
    %v2476 = vpop.f32.mrf.mxu0
    %v2477 = vadd.f32 %v2427, %v2476
    %2478 = vmatmul.f32.gmra.mxu0 %v2434
    %v2479 = vpop.f32.mrf.mxu0
    %v2480 = vadd.f32 %v2427, %v2479
    %2481 = vdwg.mxu0
    %v2482 = vmul.f32 %v2454, 0.5
    %v2483 = vmul.f32 %v2477, 0.5
    %v2484 = vmul.f32 %v2457, 0.5
    %v2485 = vmul.f32 %v2480, 0.5
    %v2486 = vmul.f32 %v2454, 0.044715
    %v2487 = vmul.f32 %v2477, 0.044715
    %v2488 = vmul.f32 %v2457, 0.044715
    %v2489 = vmul.f32 %v2480, 0.044715
    %v2490 = vmul.f32 %v2486, %v2454
    %v2491 = vmul.f32 %v2487, %v2477
    %v2492 = vmul.f32 %v2488, %v2457
    %v2493 = vmul.f32 %v2489, %v2480
    %v2494 = vmul.f32 %v2490, %v2454
    %v2495 = vmul.f32 %v2491, %v2477
    %v2496 = vmul.f32 %v2492, %v2457
    %v2497 = vmul.f32 %v2493, %v2480
    %v2498 = vadd.f32 %v2454, %v2494
    %v2499 = vadd.f32 %v2477, %v2495
    %v2500 = vadd.f32 %v2457, %v2496
    %v2501 = vadd.f32 %v2480, %v2497
    %v2502 = vmul.f32 %v2498, 0.7978846
    %v2503 = vmul.f32 %v2499, 0.7978846
    %v2504 = vmul.f32 %v2500, 0.7978846
    %v2505 = vmul.f32 %v2501, 0.7978846
    %v2506 = vtanh.pop %v2502
    %v2507 = vtanh.pop %v2503
    %v2508 = vtanh.pop %v2504
    %v2509 = vtanh.pop %v2505
    %v2510 = vadd.f32 %v2506, 1.0
    %v2511 = vadd.f32 %v2507, 1.0
    %v2512 = vadd.f32 %v2508, 1.0
    %v2513 = vadd.f32 %v2509, 1.0
    %v2514 = vmul.f32 %v2482, %v2510
    %v2515 = vmul.f32 %v2483, %v2511
    %v2516 = vmul.f32 %v2484, %v2512
    %v2517 = vmul.f32 %v2485, %v2513
    %v2518 = vld [vmem:[%s6] sm:$0xff]
    %v2519 = vld [vmem:[%s6 + $0x8] sm:$0xff]
    %v2520 = vld [vmem:[%s6 + $0x10] sm:$0xff]
    %v2521 = vld [vmem:[%s6 + $0x18] sm:$0xff]
    %v2522 = vld [vmem:[%s6 + $0x20] sm:$0xff]
    %v2523 = vld [vmem:[%s6 + $0x28] sm:$0xff]
    %v2524 = vld [vmem:[%s6 + $0x30] sm:$0xff]
    %v2525 = vld [vmem:[%s6 + $0x38] sm:$0xff]
    %v2526 = vld [vmem:[%s6 + $0x40] sm:$0xff]
    %v2527 = vld [vmem:[%s6 + $0x48] sm:$0xff]
    %v2528 = vld [vmem:[%s6 + $0x50] sm:$0xff]
    %v2529 = vld [vmem:[%s6 + $0x58] sm:$0xff]
    %v2530 = vld [vmem:[%s6 + $0x60] sm:$0xff]
    %v2531 = vld [vmem:[%s6 + $0x68] sm:$0xff]
    %v2532 = vld [vmem:[%s6 + $0x70] sm:$0xff]
    %v2533 = vld [vmem:[%s6 + $0x78] sm:$0xff]
    %v2534 = vld [vmem:[%s6 + $0x80] sm:$0xff]
    %v2535 = vld [vmem:[%s6 + $0x88] sm:$0xff]
    %v2536 = vld [vmem:[%s6 + $0x90] sm:$0xff]
    %v2537 = vld [vmem:[%s6 + $0x98] sm:$0xff]
    %v2538 = vld [vmem:[%s6 + $0xa0] sm:$0xff]
    %v2539 = vld [vmem:[%s6 + $0xa8] sm:$0xff]
    %v2540 = vld [vmem:[%s6 + $0xb0] sm:$0xff]
    %v2541 = vld [vmem:[%s6 + $0xb8] sm:$0xff]
    %v2542 = vld [vmem:[%s6 + $0xc0] sm:$0xff]
    %v2543 = vld [vmem:[%s6 + $0xc8] sm:$0xff]
    %v2544 = vld [vmem:[%s6 + $0xd0] sm:$0xff]
    %v2545 = vld [vmem:[%s6 + $0xd8] sm:$0xff]
    %v2546 = vld [vmem:[%s6 + $0xe0] sm:$0xff]
    %v2547 = vld [vmem:[%s6 + $0xe8] sm:$0xff]
    %v2548 = vld [vmem:[%s6 + $0xf0] sm:$0xff]
    %v2549 = vld [vmem:[%s6 + $0xf8] sm:$0xff]
    %v2550 = vld [vmem:[%s7] sm:$0x1]
    %v2552 = vperm.slane %v2550, 0
    %2554 = vmatpush.msra.mxu0 %v2533
    %2555 = vmatpush.msra.mxu0 %v2532
    %2556 = vmatpush.msra.mxu0 %v2531
    %2557 = vmatpush.msra.mxu0 %v2530
    %2558 = vmatpush.msra.mxu0 %v2529
    %2559 = vmatpush.msra.mxu0 %v2528
    %2560 = vmatpush.msra.mxu0 %v2527
    %2561 = vmatpush.msra.mxu0 %v2526
    %2562 = vmatpush.msra.mxu0 %v2525
    %2563 = vmatpush.msra.mxu0 %v2524
    %2564 = vmatpush.msra.mxu0 %v2523
    %2565 = vmatpush.msra.mxu0 %v2522
    %2566 = vmatpush.msra.mxu0 %v2521
    %2567 = vmatpush.msra.mxu0 %v2520
    %2568 = vmatpush.msra.mxu0 %v2519
    %2569 = vmatpush.msra.mxu0 %v2518
    %2570 = vmatmul.f32.gmra.mxu0 %v2514
    %v2571 = vpop.f32.mrf.mxu0
    %v2572 = vadd.f32 %v2552, %v2571
    %2573 = vmatmul.f32.gmra.mxu0 %v2516
    %v2574 = vpop.f32.mrf.mxu0
    %v2575 = vadd.f32 %v2552, %v2574
    %2576 = vdwg.mxu0
    %2577 = vmatpush.msra.mxu0 %v2549
    %2578 = vmatpush.msra.mxu0 %v2548
    %2579 = vmatpush.msra.mxu0 %v2547
    %2580 = vmatpush.msra.mxu0 %v2546
    %2581 = vmatpush.msra.mxu0 %v2545
    %2582 = vmatpush.msra.mxu0 %v2544
    %2583 = vmatpush.msra.mxu0 %v2543
    %2584 = vmatpush.msra.mxu0 %v2542
    %2585 = vmatpush.msra.mxu0 %v2541
    %2586 = vmatpush.msra.mxu0 %v2540
    %2587 = vmatpush.msra.mxu0 %v2539
    %2588 = vmatpush.msra.mxu0 %v2538
    %2589 = vmatpush.msra.mxu0 %v2537
    %2590 = vmatpush.msra.mxu0 %v2536
    %2591 = vmatpush.msra.mxu0 %v2535
    %2592 = vmatpush.msra.mxu0 %v2534
    %2593 = vmatmul.f32.gmra.mxu0 %v2515
    %v2594 = vpop.f32.mrf.mxu0
    %v2595 = vadd.f32 %v2572, %v2594
    %2596 = vmatmul.f32.gmra.mxu0 %v2517
    %v2597 = vpop.f32.mrf.mxu0
    %v2598 = vadd.f32 %v2575, %v2597
    %2599 = vdwg.mxu0
    %2602 = vrot.lane.b32.xlu0 %v109, 96
    %v2603 = vpop.permute.xlu0 %2602
    %2604 = vrot.lane.b32.xlu0 %v112, 96
    %v2605 = vpop.permute.xlu0 %2604
    %v2606 = vsel %vm350, %v109, 0
    %v2608 = vsel %vm350, %v112, 0
    %v2610 = vsel %vm350, %v2603, 0
    %v2612 = vsel %vm350, %v2605, 0
    %2614 = vmatpush.xpose.msra.mxu0 0.0
    %2615 = vmatpush.xpose.msra.mxu0 0.0
    %2616 = vmatpush.xpose.msra.mxu0 0.0
    %2617 = vmatpush.xpose.msra.mxu0 0.0
    %2618 = vmatpush.xpose.msra.mxu0 0.0
    %2619 = vmatpush.xpose.msra.mxu0 0.0
    %2620 = vmatpush.xpose.msra.mxu0 0.0
    %2621 = vmatpush.xpose.msra.mxu0 0.0
    %2622 = vmatpush.xpose.msra.mxu0 0.0
    %2623 = vmatpush.xpose.msra.mxu0 0.0
    %2624 = vmatpush.xpose.msra.mxu0 0.0
    %2625 = vmatpush.xpose.msra.mxu0 0.0
    %2626 = vmatpush.xpose.msra.mxu0 0.0
    %2627 = vmatpush.xpose.msra.mxu0 0.0
    %2628 = vmatpush.xpose.msra.mxu0 %v2612
    %2629 = vmatpush.xpose.msra.mxu0 %v2610
    %2630 = vmatmul.f32.gmra.mxu0 %v2606
    %v2631 = vpop.f32.mrf.mxu0
    %v2632 = vadd.f32 %v2595, %v2631
    %2633 = vmatmul.f32.gmra.mxu0 %v2608
    %v2634 = vpop.f32.mrf.mxu0
    %v2635 = vadd.f32 %v2598, %v2634
    %2636 = vdwg.mxu0
    %v2637 = vsel %vm154, %v2632, -inf
    %2638 = vmax.xlane.f32.xlu0 %v2637
    %v2639 = vpop.xlane.xlu0 %2638
    %v2640 = vsel %vm154, %v2635, -inf
    %2641 = vmax.xlane.f32.xlu0 %v2640
    %v2642 = vpop.xlane.xlu0 %2641
    %v2643 = vsub.f32 %v2632, %v2639
    %v2644 = vsub.f32 %v2635, %v2642
    %v2645 = vmul.f32 %v2643, 1.442695
    %v2646 = vpow.pop %v2645
    %v2647 = vmul.f32 %v2644, 1.442695
    %v2648 = vpow.pop %v2647
    %v2649 = vsel %vm154, %v2646, 0.0
    %2650 = vadd.xlane.f32.xlu0 %v2649
    %v2651 = vpop.xlane.xlu0 %2650
    %v2652 = vsel %vm154, %v2648, 0.0
    %2653 = vadd.xlane.f32.xlu0 %v2652
    %v2654 = vpop.xlane.xlu0 %2653
    %2655 = vrot.lane.b32.xlu0 %v109, 64
    %v2656 = vpop.permute.xlu0 %2655
    %2657 = vrot.lane.b32.xlu0 %v112, 64
    %v2658 = vpop.permute.xlu0 %2657
    %v2662 = vsel %vm154, %v2646, 0
    %v2665 = vsel %vm154, %v2648, 0
    %2667 = vmatpush.msra.mxu0 0.0
    %2668 = vmatpush.msra.mxu0 0.0
    %2669 = vmatpush.msra.mxu0 0.0
    %2670 = vmatpush.msra.mxu0 0.0
    %2671 = vmatpush.msra.mxu0 0.0
    %2672 = vmatpush.msra.mxu0 0.0
    %2673 = vmatpush.msra.mxu0 0.0
    %2674 = vmatpush.msra.mxu0 0.0
    %2675 = vmatpush.msra.mxu0 0.0
    %2676 = vmatpush.msra.mxu0 0.0
    %2677 = vmatpush.msra.mxu0 0.0
    %2678 = vmatpush.msra.mxu0 0.0
    %2679 = vmatpush.msra.mxu0 0.0
    %2680 = vmatpush.msra.mxu0 0.0
    %2681 = vmatpush.msra.mxu0 %v2658
    %2682 = vmatpush.msra.mxu0 %v2656
    %2683 = vmatmul.f32.gmra.mxu0 %v2662
    %v2684 = vpop.f32.mrf.mxu0
    %v2685 = vadd.f32 0.0, %v2684
    %2686 = vmatmul.f32.gmra.mxu0 %v2665
    %v2687 = vpop.f32.mrf.mxu0
    %v2688 = vadd.f32 0.0, %v2687
    %2689 = vdwg.mxu0
    %v2690 = vrcp.pop %v2651
    %v2691 = vrcp.pop %v2654
    %v2692 = vmul.f32 %v2685, %v2690
    %v2693 = vmul.f32 %v2688, %v2691
    %v2695 = vsel %vm350, %v2692, 0
    %v2698 = vsel %vm350, %v2693, 0
    %2700 = vmatpush.msra.mxu0 0.0
    %2701 = vmatpush.msra.mxu0 0.0
    %2702 = vmatpush.msra.mxu0 0.0
    %2703 = vmatpush.msra.mxu0 0.0
    %2704 = vmatpush.msra.mxu0 0.0
    %2705 = vmatpush.msra.mxu0 0.0
    %2706 = vmatpush.msra.mxu0 0.0
    %2707 = vmatpush.msra.mxu0 0.0
    %2708 = vmatpush.msra.mxu0 0.0
    %2709 = vmatpush.msra.mxu0 0.0
    %2710 = vmatpush.msra.mxu0 0.0
    %2711 = vmatpush.msra.mxu0 0.0
    %2712 = vmatpush.msra.mxu0 0.0
    %2713 = vmatpush.msra.mxu0 0.0
    %2714 = vmatpush.msra.mxu0 0.0
    %2715 = vmatpush.msra.mxu0 %v114
    %2716 = vmatmul.f32.gmra.mxu0 %v2695
    %v2717 = vpop.f32.mrf.mxu0
    %v2718 = vadd.f32 0.0, %v2717
    %2719 = vmatmul.f32.gmra.mxu0 %v2698
    %v2720 = vpop.f32.mrf.mxu0
    %v2721 = vadd.f32 0.0, %v2720
    %2722 = vdwg.mxu0
    %v2723 = vadd.f32 %v342, %v2718
    %v2724 = vadd.f32 %v342, %v2721
    %2725 = vrot.lane.b32.xlu0 %v109, 120
    %v2726 = vpop.permute.xlu0 %2725
    %2727 = vrot.lane.b32.xlu0 %v112, 120
    %v2728 = vpop.permute.xlu0 %2727
    %2729 = vrot.lane.b32.xlu0 %v109, 88
    %v2730 = vpop.permute.xlu0 %2729
    %2731 = vrot.lane.b32.xlu0 %v112, 88
    %v2732 = vpop.permute.xlu0 %2731
    %2735 = vrot.lane.b32.xlu0 %v2595, 112
    %v2736 = vpop.permute.xlu0 %2735
    %2737 = vrot.lane.b32.xlu0 %v2598, 112
    %v2738 = vpop.permute.xlu0 %2737
    %v2741 = vsel %vm350, %v2726, 0
    %v2743 = vsel %vm350, %v2728, 0
    %v2745 = vsel %vm350, %v2730, 0
    %v2747 = vsel %vm350, %v2732, 0
    %2749 = vmatpush.xpose.msra.mxu0 0.0
    %2750 = vmatpush.xpose.msra.mxu0 0.0
    %2751 = vmatpush.xpose.msra.mxu0 0.0
    %2752 = vmatpush.xpose.msra.mxu0 0.0
    %2753 = vmatpush.xpose.msra.mxu0 0.0
    %2754 = vmatpush.xpose.msra.mxu0 0.0
    %2755 = vmatpush.xpose.msra.mxu0 0.0
    %2756 = vmatpush.xpose.msra.mxu0 0.0
    %2757 = vmatpush.xpose.msra.mxu0 0.0
    %2758 = vmatpush.xpose.msra.mxu0 0.0
    %2759 = vmatpush.xpose.msra.mxu0 0.0
    %2760 = vmatpush.xpose.msra.mxu0 0.0
    %2761 = vmatpush.xpose.msra.mxu0 0.0
    %2762 = vmatpush.xpose.msra.mxu0 0.0
    %2763 = vmatpush.xpose.msra.mxu0 %v2747
    %2764 = vmatpush.xpose.msra.mxu0 %v2745
    %2765 = vmatmul.f32.gmra.mxu0 %v2741
    %v2766 = vpop.f32.mrf.mxu0
    %v2767 = vadd.f32 %v2736, %v2766
    %2768 = vmatmul.f32.gmra.mxu0 %v2743
    %v2769 = vpop.f32.mrf.mxu0
    %v2770 = vadd.f32 %v2738, %v2769
    %2771 = vdwg.mxu0
    %v2772 = vsel %vm154, %v2767, -inf
    %2773 = vmax.xlane.f32.xlu0 %v2772
    %v2774 = vpop.xlane.xlu0 %2773
    %v2775 = vsel %vm154, %v2770, -inf
    %2776 = vmax.xlane.f32.xlu0 %v2775
    %v2777 = vpop.xlane.xlu0 %2776
    %v2778 = vsub.f32 %v2767, %v2774
    %v2779 = vsub.f32 %v2770, %v2777
    %v2780 = vmul.f32 %v2778, 1.442695
    %v2781 = vpow.pop %v2780
    %v2782 = vmul.f32 %v2779, 1.442695
    %v2783 = vpow.pop %v2782
    %v2784 = vsel %vm154, %v2781, 0.0
    %2785 = vadd.xlane.f32.xlu0 %v2784
    %v2786 = vpop.xlane.xlu0 %2785
    %v2787 = vsel %vm154, %v2783, 0.0
    %2788 = vadd.xlane.f32.xlu0 %v2787
    %v2789 = vpop.xlane.xlu0 %2788
    %2790 = vrot.lane.b32.xlu0 %v109, 56
    %v2791 = vpop.permute.xlu0 %2790
    %2792 = vrot.lane.b32.xlu0 %v112, 56
    %v2793 = vpop.permute.xlu0 %2792
    %v2797 = vsel %vm154, %v2781, 0
    %v2800 = vsel %vm154, %v2783, 0
    %2802 = vmatpush.msra.mxu0 0.0
    %2803 = vmatpush.msra.mxu0 0.0
    %2804 = vmatpush.msra.mxu0 0.0
    %2805 = vmatpush.msra.mxu0 0.0
    %2806 = vmatpush.msra.mxu0 0.0
    %2807 = vmatpush.msra.mxu0 0.0
    %2808 = vmatpush.msra.mxu0 0.0
    %2809 = vmatpush.msra.mxu0 0.0
    %2810 = vmatpush.msra.mxu0 0.0
    %2811 = vmatpush.msra.mxu0 0.0
    %2812 = vmatpush.msra.mxu0 0.0
    %2813 = vmatpush.msra.mxu0 0.0
    %2814 = vmatpush.msra.mxu0 0.0
    %2815 = vmatpush.msra.mxu0 0.0
    %2816 = vmatpush.msra.mxu0 %v2793
    %2817 = vmatpush.msra.mxu0 %v2791
    %2818 = vmatmul.f32.gmra.mxu0 %v2797
    %v2819 = vpop.f32.mrf.mxu0
    %v2820 = vadd.f32 0.0, %v2819
    %2821 = vmatmul.f32.gmra.mxu0 %v2800
    %v2822 = vpop.f32.mrf.mxu0
    %v2823 = vadd.f32 0.0, %v2822
    %2824 = vdwg.mxu0
    %v2825 = vrcp.pop %v2786
    %v2826 = vrcp.pop %v2789
    %v2827 = vmul.f32 %v2820, %v2825
    %v2828 = vmul.f32 %v2823, %v2826
    %v2830 = vsel %vm350, %v2827, 0
    %v2833 = vsel %vm350, %v2828, 0
    %2835 = vmatpush.msra.mxu0 0.0
    %2836 = vmatpush.msra.mxu0 0.0
    %2837 = vmatpush.msra.mxu0 0.0
    %2838 = vmatpush.msra.mxu0 0.0
    %2839 = vmatpush.msra.mxu0 0.0
    %2840 = vmatpush.msra.mxu0 0.0
    %2841 = vmatpush.msra.mxu0 0.0
    %2842 = vmatpush.msra.mxu0 0.0
    %2843 = vmatpush.msra.mxu0 0.0
    %2844 = vmatpush.msra.mxu0 0.0
    %2845 = vmatpush.msra.mxu0 0.0
    %2846 = vmatpush.msra.mxu0 0.0
    %2847 = vmatpush.msra.mxu0 0.0
    %2848 = vmatpush.msra.mxu0 0.0
    %2849 = vmatpush.msra.mxu0 0.0
    %2850 = vmatpush.msra.mxu0 %v115
    %2851 = vmatmul.f32.gmra.mxu0 %v2830
    %v2852 = vpop.f32.mrf.mxu0
    %v2853 = vadd.f32 0.0, %v2852
    %2854 = vmatmul.f32.gmra.mxu0 %v2833
    %v2855 = vpop.f32.mrf.mxu0
    %v2856 = vadd.f32 0.0, %v2855
    %2857 = vdwg.mxu0
    %v2858 = vadd.f32 %v2723, %v2853
    %v2859 = vadd.f32 %v2724, %v2856
    %2860 = vrot.lane.b32.xlu0 %v109, 112
    %v2861 = vpop.permute.xlu0 %2860
    %2862 = vrot.lane.b32.xlu0 %v112, 112
    %v2863 = vpop.permute.xlu0 %2862
    %2864 = vrot.lane.b32.xlu0 %v109, 80
    %v2865 = vpop.permute.xlu0 %2864
    %2866 = vrot.lane.b32.xlu0 %v112, 80
    %v2867 = vpop.permute.xlu0 %2866
    %2868 = vrot.lane.b32.xlu0 %v2595, 96
    %v2869 = vpop.permute.xlu0 %2868
    %2870 = vrot.lane.b32.xlu0 %v2598, 96
    %v2871 = vpop.permute.xlu0 %2870
    %v2874 = vsel %vm350, %v2861, 0
    %v2876 = vsel %vm350, %v2863, 0
    %v2878 = vsel %vm350, %v2865, 0
    %v2880 = vsel %vm350, %v2867, 0
    %2882 = vmatpush.xpose.msra.mxu0 0.0
    %2883 = vmatpush.xpose.msra.mxu0 0.0
    %2884 = vmatpush.xpose.msra.mxu0 0.0
    %2885 = vmatpush.xpose.msra.mxu0 0.0
    %2886 = vmatpush.xpose.msra.mxu0 0.0
    %2887 = vmatpush.xpose.msra.mxu0 0.0
    %2888 = vmatpush.xpose.msra.mxu0 0.0
    %2889 = vmatpush.xpose.msra.mxu0 0.0
    %2890 = vmatpush.xpose.msra.mxu0 0.0
    %2891 = vmatpush.xpose.msra.mxu0 0.0
    %2892 = vmatpush.xpose.msra.mxu0 0.0
    %2893 = vmatpush.xpose.msra.mxu0 0.0
    %2894 = vmatpush.xpose.msra.mxu0 0.0
    %2895 = vmatpush.xpose.msra.mxu0 0.0
    %2896 = vmatpush.xpose.msra.mxu0 %v2880
    %2897 = vmatpush.xpose.msra.mxu0 %v2878
    %2898 = vmatmul.f32.gmra.mxu0 %v2874
    %v2899 = vpop.f32.mrf.mxu0
    %v2900 = vadd.f32 %v2869, %v2899
    %2901 = vmatmul.f32.gmra.mxu0 %v2876
    %v2902 = vpop.f32.mrf.mxu0
    %v2903 = vadd.f32 %v2871, %v2902
    %2904 = vdwg.mxu0
    %v2905 = vsel %vm154, %v2900, -inf
    %2906 = vmax.xlane.f32.xlu0 %v2905
    %v2907 = vpop.xlane.xlu0 %2906
    %v2908 = vsel %vm154, %v2903, -inf
    %2909 = vmax.xlane.f32.xlu0 %v2908
    %v2910 = vpop.xlane.xlu0 %2909
    %v2911 = vsub.f32 %v2900, %v2907
    %v2912 = vsub.f32 %v2903, %v2910
    %v2913 = vmul.f32 %v2911, 1.442695
    %v2914 = vpow.pop %v2913
    %v2915 = vmul.f32 %v2912, 1.442695
    %v2916 = vpow.pop %v2915
    %v2917 = vsel %vm154, %v2914, 0.0
    %2918 = vadd.xlane.f32.xlu0 %v2917
    %v2919 = vpop.xlane.xlu0 %2918
    %v2920 = vsel %vm154, %v2916, 0.0
    %2921 = vadd.xlane.f32.xlu0 %v2920
    %v2922 = vpop.xlane.xlu0 %2921
    %2923 = vrot.lane.b32.xlu0 %v109, 48
    %v2924 = vpop.permute.xlu0 %2923
    %2925 = vrot.lane.b32.xlu0 %v112, 48
    %v2926 = vpop.permute.xlu0 %2925
    %v2930 = vsel %vm154, %v2914, 0
    %v2933 = vsel %vm154, %v2916, 0
    %2935 = vmatpush.msra.mxu0 0.0
    %2936 = vmatpush.msra.mxu0 0.0
    %2937 = vmatpush.msra.mxu0 0.0
    %2938 = vmatpush.msra.mxu0 0.0
    %2939 = vmatpush.msra.mxu0 0.0
    %2940 = vmatpush.msra.mxu0 0.0
    %2941 = vmatpush.msra.mxu0 0.0
    %2942 = vmatpush.msra.mxu0 0.0
    %2943 = vmatpush.msra.mxu0 0.0
    %2944 = vmatpush.msra.mxu0 0.0
    %2945 = vmatpush.msra.mxu0 0.0
    %2946 = vmatpush.msra.mxu0 0.0
    %2947 = vmatpush.msra.mxu0 0.0
    %2948 = vmatpush.msra.mxu0 0.0
    %2949 = vmatpush.msra.mxu0 %v2926
    %2950 = vmatpush.msra.mxu0 %v2924
    %2951 = vmatmul.f32.gmra.mxu0 %v2930
    %v2952 = vpop.f32.mrf.mxu0
    %v2953 = vadd.f32 0.0, %v2952
    %2954 = vmatmul.f32.gmra.mxu0 %v2933
    %v2955 = vpop.f32.mrf.mxu0
    %v2956 = vadd.f32 0.0, %v2955
    %2957 = vdwg.mxu0
    %v2958 = vrcp.pop %v2919
    %v2959 = vrcp.pop %v2922
    %v2960 = vmul.f32 %v2953, %v2958
    %v2961 = vmul.f32 %v2956, %v2959
    %v2963 = vsel %vm350, %v2960, 0
    %v2966 = vsel %vm350, %v2961, 0
    %2968 = vmatpush.msra.mxu0 0.0
    %2969 = vmatpush.msra.mxu0 0.0
    %2970 = vmatpush.msra.mxu0 0.0
    %2971 = vmatpush.msra.mxu0 0.0
    %2972 = vmatpush.msra.mxu0 0.0
    %2973 = vmatpush.msra.mxu0 0.0
    %2974 = vmatpush.msra.mxu0 0.0
    %2975 = vmatpush.msra.mxu0 0.0
    %2976 = vmatpush.msra.mxu0 0.0
    %2977 = vmatpush.msra.mxu0 0.0
    %2978 = vmatpush.msra.mxu0 0.0
    %2979 = vmatpush.msra.mxu0 0.0
    %2980 = vmatpush.msra.mxu0 0.0
    %2981 = vmatpush.msra.mxu0 0.0
    %2982 = vmatpush.msra.mxu0 0.0
    %2983 = vmatpush.msra.mxu0 %v116
    %2984 = vmatmul.f32.gmra.mxu0 %v2963
    %v2985 = vpop.f32.mrf.mxu0
    %v2986 = vadd.f32 0.0, %v2985
    %2987 = vmatmul.f32.gmra.mxu0 %v2966
    %v2988 = vpop.f32.mrf.mxu0
    %v2989 = vadd.f32 0.0, %v2988
    %2990 = vdwg.mxu0
    %v2991 = vadd.f32 %v2858, %v2986
    %v2992 = vadd.f32 %v2859, %v2989
    %2993 = vrot.lane.b32.xlu0 %v109, 104
    %v2994 = vpop.permute.xlu0 %2993
    %2995 = vrot.lane.b32.xlu0 %v112, 104
    %v2996 = vpop.permute.xlu0 %2995
    %2997 = vrot.lane.b32.xlu0 %v109, 72
    %v2998 = vpop.permute.xlu0 %2997
    %2999 = vrot.lane.b32.xlu0 %v112, 72
    %v3000 = vpop.permute.xlu0 %2999
    %3001 = vrot.lane.b32.xlu0 %v2595, 80
    %v3002 = vpop.permute.xlu0 %3001
    %3003 = vrot.lane.b32.xlu0 %v2598, 80
    %v3004 = vpop.permute.xlu0 %3003
    %v3007 = vsel %vm350, %v2994, 0
    %v3009 = vsel %vm350, %v2996, 0
    %v3011 = vsel %vm350, %v2998, 0
    %v3013 = vsel %vm350, %v3000, 0
    %3015 = vmatpush.xpose.msra.mxu0 0.0
    %3016 = vmatpush.xpose.msra.mxu0 0.0
    %3017 = vmatpush.xpose.msra.mxu0 0.0
    %3018 = vmatpush.xpose.msra.mxu0 0.0
    %3019 = vmatpush.xpose.msra.mxu0 0.0
    %3020 = vmatpush.xpose.msra.mxu0 0.0
    %3021 = vmatpush.xpose.msra.mxu0 0.0
    %3022 = vmatpush.xpose.msra.mxu0 0.0
    %3023 = vmatpush.xpose.msra.mxu0 0.0
    %3024 = vmatpush.xpose.msra.mxu0 0.0
    %3025 = vmatpush.xpose.msra.mxu0 0.0
    %3026 = vmatpush.xpose.msra.mxu0 0.0
    %3027 = vmatpush.xpose.msra.mxu0 0.0
    %3028 = vmatpush.xpose.msra.mxu0 0.0
    %3029 = vmatpush.xpose.msra.mxu0 %v3013
    %3030 = vmatpush.xpose.msra.mxu0 %v3011
    %3031 = vmatmul.f32.gmra.mxu0 %v3007
    %v3032 = vpop.f32.mrf.mxu0
    %v3033 = vadd.f32 %v3002, %v3032
    %3034 = vmatmul.f32.gmra.mxu0 %v3009
    %v3035 = vpop.f32.mrf.mxu0
    %v3036 = vadd.f32 %v3004, %v3035
    %3037 = vdwg.mxu0
    %v3038 = vsel %vm154, %v3033, -inf
    %3039 = vmax.xlane.f32.xlu0 %v3038
    %v3040 = vpop.xlane.xlu0 %3039
    %v3041 = vsel %vm154, %v3036, -inf
    %3042 = vmax.xlane.f32.xlu0 %v3041
    %v3043 = vpop.xlane.xlu0 %3042
    %v3044 = vsub.f32 %v3033, %v3040
    %v3045 = vsub.f32 %v3036, %v3043
    %v3046 = vmul.f32 %v3044, 1.442695
    %v3047 = vpow.pop %v3046
    %v3048 = vmul.f32 %v3045, 1.442695
    %v3049 = vpow.pop %v3048
    %v3050 = vsel %vm154, %v3047, 0.0
    %3051 = vadd.xlane.f32.xlu0 %v3050
    %v3052 = vpop.xlane.xlu0 %3051
    %v3053 = vsel %vm154, %v3049, 0.0
    %3054 = vadd.xlane.f32.xlu0 %v3053
    %v3055 = vpop.xlane.xlu0 %3054
    %3056 = vrot.lane.b32.xlu0 %v109, 40
    %v3057 = vpop.permute.xlu0 %3056
    %3058 = vrot.lane.b32.xlu0 %v112, 40
    %v3059 = vpop.permute.xlu0 %3058
    %v3063 = vsel %vm154, %v3047, 0
    %v3066 = vsel %vm154, %v3049, 0
    %3068 = vmatpush.msra.mxu0 0.0
    %3069 = vmatpush.msra.mxu0 0.0
    %3070 = vmatpush.msra.mxu0 0.0
    %3071 = vmatpush.msra.mxu0 0.0
    %3072 = vmatpush.msra.mxu0 0.0
    %3073 = vmatpush.msra.mxu0 0.0
    %3074 = vmatpush.msra.mxu0 0.0
    %3075 = vmatpush.msra.mxu0 0.0
    %3076 = vmatpush.msra.mxu0 0.0
    %3077 = vmatpush.msra.mxu0 0.0
    %3078 = vmatpush.msra.mxu0 0.0
    %3079 = vmatpush.msra.mxu0 0.0
    %3080 = vmatpush.msra.mxu0 0.0
    %3081 = vmatpush.msra.mxu0 0.0
    %3082 = vmatpush.msra.mxu0 %v3059
    %3083 = vmatpush.msra.mxu0 %v3057
    %3084 = vmatmul.f32.gmra.mxu0 %v3063
    %v3085 = vpop.f32.mrf.mxu0
    %v3086 = vadd.f32 0.0, %v3085
    %3087 = vmatmul.f32.gmra.mxu0 %v3066
    %v3088 = vpop.f32.mrf.mxu0
    %v3089 = vadd.f32 0.0, %v3088
    %3090 = vdwg.mxu0
    %v3091 = vrcp.pop %v3052
    %v3092 = vrcp.pop %v3055
    %v3093 = vmul.f32 %v3086, %v3091
    %v3094 = vmul.f32 %v3089, %v3092
    %v3096 = vsel %vm350, %v3093, 0
    %v3099 = vsel %vm350, %v3094, 0
    %3101 = vmatpush.msra.mxu0 0.0
    %3102 = vmatpush.msra.mxu0 0.0
    %3103 = vmatpush.msra.mxu0 0.0
    %3104 = vmatpush.msra.mxu0 0.0
    %3105 = vmatpush.msra.mxu0 0.0
    %3106 = vmatpush.msra.mxu0 0.0
    %3107 = vmatpush.msra.mxu0 0.0
    %3108 = vmatpush.msra.mxu0 0.0
    %3109 = vmatpush.msra.mxu0 0.0
    %3110 = vmatpush.msra.mxu0 0.0
    %3111 = vmatpush.msra.mxu0 0.0
    %3112 = vmatpush.msra.mxu0 0.0
    %3113 = vmatpush.msra.mxu0 0.0
    %3114 = vmatpush.msra.mxu0 0.0
    %3115 = vmatpush.msra.mxu0 0.0
    %3116 = vmatpush.msra.mxu0 %v117
    %3117 = vmatmul.f32.gmra.mxu0 %v3096
    %v3118 = vpop.f32.mrf.mxu0
    %v3119 = vadd.f32 0.0, %v3118
    %3120 = vmatmul.f32.gmra.mxu0 %v3099
    %v3121 = vpop.f32.mrf.mxu0
    %v3122 = vadd.f32 0.0, %v3121
    %3123 = vdwg.mxu0
    %v3124 = vadd.f32 %v2991, %v3119
    %v3125 = vadd.f32 %v2992, %v3122
    %s3126 = scalar_lea.vmem [#allocation2], 48
    %3127 = vst.msk [vmem:[%s3126] sm:$0xff] %vm48, %v3124
    %3128 = vst.msk [vmem:[%s3126 + $0x8] sm:$0xff] %vm48, %v3125
    // Predicated region
    $region42: #{tpu_custom_call.1} parent=1 // pred_check
      _
    $region43: #{tpu_custom_call.1} parent=1 // pred_check_branch
      %3130 = sbr.rel (0) target = $region45
    $region44: #{tpu_custom_call.1} parent=1 // pred_region
      %3132 = vsyncadd [#allocation3], 0
      %s3133 = sshll.u32 [#allocation2], 4
      %s3134 = int_to_ptr.vmem [resolvable:$true] %s3133
      %s3135 = sshll.u32 %s10, 4
      %s3136 = int_to_ptr.hbm [resolvable:$true] %s3135
      %3141 = dma.vmem_to_hbm [thread:$0]  %s3134, 1024, %s3136, [#allocation3], 128, 128, 8
    $region45: #{tpu_custom_call.1} parent=1 // pred_fallthru
      _
    // Predicated region
    $region46: #{tpu_custom_call.1} parent=1 // pred_check
      _
    $region47: #{tpu_custom_call.1} parent=1 // pred_check_branch
      %3143 = sbr.rel (0) target = $region49
    $region48: #{tpu_custom_call.1} parent=1 // pred_region
      %3145 = dma.done [#allocation3], 1024
    $region49: #{tpu_custom_call.1} parent=1 // pred_fallthru
      _
    %3146 = vsyncpa [#allocation3], 1

</llo_original>
